<compile_context>
chip_gen: v7x
topology: tpu7x:2x2x1
jax: 0.10.0
libtpu: 0.0.40
codegen_flags: <defaults>
</compile_context>

<pallas_src>
import functools

import numpy as np

import jax
import jax.numpy as jnp
from jax.experimental import pallas as pl
from jax.experimental.pallas import tpu as pltpu


# ---------------------------------------------------------------------------
# Fused kernel: 1x1 conv + BN1 + SiLU + extra BN, then depthwise 5x5 + BN2 +
# SiLU, then channel concat -- all on one (th, W) output tile.
# ---------------------------------------------------------------------------
def _gsconv3_kernel(x_ref, w1_ref, aff_ref, w2_ref, o_ref, yp_ref, acc_ref,
                    *, H, W, C1, c_, th):
    # x_ref  : (1, H+4, W+4, C1)  padded NHWC image (VMEM-resident across H tiles)
    # w1_ref : (C1, c_)           1x1 conv weight
    # aff_ref: (6, c_)            [scale1, bias1, scale_bn, bias_bn, scale2, bias2]
    # w2_ref : (25, c_)           depthwise 5x5 weight, tap-major
    # o_ref  : (1, th, W, 2*c_)   output tile, channels = [x1 | cv2(x1)]
    # yp_ref : (th+4, W+4, c_)    x1 halo window staging (zero where outside image)
    # acc_ref: (th, W, c_)        f32 depthwise accumulator (bounded VMEM scratch)
    i = pl.program_id(1)
    wh = th + 4                      # halo window height
    wp = W + 4                       # padded width
    aff = aff_ref[...]               # load affine params once

    # ---- cv1: 1x1 conv as a channel matmul + BN1 + SiLU, then extra BN ------
    # Recompute x1 on the (th+4, W+4) halo window of the padded input so the
    # 2-pixel conv halo is local to this tile (no HBM pad of the intermediate).
    xw = x_ref[0, pl.ds(i * th, wh), :, :].reshape(wh * wp, C1)
    y = jnp.dot(xw, w1_ref[...], preferred_element_type=jnp.float32)
    y = y * aff[0] + aff[1]                       # folded BN1
    y = y * jax.nn.sigmoid(y)                     # SiLU (logistic -> EUP slot)
    y = y * aff[2] + aff[3]                       # extra BatchNorm (self.bn)
    y = y.reshape(wh, wp, c_)

    # Zero the halo positions that fall outside the true image: the depthwise
    # conv's zero padding must be zeros of x1, not x1(padded-zero input).
    row = (i * th - 2) + jax.lax.broadcasted_iota(jnp.int32, (wh, wp, 1), 0)
    col = (-2) + jax.lax.broadcasted_iota(jnp.int32, (wh, wp, 1), 1)
    inside = (row >= 0) & (row < H) & (col >= 0) & (col < W)
    yp_ref[...] = jnp.where(inside, y, 0.0)       # single full scratch store

    # ---- cv2: depthwise 5x5 (stride 1, pad 2) + BN2 + SiLU ------------------
    w2 = w2_ref[...]                              # (25, c_), loaded once
    acc_ref[...] = jnp.zeros_like(acc_ref)
    for dh in range(5):                           # static unroll, static slices
        for dw in range(5):
            acc_ref[...] += yp_ref[dh:dh + th, dw:dw + W, :] * w2[dh * 5 + dw]
    z = acc_ref[...] * aff[4] + aff[5]            # folded BN2
    z = z * jax.nn.sigmoid(z)                     # SiLU

    # ---- concat([x1, cv2(x1)], channel): one full-width tile store ----------
    x1_tile = yp_ref[2:2 + th, 2:2 + W, :]        # this tile's own x1 rows/cols
    o_ref[0] = jnp.concatenate([x1_tile, z], axis=-1).astype(o_ref.dtype)


# ---------------------------------------------------------------------------
# Wrapper
# ---------------------------------------------------------------------------
def gsconv3(x_nchw, params, *, th=8):
    """GSConv_3 forward. x_nchw: (N, C1, H, W) float32 -> (N, C2, H, W)."""
    # NCHW -> NHWC (channels on the lane axis) fused with the 2-pixel spatial
    # pad of the input into one XLA copy.
    # TODO(synk): if the surrounding model is NHWC, drop both boundary transposes.
    x = jnp.transpose(x_nchw, (0, 2, 3, 1))
    N, H, W, C1 = x.shape
    c_ = params["w1"].shape[1]
    C2 = 2 * c_

    if H % th != 0 or H < th:
        th = H                                    # single H-tile fallback
    n_ht = H // th

    xp = jnp.pad(x, ((0, 0), (2, 2), (2, 2), (0, 0)))     # (N, H+4, W+4, C1)

    # Pack the six per-channel affine vectors into one small (6, c_) array.
    aff = jnp.stack([params["scale1"], params["bias1"],
                     params["scaleb"], params["biasb"],
                     params["scale2"], params["bias2"]], axis=0)

    kernel = functools.partial(_gsconv3_kernel, H=H, W=W, C1=C1, c_=c_, th=th)

    out_nhwc = pl.pallas_call(
        kernel,
        out_shape=jax.ShapeDtypeStruct((N, H, W, C2), x.dtype),
        grid=(N, n_ht),
        in_specs=[
            # full padded image per batch element; same block index across the
            # H-tile axis so it stays VMEM-resident while the tiles run.
            # TODO(synk): for very large H*W*C1 switch this to memory_space=pl.ANY
            # and DMA (th+4)-row slabs manually.
            pl.BlockSpec((1, H + 4, W + 4, C1), lambda n, i: (n, 0, 0, 0)),
            pl.BlockSpec((C1, c_), lambda n, i: (0, 0)),
            pl.BlockSpec((6, c_), lambda n, i: (0, 0)),
            pl.BlockSpec((25, c_), lambda n, i: (0, 0)),
        ],
        out_specs=pl.BlockSpec((1, th, W, C2), lambda n, i: (n, i, 0, 0)),
        scratch_shapes=[
            pltpu.VMEM((th + 4, W + 4, c_), jnp.float32),   # x1 halo staging
            pltpu.VMEM((th, W, c_), jnp.float32),           # depthwise accumulator
        ],
        compiler_params=pltpu.CompilerParams(
            dimension_semantics=("parallel", "parallel"),
            vmem_limit_bytes=32 * 1024 * 1024,
        ),
    )(xp, params["w1"], aff, params["w2"])

    # Channel shuffle from the PyTorch reshape/permute/reshape/cat tail:
    # output channels = [even channels of cat, odd channels of cat].
    # Fused by XLA with the mandatory NHWC -> NCHW transpose (no extra HBM pass).
    perm = np.concatenate([np.arange(0, C2, 2), np.arange(1, C2, 2)])
    return jnp.transpose(out_nhwc, (0, 3, 1, 2))[:, perm, :, :]


# ---------------------------------------------------------------------------
# Deterministic synthetic parameters (module shapes, eval-mode BN folded)
# ---------------------------------------------------------------------------
def make_params(key, c1, c2):
    c_ = c2 // 2
    eps = 1e-5
    ks = jax.random.split(key, 14)

    def bn(kg, kb, km, kv):
        g = 1.0 + 0.1 * jax.random.normal(kg, (c_,), jnp.float32)
        b = 0.1 * jax.random.normal(kb, (c_,), jnp.float32)
        m = 0.05 * jax.random.normal(km, (c_,), jnp.float32)
        v = 1.0 + 0.1 * jax.random.uniform(kv, (c_,), jnp.float32)
        scale = g / jnp.sqrt(v + eps)
        return scale, b - m * scale

    # cv1: Conv2d(c1, c_, 1, 1, 0, bias=False): weight (c_, c1, 1, 1) -> (c1, c_)
    w1 = 0.2 * jax.random.normal(ks[0], (c1, c_), jnp.float32)
    scale1, bias1 = bn(ks[1], ks[2], ks[3], ks[4])
    # extra nn.BatchNorm2d(c_) (self.bn)
    scaleb, biasb = bn(ks[5], ks[6], ks[7], ks[8])
    # cv2: Conv2d(c_, c_, 5, 1, 2, groups=c_, bias=False): (c_, 1, 5, 5) -> (25, c_)
    w2 = 0.1 * jax.random.normal(ks[9], (5, 5, c_), jnp.float32).reshape(25, c_)
    scale2, bias2 = bn(ks[10], ks[11], ks[12], ks[13])

    return dict(w1=w1, scale1=scale1, bias1=bias1,
                scaleb=scaleb, biasb=biasb,
                w2=w2, scale2=scale2, bias2=bias2)


# ---------------------------------------------------------------------------
# Pure-JAX reference mirroring the PyTorch forward (including the shuffle)
# ---------------------------------------------------------------------------
def gsconv3_ref(x_nchw, params):
    x = jnp.transpose(x_nchw, (0, 2, 3, 1))
    N, H, W, _ = x.shape
    c_ = params["w1"].shape[1]
    # cv1: 1x1 conv + BN1 + SiLU
    y = jnp.einsum("nhwc,cd->nhwd", x, params["w1"])
    y = y * params["scale1"] + params["bias1"]
    y = y * jax.nn.sigmoid(y)
    # extra BatchNorm
    y = y * params["scaleb"] + params["biasb"]
    # cv2: depthwise 5x5 + BN2 + SiLU
    ypad = jnp.pad(y, ((0, 0), (2, 2), (2, 2), (0, 0)))
    w2 = params["w2"].reshape(5, 5, c_)
    acc = jnp.zeros((N, H, W, c_), jnp.float32)
    for dh in range(5):
        for dw in range(5):
            acc = acc + ypad[:, dh:dh + H, dw:dw + W, :] * w2[dh, dw]
    z = acc * params["scale2"] + params["bias2"]
    z = z * jax.nn.sigmoid(z)
    # concat + channel shuffle exactly as in the PyTorch forward
    x2 = jnp.transpose(jnp.concatenate([y, z], axis=-1), (0, 3, 1, 2))
    b, n, h, w = x2.shape
    r = x2.reshape(b * n // 2, 2, h * w)
    r = jnp.transpose(r, (1, 0, 2))
    r = r.reshape(2, -1, n // 2, h, w)
    return jnp.concatenate([r[0], r[1]], axis=1)


if __name__ == "__main__":
    key = jax.random.PRNGKey(0)
    kx, kp = jax.random.split(key)

    N, C1, H, W = 2, 4, 16, 16
    C2 = 8                                           # -> c_ = 4
    x = jax.random.normal(kx, (N, C1, H, W), jnp.float32)
    params = make_params(kp, C1, C2)

    out = jax.block_until_ready(gsconv3(x, params))
    ref = gsconv3_ref(x, params)

    assert out.shape == (N, C2, H, W), out.shape
    assert jnp.allclose(out, ref, atol=1e-5, rtol=1e-5), float(
        jnp.max(jnp.abs(out - ref)))

    print("KERNEL_OK")
</pallas_src>

<mosaic_0001>
module attributes {stable_mosaic.version = 11 : i64} {
  func.func @_gsconv3_kernel(%arg0: i32, %arg1: i32, %arg2: memref<1x20x20x4xf32, #tpu.memory_space<vmem>>, %arg3: memref<4x4xf32, #tpu.memory_space<vmem>>, %arg4: memref<6x4xf32, #tpu.memory_space<vmem>>, %arg5: memref<25x4xf32, #tpu.memory_space<vmem>>, %arg6: memref<1x8x16x8xf32, #tpu.memory_space<vmem>>, %arg7: memref<12x20x4xf32, #tpu.memory_space<vmem>>, %arg8: memref<8x16x4xf32, #tpu.memory_space<vmem>>) attributes {dimension_semantics = [#tpu.dimension_semantics<parallel>, #tpu.dimension_semantics<parallel>], iteration_bounds = array<i64: 2, 2>, scalar_prefetch = 0 : i64, scratch_operands = 2 : i64, tpu.core_type = #tpu.core_type<tc>, window_params = [{transform_indices = @transform_0, window_bounds = array<i64: 1, 20, 20, 4>}, {pipeline_mode = #tpu.pipeline_mode<synchronous>, transform_indices = @transform_1, window_bounds = array<i64: 4, 4>}, {pipeline_mode = #tpu.pipeline_mode<synchronous>, transform_indices = @transform_2, window_bounds = array<i64: 6, 4>}, {pipeline_mode = #tpu.pipeline_mode<synchronous>, transform_indices = @transform_3, window_bounds = array<i64: 25, 4>}, {transform_indices = @transform_4, window_bounds = array<i64: 1, 8, 16, 8>}]} {
    %c0 = arith.constant 0 : index
    %c0_0 = arith.constant 0 : index
    %0 = vector.load %arg4[%c0, %c0_0] : memref<6x4xf32, #tpu.memory_space<vmem>>, vector<6x4xf32>
    %c8_i32 = arith.constant 8 : i32
    %1 = arith.muli %arg1, %c8_i32 : i32
    %c0_1 = arith.constant 0 : index
    %2 = arith.index_cast %1 : i32 to index
    %c0_2 = arith.constant 0 : index
    %c0_3 = arith.constant 0 : index
    %3 = vector.load %arg2[%c0_1, %2, %c0_2, %c0_3] : memref<1x20x20x4xf32, #tpu.memory_space<vmem>>, vector<1x12x20x4xf32>
    %4 = vector.shape_cast %3 : vector<1x12x20x4xf32> to vector<12x20x4xf32>
    %5 = vector.shape_cast %4 : vector<12x20x4xf32> to vector<240x4xf32>
    %c0_4 = arith.constant 0 : index
    %c0_5 = arith.constant 0 : index
    %6 = vector.load %arg3[%c0_4, %c0_5] : memref<4x4xf32, #tpu.memory_space<vmem>>, vector<4x4xf32>
    %cst = arith.constant dense<0.000000e+00> : vector<240x4xf32>
    %7 = tpu.matmul %5, %6, %cst {dimension_numbers = #tpu.dot_dimension_numbers<[1], [0], [0], [1], [0, 0, 1, 1], [], []>} : vector<240x4xf32>, vector<4x4xf32>, vector<240x4xf32> -> vector<240x4xf32>
    %8 = vector.extract_strided_slice %0 {offsets = [0, 0], sizes = [1, 4], strides = [1, 1]} : vector<6x4xf32> to vector<1x4xf32>
    %9 = vector.shape_cast %8 : vector<1x4xf32> to vector<4xf32>
    %10 = vector.shape_cast %9 : vector<4xf32> to vector<1x4xf32>
    %11 = vector.broadcast %10 : vector<1x4xf32> to vector<240x4xf32>
    %12 = arith.mulf %7, %11 : vector<240x4xf32>
    %13 = vector.extract_strided_slice %0 {offsets = [1, 0], sizes = [1, 4], strides = [1, 1]} : vector<6x4xf32> to vector<1x4xf32>
    %14 = vector.shape_cast %13 : vector<1x4xf32> to vector<4xf32>
    %15 = vector.shape_cast %14 : vector<4xf32> to vector<1x4xf32>
    %16 = vector.broadcast %15 : vector<1x4xf32> to vector<240x4xf32>
    %17 = arith.addf %12, %16 : vector<240x4xf32>
    %18 = arith.negf %17 : vector<240x4xf32>
    %19 = math.exp %18 : vector<240x4xf32>
    %cst_6 = arith.constant 1.000000e+00 : f32
    %20 = vector.broadcast %cst_6 : f32 to vector<240x4xf32>
    %21 = arith.addf %20, %19 : vector<240x4xf32>
    %22 = arith.divf %20, %21 : vector<240x4xf32>
    %23 = arith.mulf %17, %22 : vector<240x4xf32>
    %24 = vector.extract_strided_slice %0 {offsets = [2, 0], sizes = [1, 4], strides = [1, 1]} : vector<6x4xf32> to vector<1x4xf32>
    %25 = vector.shape_cast %24 : vector<1x4xf32> to vector<4xf32>
    %26 = vector.shape_cast %25 : vector<4xf32> to vector<1x4xf32>
    %27 = vector.broadcast %26 : vector<1x4xf32> to vector<240x4xf32>
    %28 = arith.mulf %23, %27 : vector<240x4xf32>
    %29 = vector.extract_strided_slice %0 {offsets = [3, 0], sizes = [1, 4], strides = [1, 1]} : vector<6x4xf32> to vector<1x4xf32>
    %30 = vector.shape_cast %29 : vector<1x4xf32> to vector<4xf32>
    %31 = vector.shape_cast %30 : vector<4xf32> to vector<1x4xf32>
    %32 = vector.broadcast %31 : vector<1x4xf32> to vector<240x4xf32>
    %33 = arith.addf %28, %32 : vector<240x4xf32>
    %34 = vector.shape_cast %33 : vector<240x4xf32> to vector<12x20x4xf32>
    %c8_i32_7 = arith.constant 8 : i32
    %35 = arith.muli %arg1, %c8_i32_7 : i32
    %c2_i32 = arith.constant 2 : i32
    %36 = arith.subi %35, %c2_i32 : i32
    %37 = tpu.iota {dimensions = array<i32: 0>} : vector<12x20x1xi32>
    %38 = vector.broadcast %36 : i32 to vector<12x20x1xi32>
    %39 = arith.addi %38, %37 : vector<12x20x1xi32>
    %40 = tpu.iota {dimensions = array<i32: 1>} : vector<12x20x1xi32>
    %c-2_i32 = arith.constant -2 : i32
    %41 = vector.broadcast %c-2_i32 : i32 to vector<12x20x1xi32>
    %42 = arith.addi %41, %40 : vector<12x20x1xi32>
    %c0_i32 = arith.constant 0 : i32
    %43 = vector.broadcast %c0_i32 : i32 to vector<12x20x1xi32>
    %44 = arith.cmpi sge, %39, %43 : vector<12x20x1xi32>
    %c16_i32 = arith.constant 16 : i32
    %45 = vector.broadcast %c16_i32 : i32 to vector<12x20x1xi32>
    %46 = arith.cmpi slt, %39, %45 : vector<12x20x1xi32>
    %47 = arith.andi %44, %46 : vector<12x20x1xi1>
    %c0_i32_8 = arith.constant 0 : i32
    %48 = vector.broadcast %c0_i32_8 : i32 to vector<12x20x1xi32>
    %49 = arith.cmpi sge, %42, %48 : vector<12x20x1xi32>
    %50 = arith.andi %47, %49 : vector<12x20x1xi1>
    %c16_i32_9 = arith.constant 16 : i32
    %51 = vector.broadcast %c16_i32_9 : i32 to vector<12x20x1xi32>
    %52 = arith.cmpi slt, %42, %51 : vector<12x20x1xi32>
    %53 = arith.andi %50, %52 : vector<12x20x1xi1>
    %cst_10 = arith.constant 0.000000e+00 : f32
    %54 = vector.shape_cast %53 : vector<12x20x1xi1> to vector<12x20x1xi1>
    %55 = vector.broadcast %54 : vector<12x20x1xi1> to vector<12x20x4xi1>
    %56 = vector.broadcast %cst_10 : f32 to vector<12x20x4xf32>
    %57 = arith.select %55, %34, %56 : vector<12x20x4xi1>, vector<12x20x4xf32>
    %c0_11 = arith.constant 0 : index
    %c0_12 = arith.constant 0 : index
    %c0_13 = arith.constant 0 : index
    %58 = vector.load %arg7[%c0_11, %c0_12, %c0_13] : memref<12x20x4xf32, #tpu.memory_space<vmem>>, vector<12x20x4xf32>
    tpu.vector_store %arg7[%c0_11, %c0_12, %c0_13], %57 {strides = array<i32>} : memref<12x20x4xf32, #tpu.memory_space<vmem>>, vector<12x20x4xf32>,
    %c0_14 = arith.constant 0 : index
    %c0_15 = arith.constant 0 : index
    %59 = vector.load %arg5[%c0_14, %c0_15] : memref<25x4xf32, #tpu.memory_space<vmem>>, vector<25x4xf32>
    %cst_16 = arith.constant 0.000000e+00 : f32
    %60 = vector.broadcast %cst_16 : f32 to vector<8x16x4xf32>
    %c0_17 = arith.constant 0 : index
    %c0_18 = arith.constant 0 : index
    %c0_19 = arith.constant 0 : index
    %61 = vector.load %arg8[%c0_17, %c0_18, %c0_19] : memref<8x16x4xf32, #tpu.memory_space<vmem>>, vector<8x16x4xf32>
    tpu.vector_store %arg8[%c0_17, %c0_18, %c0_19], %60 {strides = array<i32>} : memref<8x16x4xf32, #tpu.memory_space<vmem>>, vector<8x16x4xf32>,
    %c0_20 = arith.constant 0 : index
    %c0_21 = arith.constant 0 : index
    %c0_22 = arith.constant 0 : index
    %62 = vector.load %arg8[%c0_20, %c0_21, %c0_22] : memref<8x16x4xf32, #tpu.memory_space<vmem>>, vector<8x16x4xf32>
    %c0_23 = arith.constant 0 : index
    %c0_24 = arith.constant 0 : index
    %c0_25 = arith.constant 0 : index
    %63 = vector.load %arg7[%c0_23, %c0_24, %c0_25] : memref<12x20x4xf32, #tpu.memory_space<vmem>>, vector<8x16x4xf32>
    %64 = vector.extract_strided_slice %59 {offsets = [0, 0], sizes = [1, 4], strides = [1, 1]} : vector<25x4xf32> to vector<1x4xf32>
    %65 = vector.shape_cast %64 : vector<1x4xf32> to vector<4xf32>
    %66 = vector.shape_cast %65 : vector<4xf32> to vector<1x1x4xf32>
    %67 = vector.broadcast %66 : vector<1x1x4xf32> to vector<8x16x4xf32>
    %68 = arith.mulf %63, %67 : vector<8x16x4xf32>
    %69 = arith.addf %62, %68 : vector<8x16x4xf32>
    %c0_26 = arith.constant 0 : index
    %c0_27 = arith.constant 0 : index
    %c0_28 = arith.constant 0 : index
    %70 = vector.load %arg8[%c0_26, %c0_27, %c0_28] : memref<8x16x4xf32, #tpu.memory_space<vmem>>, vector<8x16x4xf32>
    tpu.vector_store %arg8[%c0_26, %c0_27, %c0_28], %69 {strides = array<i32>} : memref<8x16x4xf32, #tpu.memory_space<vmem>>, vector<8x16x4xf32>,
    %c0_29 = arith.constant 0 : index
    %c0_30 = arith.constant 0 : index
    %c0_31 = arith.constant 0 : index
    %71 = vector.load %arg8[%c0_29, %c0_30, %c0_31] : memref<8x16x4xf32, #tpu.memory_space<vmem>>, vector<8x16x4xf32>
    %c0_32 = arith.constant 0 : index
    %c1 = arith.constant 1 : index
    %c0_33 = arith.constant 0 : index
    %72 = vector.load %arg7[%c0_32, %c1, %c0_33] : memref<12x20x4xf32, #tpu.memory_space<vmem>>, vector<8x16x4xf32>
    %73 = vector.extract_strided_slice %59 {offsets = [1, 0], sizes = [1, 4], strides = [1, 1]} : vector<25x4xf32> to vector<1x4xf32>
    %74 = vector.shape_cast %73 : vector<1x4xf32> to vector<4xf32>
    %75 = vector.shape_cast %74 : vector<4xf32> to vector<1x1x4xf32>
    %76 = vector.broadcast %75 : vector<1x1x4xf32> to vector<8x16x4xf32>
    %77 = arith.mulf %72, %76 : vector<8x16x4xf32>
    %78 = arith.addf %71, %77 : vector<8x16x4xf32>
    %c0_34 = arith.constant 0 : index
    %c0_35 = arith.constant 0 : index
    %c0_36 = arith.constant 0 : index
    %79 = vector.load %arg8[%c0_34, %c0_35, %c0_36] : memref<8x16x4xf32, #tpu.memory_space<vmem>>, vector<8x16x4xf32>
    tpu.vector_store %arg8[%c0_34, %c0_35, %c0_36], %78 {strides = array<i32>} : memref<8x16x4xf32, #tpu.memory_space<vmem>>, vector<8x16x4xf32>,
    %c0_37 = arith.constant 0 : index
    %c0_38 = arith.constant 0 : index
    %c0_39 = arith.constant 0 : index
    %80 = vector.load %arg8[%c0_37, %c0_38, %c0_39] : memref<8x16x4xf32, #tpu.memory_space<vmem>>, vector<8x16x4xf32>
    %c0_40 = arith.constant 0 : index
    %c2 = arith.constant 2 : index
    %c0_41 = arith.constant 0 : index
    %81 = vector.load %arg7[%c0_40, %c2, %c0_41] : memref<12x20x4xf32, #tpu.memory_space<vmem>>, vector<8x16x4xf32>
    %82 = vector.extract_strided_slice %59 {offsets = [2, 0], sizes = [1, 4], strides = [1, 1]} : vector<25x4xf32> to vector<1x4xf32>
    %83 = vector.shape_cast %82 : vector<1x4xf32> to vector<4xf32>
    %84 = vector.shape_cast %83 : vector<4xf32> to vector<1x1x4xf32>
    %85 = vector.broadcast %84 : vector<1x1x4xf32> to vector<8x16x4xf32>
    %86 = arith.mulf %81, %85 : vector<8x16x4xf32>
    %87 = arith.addf %80, %86 : vector<8x16x4xf32>
    %c0_42 = arith.constant 0 : index
    %c0_43 = arith.constant 0 : index
    %c0_44 = arith.constant 0 : index
    %88 = vector.load %arg8[%c0_42, %c0_43, %c0_44] : memref<8x16x4xf32, #tpu.memory_space<vmem>>, vector<8x16x4xf32>
    tpu.vector_store %arg8[%c0_42, %c0_43, %c0_44], %87 {strides = array<i32>} : memref<8x16x4xf32, #tpu.memory_space<vmem>>, vector<8x16x4xf32>,
    %c0_45 = arith.constant 0 : index
    %c0_46 = arith.constant 0 : index
    %c0_47 = arith.constant 0 : index
    %89 = vector.load %arg8[%c0_45, %c0_46, %c0_47] : memref<8x16x4xf32, #tpu.memory_space<vmem>>, vector<8x16x4xf32>
    %c0_48 = arith.constant 0 : index
    %c3 = arith.constant 3 : index
    %c0_49 = arith.constant 0 : index
    %90 = vector.load %arg7[%c0_48, %c3, %c0_49] : memref<12x20x4xf32, #tpu.memory_space<vmem>>, vector<8x16x4xf32>
    %91 = vector.extract_strided_slice %59 {offsets = [3, 0], sizes = [1, 4], strides = [1, 1]} : vector<25x4xf32> to vector<1x4xf32>
    %92 = vector.shape_cast %91 : vector<1x4xf32> to vector<4xf32>
    %93 = vector.shape_cast %92 : vector<4xf32> to vector<1x1x4xf32>
    %94 = vector.broadcast %93 : vector<1x1x4xf32> to vector<8x16x4xf32>
    %95 = arith.mulf %90, %94 : vector<8x16x4xf32>
    %96 = arith.addf %89, %95 : vector<8x16x4xf32>
    %c0_50 = arith.constant 0 : index
    %c0_51 = arith.constant 0 : index
    %c0_52 = arith.constant 0 : index
    %97 = vector.load %arg8[%c0_50, %c0_51, %c0_52] : memref<8x16x4xf32, #tpu.memory_space<vmem>>, vector<8x16x4xf32>
    tpu.vector_store %arg8[%c0_50, %c0_51, %c0_52], %96 {strides = array<i32>} : memref<8x16x4xf32, #tpu.memory_space<vmem>>, vector<8x16x4xf32>,
    %c0_53 = arith.constant 0 : index
    %c0_54 = arith.constant 0 : index
    %c0_55 = arith.constant 0 : index
    %98 = vector.load %arg8[%c0_53, %c0_54, %c0_55] : memref<8x16x4xf32, #tpu.memory_space<vmem>>, vector<8x16x4xf32>
    %c0_56 = arith.constant 0 : index
    %c4 = arith.constant 4 : index
    %c0_57 = arith.constant 0 : index
    %99 = vector.load %arg7[%c0_56, %c4, %c0_57] : memref<12x20x4xf32, #tpu.memory_space<vmem>>, vector<8x16x4xf32>
    %100 = vector.extract_strided_slice %59 {offsets = [4, 0], sizes = [1, 4], strides = [1, 1]} : vector<25x4xf32> to vector<1x4xf32>
    %101 = vector.shape_cast %100 : vector<1x4xf32> to vector<4xf32>
    %102 = vector.shape_cast %101 : vector<4xf32> to vector<1x1x4xf32>
    %103 = vector.broadcast %102 : vector<1x1x4xf32> to vector<8x16x4xf32>
    %104 = arith.mulf %99, %103 : vector<8x16x4xf32>
    %105 = arith.addf %98, %104 : vector<8x16x4xf32>
    %c0_58 = arith.constant 0 : index
    %c0_59 = arith.constant 0 : index
    %c0_60 = arith.constant 0 : index
    %106 = vector.load %arg8[%c0_58, %c0_59, %c0_60] : memref<8x16x4xf32, #tpu.memory_space<vmem>>, vector<8x16x4xf32>
    tpu.vector_store %arg8[%c0_58, %c0_59, %c0_60], %105 {strides = array<i32>} : memref<8x16x4xf32, #tpu.memory_space<vmem>>, vector<8x16x4xf32>,
    %c0_61 = arith.constant 0 : index
    %c0_62 = arith.constant 0 : index
    %c0_63 = arith.constant 0 : index
    %107 = vector.load %arg8[%c0_61, %c0_62, %c0_63] : memref<8x16x4xf32, #tpu.memory_space<vmem>>, vector<8x16x4xf32>
    %c1_64 = arith.constant 1 : index
    %c0_65 = arith.constant 0 : index
    %c0_66 = arith.constant 0 : index
    %108 = vector.load %arg7[%c1_64, %c0_65, %c0_66] : memref<12x20x4xf32, #tpu.memory_space<vmem>>, vector<8x16x4xf32>
    %109 = vector.extract_strided_slice %59 {offsets = [5, 0], sizes = [1, 4], strides = [1, 1]} : vector<25x4xf32> to vector<1x4xf32>
    %110 = vector.shape_cast %109 : vector<1x4xf32> to vector<4xf32>
    %111 = vector.shape_cast %110 : vector<4xf32> to vector<1x1x4xf32>
    %112 = vector.broadcast %111 : vector<1x1x4xf32> to vector<8x16x4xf32>
    %113 = arith.mulf %108, %112 : vector<8x16x4xf32>
    %114 = arith.addf %107, %113 : vector<8x16x4xf32>
    %c0_67 = arith.constant 0 : index
    %c0_68 = arith.constant 0 : index
    %c0_69 = arith.constant 0 : index
    %115 = vector.load %arg8[%c0_67, %c0_68, %c0_69] : memref<8x16x4xf32, #tpu.memory_space<vmem>>, vector<8x16x4xf32>
    tpu.vector_store %arg8[%c0_67, %c0_68, %c0_69], %114 {strides = array<i32>} : memref<8x16x4xf32, #tpu.memory_space<vmem>>, vector<8x16x4xf32>,
    %c0_70 = arith.constant 0 : index
    %c0_71 = arith.constant 0 : index
    %c0_72 = arith.constant 0 : index
    %116 = vector.load %arg8[%c0_70, %c0_71, %c0_72] : memref<8x16x4xf32, #tpu.memory_space<vmem>>, vector<8x16x4xf32>
    %c1_73 = arith.constant 1 : index
    %c1_74 = arith.constant 1 : index
    %c0_75 = arith.constant 0 : index
    %117 = vector.load %arg7[%c1_73, %c1_74, %c0_75] : memref<12x20x4xf32, #tpu.memory_space<vmem>>, vector<8x16x4xf32>
    %118 = vector.extract_strided_slice %59 {offsets = [6, 0], sizes = [1, 4], strides = [1, 1]} : vector<25x4xf32> to vector<1x4xf32>
    %119 = vector.shape_cast %118 : vector<1x4xf32> to vector<4xf32>
    %120 = vector.shape_cast %119 : vector<4xf32> to vector<1x1x4xf32>
    %121 = vector.broadcast %120 : vector<1x1x4xf32> to vector<8x16x4xf32>
    %122 = arith.mulf %117, %121 : vector<8x16x4xf32>
    %123 = arith.addf %116, %122 : vector<8x16x4xf32>
    %c0_76 = arith.constant 0 : index
    %c0_77 = arith.constant 0 : index
    %c0_78 = arith.constant 0 : index
    %124 = vector.load %arg8[%c0_76, %c0_77, %c0_78] : memref<8x16x4xf32, #tpu.memory_space<vmem>>, vector<8x16x4xf32>
    tpu.vector_store %arg8[%c0_76, %c0_77, %c0_78], %123 {strides = array<i32>} : memref<8x16x4xf32, #tpu.memory_space<vmem>>, vector<8x16x4xf32>,
    %c0_79 = arith.constant 0 : index
    %c0_80 = arith.constant 0 : index
    %c0_81 = arith.constant 0 : index
    %125 = vector.load %arg8[%c0_79, %c0_80, %c0_81] : memref<8x16x4xf32, #tpu.memory_space<vmem>>, vector<8x16x4xf32>
    %c1_82 = arith.constant 1 : index
    %c2_83 = arith.constant 2 : index
    %c0_84 = arith.constant 0 : index
    %126 = vector.load %arg7[%c1_82, %c2_83, %c0_84] : memref<12x20x4xf32, #tpu.memory_space<vmem>>, vector<8x16x4xf32>
    %127 = vector.extract_strided_slice %59 {offsets = [7, 0], sizes = [1, 4], strides = [1, 1]} : vector<25x4xf32> to vector<1x4xf32>
    %128 = vector.shape_cast %127 : vector<1x4xf32> to vector<4xf32>
    %129 = vector.shape_cast %128 : vector<4xf32> to vector<1x1x4xf32>
    %130 = vector.broadcast %129 : vector<1x1x4xf32> to vector<8x16x4xf32>
    %131 = arith.mulf %126, %130 : vector<8x16x4xf32>
    %132 = arith.addf %125, %131 : vector<8x16x4xf32>
    %c0_85 = arith.constant 0 : index
    %c0_86 = arith.constant 0 : index
    %c0_87 = arith.constant 0 : index
    %133 = vector.load %arg8[%c0_85, %c0_86, %c0_87] : memref<8x16x4xf32, #tpu.memory_space<vmem>>, vector<8x16x4xf32>
    tpu.vector_store %arg8[%c0_85, %c0_86, %c0_87], %132 {strides = array<i32>} : memref<8x16x4xf32, #tpu.memory_space<vmem>>, vector<8x16x4xf32>,
    %c0_88 = arith.constant 0 : index
    %c0_89 = arith.constant 0 : index
    %c0_90 = arith.constant 0 : index
    %134 = vector.load %arg8[%c0_88, %c0_89, %c0_90] : memref<8x16x4xf32, #tpu.memory_space<vmem>>, vector<8x16x4xf32>
    %c1_91 = arith.constant 1 : index
    %c3_92 = arith.constant 3 : index
    %c0_93 = arith.constant 0 : index
    %135 = vector.load %arg7[%c1_91, %c3_92, %c0_93] : memref<12x20x4xf32, #tpu.memory_space<vmem>>, vector<8x16x4xf32>
    %136 = vector.extract_strided_slice %59 {offsets = [8, 0], sizes = [1, 4], strides = [1, 1]} : vector<25x4xf32> to vector<1x4xf32>
    %137 = vector.shape_cast %136 : vector<1x4xf32> to vector<4xf32>
    %138 = vector.shape_cast %137 : vector<4xf32> to vector<1x1x4xf32>
    %139 = vector.broadcast %138 : vector<1x1x4xf32> to vector<8x16x4xf32>
    %140 = arith.mulf %135, %139 : vector<8x16x4xf32>
    %141 = arith.addf %134, %140 : vector<8x16x4xf32>
    %c0_94 = arith.constant 0 : index
    %c0_95 = arith.constant 0 : index
    %c0_96 = arith.constant 0 : index
    %142 = vector.load %arg8[%c0_94, %c0_95, %c0_96] : memref<8x16x4xf32, #tpu.memory_space<vmem>>, vector<8x16x4xf32>
    tpu.vector_store %arg8[%c0_94, %c0_95, %c0_96], %141 {strides = array<i32>} : memref<8x16x4xf32, #tpu.memory_space<vmem>>, vector<8x16x4xf32>,
    %c0_97 = arith.constant 0 : index
    %c0_98 = arith.constant 0 : index
    %c0_99 = arith.constant 0 : index
    %143 = vector.load %arg8[%c0_97, %c0_98, %c0_99] : memref<8x16x4xf32, #tpu.memory_space<vmem>>, vector<8x16x4xf32>
    %c1_100 = arith.constant 1 : index
    %c4_101 = arith.constant 4 : index
    %c0_102 = arith.constant 0 : index
    %144 = vector.load %arg7[%c1_100, %c4_101, %c0_102] : memref<12x20x4xf32, #tpu.memory_space<vmem>>, vector<8x16x4xf32>
    %145 = vector.extract_strided_slice %59 {offsets = [9, 0], sizes = [1, 4], strides = [1, 1]} : vector<25x4xf32> to vector<1x4xf32>
    %146 = vector.shape_cast %145 : vector<1x4xf32> to vector<4xf32>
    %147 = vector.shape_cast %146 : vector<4xf32> to vector<1x1x4xf32>
    %148 = vector.broadcast %147 : vector<1x1x4xf32> to vector<8x16x4xf32>
    %149 = arith.mulf %144, %148 : vector<8x16x4xf32>
    %150 = arith.addf %143, %149 : vector<8x16x4xf32>
    %c0_103 = arith.constant 0 : index
    %c0_104 = arith.constant 0 : index
    %c0_105 = arith.constant 0 : index
    %151 = vector.load %arg8[%c0_103, %c0_104, %c0_105] : memref<8x16x4xf32, #tpu.memory_space<vmem>>, vector<8x16x4xf32>
    tpu.vector_store %arg8[%c0_103, %c0_104, %c0_105], %150 {strides = array<i32>} : memref<8x16x4xf32, #tpu.memory_space<vmem>>, vector<8x16x4xf32>,
    %c0_106 = arith.constant 0 : index
    %c0_107 = arith.constant 0 : index
    %c0_108 = arith.constant 0 : index
    %152 = vector.load %arg8[%c0_106, %c0_107, %c0_108] : memref<8x16x4xf32, #tpu.memory_space<vmem>>, vector<8x16x4xf32>
    %c2_109 = arith.constant 2 : index
    %c0_110 = arith.constant 0 : index
    %c0_111 = arith.constant 0 : index
    %153 = vector.load %arg7[%c2_109, %c0_110, %c0_111] : memref<12x20x4xf32, #tpu.memory_space<vmem>>, vector<8x16x4xf32>
    %154 = vector.extract_strided_slice %59 {offsets = [10, 0], sizes = [1, 4], strides = [1, 1]} : vector<25x4xf32> to vector<1x4xf32>
    %155 = vector.shape_cast %154 : vector<1x4xf32> to vector<4xf32>
    %156 = vector.shape_cast %155 : vector<4xf32> to vector<1x1x4xf32>
    %157 = vector.broadcast %156 : vector<1x1x4xf32> to vector<8x16x4xf32>
    %158 = arith.mulf %153, %157 : vector<8x16x4xf32>
    %159 = arith.addf %152, %158 : vector<8x16x4xf32>
    %c0_112 = arith.constant 0 : index
    %c0_113 = arith.constant 0 : index
    %c0_114 = arith.constant 0 : index
    %160 = vector.load %arg8[%c0_112, %c0_113, %c0_114] : memref<8x16x4xf32, #tpu.memory_space<vmem>>, vector<8x16x4xf32>
    tpu.vector_store %arg8[%c0_112, %c0_113, %c0_114], %159 {strides = array<i32>} : memref<8x16x4xf32, #tpu.memory_space<vmem>>, vector<8x16x4xf32>,
    %c0_115 = arith.constant 0 : index
    %c0_116 = arith.constant 0 : index
    %c0_117 = arith.constant 0 : index
    %161 = vector.load %arg8[%c0_115, %c0_116, %c0_117] : memref<8x16x4xf32, #tpu.memory_space<vmem>>, vector<8x16x4xf32>
    %c2_118 = arith.constant 2 : index
    %c1_119 = arith.constant 1 : index
    %c0_120 = arith.constant 0 : index
    %162 = vector.load %arg7[%c2_118, %c1_119, %c0_120] : memref<12x20x4xf32, #tpu.memory_space<vmem>>, vector<8x16x4xf32>
    %163 = vector.extract_strided_slice %59 {offsets = [11, 0], sizes = [1, 4], strides = [1, 1]} : vector<25x4xf32> to vector<1x4xf32>
    %164 = vector.shape_cast %163 : vector<1x4xf32> to vector<4xf32>
    %165 = vector.shape_cast %164 : vector<4xf32> to vector<1x1x4xf32>
    %166 = vector.broadcast %165 : vector<1x1x4xf32> to vector<8x16x4xf32>
    %167 = arith.mulf %162, %166 : vector<8x16x4xf32>
    %168 = arith.addf %161, %167 : vector<8x16x4xf32>
    %c0_121 = arith.constant 0 : index
    %c0_122 = arith.constant 0 : index
    %c0_123 = arith.constant 0 : index
    %169 = vector.load %arg8[%c0_121, %c0_122, %c0_123] : memref<8x16x4xf32, #tpu.memory_space<vmem>>, vector<8x16x4xf32>
    tpu.vector_store %arg8[%c0_121, %c0_122, %c0_123], %168 {strides = array<i32>} : memref<8x16x4xf32, #tpu.memory_space<vmem>>, vector<8x16x4xf32>,
    %c0_124 = arith.constant 0 : index
    %c0_125 = arith.constant 0 : index
    %c0_126 = arith.constant 0 : index
    %170 = vector.load %arg8[%c0_124, %c0_125, %c0_126] : memref<8x16x4xf32, #tpu.memory_space<vmem>>, vector<8x16x4xf32>
    %c2_127 = arith.constant 2 : index
    %c2_128 = arith.constant 2 : index
    %c0_129 = arith.constant 0 : index
    %171 = vector.load %arg7[%c2_127, %c2_128, %c0_129] : memref<12x20x4xf32, #tpu.memory_space<vmem>>, vector<8x16x4xf32>
    %172 = vector.extract_strided_slice %59 {offsets = [12, 0], sizes = [1, 4], strides = [1, 1]} : vector<25x4xf32> to vector<1x4xf32>
    %173 = vector.shape_cast %172 : vector<1x4xf32> to vector<4xf32>
    %174 = vector.shape_cast %173 : vector<4xf32> to vector<1x1x4xf32>
    %175 = vector.broadcast %174 : vector<1x1x4xf32> to vector<8x16x4xf32>
    %176 = arith.mulf %171, %175 : vector<8x16x4xf32>
    %177 = arith.addf %170, %176 : vector<8x16x4xf32>
    %c0_130 = arith.constant 0 : index
    %c0_131 = arith.constant 0 : index
    %c0_132 = arith.constant 0 : index
    %178 = vector.load %arg8[%c0_130, %c0_131, %c0_132] : memref<8x16x4xf32, #tpu.memory_space<vmem>>, vector<8x16x4xf32>
    tpu.vector_store %arg8[%c0_130, %c0_131, %c0_132], %177 {strides = array<i32>} : memref<8x16x4xf32, #tpu.memory_space<vmem>>, vector<8x16x4xf32>,
    %c0_133 = arith.constant 0 : index
    %c0_134 = arith.constant 0 : index
    %c0_135 = arith.constant 0 : index
    %179 = vector.load %arg8[%c0_133, %c0_134, %c0_135] : memref<8x16x4xf32, #tpu.memory_space<vmem>>, vector<8x16x4xf32>
    %c2_136 = arith.constant 2 : index
    %c3_137 = arith.constant 3 : index
    %c0_138 = arith.constant 0 : index
    %180 = vector.load %arg7[%c2_136, %c3_137, %c0_138] : memref<12x20x4xf32, #tpu.memory_space<vmem>>, vector<8x16x4xf32>
    %181 = vector.extract_strided_slice %59 {offsets = [13, 0], sizes = [1, 4], strides = [1, 1]} : vector<25x4xf32> to vector<1x4xf32>
    %182 = vector.shape_cast %181 : vector<1x4xf32> to vector<4xf32>
    %183 = vector.shape_cast %182 : vector<4xf32> to vector<1x1x4xf32>
    %184 = vector.broadcast %183 : vector<1x1x4xf32> to vector<8x16x4xf32>
    %185 = arith.mulf %180, %184 : vector<8x16x4xf32>
    %186 = arith.addf %179, %185 : vector<8x16x4xf32>
    %c0_139 = arith.constant 0 : index
    %c0_140 = arith.constant 0 : index
    %c0_141 = arith.constant 0 : index
    %187 = vector.load %arg8[%c0_139, %c0_140, %c0_141] : memref<8x16x4xf32, #tpu.memory_space<vmem>>, vector<8x16x4xf32>
    tpu.vector_store %arg8[%c0_139, %c0_140, %c0_141], %186 {strides = array<i32>} : memref<8x16x4xf32, #tpu.memory_space<vmem>>, vector<8x16x4xf32>,
    %c0_142 = arith.constant 0 : index
    %c0_143 = arith.constant 0 : index
    %c0_144 = arith.constant 0 : index
    %188 = vector.load %arg8[%c0_142, %c0_143, %c0_144] : memref<8x16x4xf32, #tpu.memory_space<vmem>>, vector<8x16x4xf32>
    %c2_145 = arith.constant 2 : index
    %c4_146 = arith.constant 4 : index
    %c0_147 = arith.constant 0 : index
    %189 = vector.load %arg7[%c2_145, %c4_146, %c0_147] : memref<12x20x4xf32, #tpu.memory_space<vmem>>, vector<8x16x4xf32>
    %190 = vector.extract_strided_slice %59 {offsets = [14, 0], sizes = [1, 4], strides = [1, 1]} : vector<25x4xf32> to vector<1x4xf32>
    %191 = vector.shape_cast %190 : vector<1x4xf32> to vector<4xf32>
    %192 = vector.shape_cast %191 : vector<4xf32> to vector<1x1x4xf32>
    %193 = vector.broadcast %192 : vector<1x1x4xf32> to vector<8x16x4xf32>
    %194 = arith.mulf %189, %193 : vector<8x16x4xf32>
    %195 = arith.addf %188, %194 : vector<8x16x4xf32>
    %c0_148 = arith.constant 0 : index
    %c0_149 = arith.constant 0 : index
    %c0_150 = arith.constant 0 : index
    %196 = vector.load %arg8[%c0_148, %c0_149, %c0_150] : memref<8x16x4xf32, #tpu.memory_space<vmem>>, vector<8x16x4xf32>
    tpu.vector_store %arg8[%c0_148, %c0_149, %c0_150], %195 {strides = array<i32>} : memref<8x16x4xf32, #tpu.memory_space<vmem>>, vector<8x16x4xf32>,
    %c0_151 = arith.constant 0 : index
    %c0_152 = arith.constant 0 : index
    %c0_153 = arith.constant 0 : index
    %197 = vector.load %arg8[%c0_151, %c0_152, %c0_153] : memref<8x16x4xf32, #tpu.memory_space<vmem>>, vector<8x16x4xf32>
    %c3_154 = arith.constant 3 : index
    %c0_155 = arith.constant 0 : index
    %c0_156 = arith.constant 0 : index
    %198 = vector.load %arg7[%c3_154, %c0_155, %c0_156] : memref<12x20x4xf32, #tpu.memory_space<vmem>>, vector<8x16x4xf32>
    %199 = vector.extract_strided_slice %59 {offsets = [15, 0], sizes = [1, 4], strides = [1, 1]} : vector<25x4xf32> to vector<1x4xf32>
    %200 = vector.shape_cast %199 : vector<1x4xf32> to vector<4xf32>
    %201 = vector.shape_cast %200 : vector<4xf32> to vector<1x1x4xf32>
    %202 = vector.broadcast %201 : vector<1x1x4xf32> to vector<8x16x4xf32>
    %203 = arith.mulf %198, %202 : vector<8x16x4xf32>
    %204 = arith.addf %197, %203 : vector<8x16x4xf32>
    %c0_157 = arith.constant 0 : index
    %c0_158 = arith.constant 0 : index
    %c0_159 = arith.constant 0 : index
    %205 = vector.load %arg8[%c0_157, %c0_158, %c0_159] : memref<8x16x4xf32, #tpu.memory_space<vmem>>, vector<8x16x4xf32>
    tpu.vector_store %arg8[%c0_157, %c0_158, %c0_159], %204 {strides = array<i32>} : memref<8x16x4xf32, #tpu.memory_space<vmem>>, vector<8x16x4xf32>,
    %c0_160 = arith.constant 0 : index
    %c0_161 = arith.constant 0 : index
    %c0_162 = arith.constant 0 : index
    %206 = vector.load %arg8[%c0_160, %c0_161, %c0_162] : memref<8x16x4xf32, #tpu.memory_space<vmem>>, vector<8x16x4xf32>
    %c3_163 = arith.constant 3 : index
    %c1_164 = arith.constant 1 : index
    %c0_165 = arith.constant 0 : index
    %207 = vector.load %arg7[%c3_163, %c1_164, %c0_165] : memref<12x20x4xf32, #tpu.memory_space<vmem>>, vector<8x16x4xf32>
    %208 = vector.extract_strided_slice %59 {offsets = [16, 0], sizes = [1, 4], strides = [1, 1]} : vector<25x4xf32> to vector<1x4xf32>
    %209 = vector.shape_cast %208 : vector<1x4xf32> to vector<4xf32>
    %210 = vector.shape_cast %209 : vector<4xf32> to vector<1x1x4xf32>
    %211 = vector.broadcast %210 : vector<1x1x4xf32> to vector<8x16x4xf32>
    %212 = arith.mulf %207, %211 : vector<8x16x4xf32>
    %213 = arith.addf %206, %212 : vector<8x16x4xf32>
    %c0_166 = arith.constant 0 : index
    %c0_167 = arith.constant 0 : index
    %c0_168 = arith.constant 0 : index
    %214 = vector.load %arg8[%c0_166, %c0_167, %c0_168] : memref<8x16x4xf32, #tpu.memory_space<vmem>>, vector<8x16x4xf32>
    tpu.vector_store %arg8[%c0_166, %c0_167, %c0_168], %213 {strides = array<i32>} : memref<8x16x4xf32, #tpu.memory_space<vmem>>, vector<8x16x4xf32>,
    %c0_169 = arith.constant 0 : index
    %c0_170 = arith.constant 0 : index
    %c0_171 = arith.constant 0 : index
    %215 = vector.load %arg8[%c0_169, %c0_170, %c0_171] : memref<8x16x4xf32, #tpu.memory_space<vmem>>, vector<8x16x4xf32>
    %c3_172 = arith.constant 3 : index
    %c2_173 = arith.constant 2 : index
    %c0_174 = arith.constant 0 : index
    %216 = vector.load %arg7[%c3_172, %c2_173, %c0_174] : memref<12x20x4xf32, #tpu.memory_space<vmem>>, vector<8x16x4xf32>
    %217 = vector.extract_strided_slice %59 {offsets = [17, 0], sizes = [1, 4], strides = [1, 1]} : vector<25x4xf32> to vector<1x4xf32>
    %218 = vector.shape_cast %217 : vector<1x4xf32> to vector<4xf32>
    %219 = vector.shape_cast %218 : vector<4xf32> to vector<1x1x4xf32>
    %220 = vector.broadcast %219 : vector<1x1x4xf32> to vector<8x16x4xf32>
    %221 = arith.mulf %216, %220 : vector<8x16x4xf32>
    %222 = arith.addf %215, %221 : vector<8x16x4xf32>
    %c0_175 = arith.constant 0 : index
    %c0_176 = arith.constant 0 : index
    %c0_177 = arith.constant 0 : index
    %223 = vector.load %arg8[%c0_175, %c0_176, %c0_177] : memref<8x16x4xf32, #tpu.memory_space<vmem>>, vector<8x16x4xf32>
    tpu.vector_store %arg8[%c0_175, %c0_176, %c0_177], %222 {strides = array<i32>} : memref<8x16x4xf32, #tpu.memory_space<vmem>>, vector<8x16x4xf32>,
    %c0_178 = arith.constant 0 : index
    %c0_179 = arith.constant 0 : index
    %c0_180 = arith.constant 0 : index
    %224 = vector.load %arg8[%c0_178, %c0_179, %c0_180] : memref<8x16x4xf32, #tpu.memory_space<vmem>>, vector<8x16x4xf32>
    %c3_181 = arith.constant 3 : index
    %c3_182 = arith.constant 3 : index
    %c0_183 = arith.constant 0 : index
    %225 = vector.load %arg7[%c3_181, %c3_182, %c0_183] : memref<12x20x4xf32, #tpu.memory_space<vmem>>, vector<8x16x4xf32>
    %226 = vector.extract_strided_slice %59 {offsets = [18, 0], sizes = [1, 4], strides = [1, 1]} : vector<25x4xf32> to vector<1x4xf32>
    %227 = vector.shape_cast %226 : vector<1x4xf32> to vector<4xf32>
    %228 = vector.shape_cast %227 : vector<4xf32> to vector<1x1x4xf32>
    %229 = vector.broadcast %228 : vector<1x1x4xf32> to vector<8x16x4xf32>
    %230 = arith.mulf %225, %229 : vector<8x16x4xf32>
    %231 = arith.addf %224, %230 : vector<8x16x4xf32>
    %c0_184 = arith.constant 0 : index
    %c0_185 = arith.constant 0 : index
    %c0_186 = arith.constant 0 : index
    %232 = vector.load %arg8[%c0_184, %c0_185, %c0_186] : memref<8x16x4xf32, #tpu.memory_space<vmem>>, vector<8x16x4xf32>
    tpu.vector_store %arg8[%c0_184, %c0_185, %c0_186], %231 {strides = array<i32>} : memref<8x16x4xf32, #tpu.memory_space<vmem>>, vector<8x16x4xf32>,
    %c0_187 = arith.constant 0 : index
    %c0_188 = arith.constant 0 : index
    %c0_189 = arith.constant 0 : index
    %233 = vector.load %arg8[%c0_187, %c0_188, %c0_189] : memref<8x16x4xf32, #tpu.memory_space<vmem>>, vector<8x16x4xf32>
    %c3_190 = arith.constant 3 : index
    %c4_191 = arith.constant 4 : index
    %c0_192 = arith.constant 0 : index
    %234 = vector.load %arg7[%c3_190, %c4_191, %c0_192] : memref<12x20x4xf32, #tpu.memory_space<vmem>>, vector<8x16x4xf32>
    %235 = vector.extract_strided_slice %59 {offsets = [19, 0], sizes = [1, 4], strides = [1, 1]} : vector<25x4xf32> to vector<1x4xf32>
    %236 = vector.shape_cast %235 : vector<1x4xf32> to vector<4xf32>
    %237 = vector.shape_cast %236 : vector<4xf32> to vector<1x1x4xf32>
    %238 = vector.broadcast %237 : vector<1x1x4xf32> to vector<8x16x4xf32>
    %239 = arith.mulf %234, %238 : vector<8x16x4xf32>
    %240 = arith.addf %233, %239 : vector<8x16x4xf32>
    %c0_193 = arith.constant 0 : index
    %c0_194 = arith.constant 0 : index
    %c0_195 = arith.constant 0 : index
    %241 = vector.load %arg8[%c0_193, %c0_194, %c0_195] : memref<8x16x4xf32, #tpu.memory_space<vmem>>, vector<8x16x4xf32>
    tpu.vector_store %arg8[%c0_193, %c0_194, %c0_195], %240 {strides = array<i32>} : memref<8x16x4xf32, #tpu.memory_space<vmem>>, vector<8x16x4xf32>,
    %c0_196 = arith.constant 0 : index
    %c0_197 = arith.constant 0 : index
    %c0_198 = arith.constant 0 : index
    %242 = vector.load %arg8[%c0_196, %c0_197, %c0_198] : memref<8x16x4xf32, #tpu.memory_space<vmem>>, vector<8x16x4xf32>
    %c4_199 = arith.constant 4 : index
    %c0_200 = arith.constant 0 : index
    %c0_201 = arith.constant 0 : index
    %243 = vector.load %arg7[%c4_199, %c0_200, %c0_201] : memref<12x20x4xf32, #tpu.memory_space<vmem>>, vector<8x16x4xf32>
    %244 = vector.extract_strided_slice %59 {offsets = [20, 0], sizes = [1, 4], strides = [1, 1]} : vector<25x4xf32> to vector<1x4xf32>
    %245 = vector.shape_cast %244 : vector<1x4xf32> to vector<4xf32>
    %246 = vector.shape_cast %245 : vector<4xf32> to vector<1x1x4xf32>
    %247 = vector.broadcast %246 : vector<1x1x4xf32> to vector<8x16x4xf32>
    %248 = arith.mulf %243, %247 : vector<8x16x4xf32>
    %249 = arith.addf %242, %248 : vector<8x16x4xf32>
    %c0_202 = arith.constant 0 : index
    %c0_203 = arith.constant 0 : index
    %c0_204 = arith.constant 0 : index
    %250 = vector.load %arg8[%c0_202, %c0_203, %c0_204] : memref<8x16x4xf32, #tpu.memory_space<vmem>>, vector<8x16x4xf32>
    tpu.vector_store %arg8[%c0_202, %c0_203, %c0_204], %249 {strides = array<i32>} : memref<8x16x4xf32, #tpu.memory_space<vmem>>, vector<8x16x4xf32>,
    %c0_205 = arith.constant 0 : index
    %c0_206 = arith.constant 0 : index
    %c0_207 = arith.constant 0 : index
    %251 = vector.load %arg8[%c0_205, %c0_206, %c0_207] : memref<8x16x4xf32, #tpu.memory_space<vmem>>, vector<8x16x4xf32>
    %c4_208 = arith.constant 4 : index
    %c1_209 = arith.constant 1 : index
    %c0_210 = arith.constant 0 : index
    %252 = vector.load %arg7[%c4_208, %c1_209, %c0_210] : memref<12x20x4xf32, #tpu.memory_space<vmem>>, vector<8x16x4xf32>
    %253 = vector.extract_strided_slice %59 {offsets = [21, 0], sizes = [1, 4], strides = [1, 1]} : vector<25x4xf32> to vector<1x4xf32>
    %254 = vector.shape_cast %253 : vector<1x4xf32> to vector<4xf32>
    %255 = vector.shape_cast %254 : vector<4xf32> to vector<1x1x4xf32>
    %256 = vector.broadcast %255 : vector<1x1x4xf32> to vector<8x16x4xf32>
    %257 = arith.mulf %252, %256 : vector<8x16x4xf32>
    %258 = arith.addf %251, %257 : vector<8x16x4xf32>
    %c0_211 = arith.constant 0 : index
    %c0_212 = arith.constant 0 : index
    %c0_213 = arith.constant 0 : index
    %259 = vector.load %arg8[%c0_211, %c0_212, %c0_213] : memref<8x16x4xf32, #tpu.memory_space<vmem>>, vector<8x16x4xf32>
    tpu.vector_store %arg8[%c0_211, %c0_212, %c0_213], %258 {strides = array<i32>} : memref<8x16x4xf32, #tpu.memory_space<vmem>>, vector<8x16x4xf32>,
    %c0_214 = arith.constant 0 : index
    %c0_215 = arith.constant 0 : index
    %c0_216 = arith.constant 0 : index
    %260 = vector.load %arg8[%c0_214, %c0_215, %c0_216] : memref<8x16x4xf32, #tpu.memory_space<vmem>>, vector<8x16x4xf32>
    %c4_217 = arith.constant 4 : index
    %c2_218 = arith.constant 2 : index
    %c0_219 = arith.constant 0 : index
    %261 = vector.load %arg7[%c4_217, %c2_218, %c0_219] : memref<12x20x4xf32, #tpu.memory_space<vmem>>, vector<8x16x4xf32>
    %262 = vector.extract_strided_slice %59 {offsets = [22, 0], sizes = [1, 4], strides = [1, 1]} : vector<25x4xf32> to vector<1x4xf32>
    %263 = vector.shape_cast %262 : vector<1x4xf32> to vector<4xf32>
    %264 = vector.shape_cast %263 : vector<4xf32> to vector<1x1x4xf32>
    %265 = vector.broadcast %264 : vector<1x1x4xf32> to vector<8x16x4xf32>
    %266 = arith.mulf %261, %265 : vector<8x16x4xf32>
    %267 = arith.addf %260, %266 : vector<8x16x4xf32>
    %c0_220 = arith.constant 0 : index
    %c0_221 = arith.constant 0 : index
    %c0_222 = arith.constant 0 : index
    %268 = vector.load %arg8[%c0_220, %c0_221, %c0_222] : memref<8x16x4xf32, #tpu.memory_space<vmem>>, vector<8x16x4xf32>
    tpu.vector_store %arg8[%c0_220, %c0_221, %c0_222], %267 {strides = array<i32>} : memref<8x16x4xf32, #tpu.memory_space<vmem>>, vector<8x16x4xf32>,
    %c0_223 = arith.constant 0 : index
    %c0_224 = arith.constant 0 : index
    %c0_225 = arith.constant 0 : index
    %269 = vector.load %arg8[%c0_223, %c0_224, %c0_225] : memref<8x16x4xf32, #tpu.memory_space<vmem>>, vector<8x16x4xf32>
    %c4_226 = arith.constant 4 : index
    %c3_227 = arith.constant 3 : index
    %c0_228 = arith.constant 0 : index
    %270 = vector.load %arg7[%c4_226, %c3_227, %c0_228] : memref<12x20x4xf32, #tpu.memory_space<vmem>>, vector<8x16x4xf32>
    %271 = vector.extract_strided_slice %59 {offsets = [23, 0], sizes = [1, 4], strides = [1, 1]} : vector<25x4xf32> to vector<1x4xf32>
    %272 = vector.shape_cast %271 : vector<1x4xf32> to vector<4xf32>
    %273 = vector.shape_cast %272 : vector<4xf32> to vector<1x1x4xf32>
    %274 = vector.broadcast %273 : vector<1x1x4xf32> to vector<8x16x4xf32>
    %275 = arith.mulf %270, %274 : vector<8x16x4xf32>
    %276 = arith.addf %269, %275 : vector<8x16x4xf32>
    %c0_229 = arith.constant 0 : index
    %c0_230 = arith.constant 0 : index
    %c0_231 = arith.constant 0 : index
    %277 = vector.load %arg8[%c0_229, %c0_230, %c0_231] : memref<8x16x4xf32, #tpu.memory_space<vmem>>, vector<8x16x4xf32>
    tpu.vector_store %arg8[%c0_229, %c0_230, %c0_231], %276 {strides = array<i32>} : memref<8x16x4xf32, #tpu.memory_space<vmem>>, vector<8x16x4xf32>,
    %c0_232 = arith.constant 0 : index
    %c0_233 = arith.constant 0 : index
    %c0_234 = arith.constant 0 : index
    %278 = vector.load %arg8[%c0_232, %c0_233, %c0_234] : memref<8x16x4xf32, #tpu.memory_space<vmem>>, vector<8x16x4xf32>
    %c4_235 = arith.constant 4 : index
    %c4_236 = arith.constant 4 : index
    %c0_237 = arith.constant 0 : index
    %279 = vector.load %arg7[%c4_235, %c4_236, %c0_237] : memref<12x20x4xf32, #tpu.memory_space<vmem>>, vector<8x16x4xf32>
    %280 = vector.extract_strided_slice %59 {offsets = [24, 0], sizes = [1, 4], strides = [1, 1]} : vector<25x4xf32> to vector<1x4xf32>
    %281 = vector.shape_cast %280 : vector<1x4xf32> to vector<4xf32>
    %282 = vector.shape_cast %281 : vector<4xf32> to vector<1x1x4xf32>
    %283 = vector.broadcast %282 : vector<1x1x4xf32> to vector<8x16x4xf32>
    %284 = arith.mulf %279, %283 : vector<8x16x4xf32>
    %285 = arith.addf %278, %284 : vector<8x16x4xf32>
    %c0_238 = arith.constant 0 : index
    %c0_239 = arith.constant 0 : index
    %c0_240 = arith.constant 0 : index
    %286 = vector.load %arg8[%c0_238, %c0_239, %c0_240] : memref<8x16x4xf32, #tpu.memory_space<vmem>>, vector<8x16x4xf32>
    tpu.vector_store %arg8[%c0_238, %c0_239, %c0_240], %285 {strides = array<i32>} : memref<8x16x4xf32, #tpu.memory_space<vmem>>, vector<8x16x4xf32>,
    %c0_241 = arith.constant 0 : index
    %c0_242 = arith.constant 0 : index
    %c0_243 = arith.constant 0 : index
    %287 = vector.load %arg8[%c0_241, %c0_242, %c0_243] : memref<8x16x4xf32, #tpu.memory_space<vmem>>, vector<8x16x4xf32>
    %288 = vector.extract_strided_slice %0 {offsets = [4, 0], sizes = [1, 4], strides = [1, 1]} : vector<6x4xf32> to vector<1x4xf32>
    %289 = vector.shape_cast %288 : vector<1x4xf32> to vector<4xf32>
    %290 = vector.shape_cast %289 : vector<4xf32> to vector<1x1x4xf32>
    %291 = vector.broadcast %290 : vector<1x1x4xf32> to vector<8x16x4xf32>
    %292 = arith.mulf %287, %291 : vector<8x16x4xf32>
    %293 = vector.extract_strided_slice %0 {offsets = [5, 0], sizes = [1, 4], strides = [1, 1]} : vector<6x4xf32> to vector<1x4xf32>
    %294 = vector.shape_cast %293 : vector<1x4xf32> to vector<4xf32>
    %295 = vector.shape_cast %294 : vector<4xf32> to vector<1x1x4xf32>
    %296 = vector.broadcast %295 : vector<1x1x4xf32> to vector<8x16x4xf32>
    %297 = arith.addf %292, %296 : vector<8x16x4xf32>
    %298 = arith.negf %297 : vector<8x16x4xf32>
    %299 = math.exp %298 : vector<8x16x4xf32>
    %cst_244 = arith.constant 1.000000e+00 : f32
    %300 = vector.broadcast %cst_244 : f32 to vector<8x16x4xf32>
    %301 = arith.addf %300, %299 : vector<8x16x4xf32>
    %302 = arith.divf %300, %301 : vector<8x16x4xf32>
    %303 = arith.mulf %297, %302 : vector<8x16x4xf32>
    %c2_245 = arith.constant 2 : index
    %c2_246 = arith.constant 2 : index
    %c0_247 = arith.constant 0 : index
    %304 = vector.load %arg7[%c2_245, %c2_246, %c0_247] : memref<12x20x4xf32, #tpu.memory_space<vmem>>, vector<8x16x4xf32>
    %305 = tpu.concatenate %304, %303 in 2 : vector<8x16x4xf32>, vector<8x16x4xf32> -> vector<8x16x8xf32>
    %c0_248 = arith.constant 0 : index
    %c0_249 = arith.constant 0 : index
    %c0_250 = arith.constant 0 : index
    %c0_251 = arith.constant 0 : index
    %306 = vector.load %arg6[%c0_248, %c0_249, %c0_250, %c0_251] : memref<1x8x16x8xf32, #tpu.memory_space<vmem>>, vector<1x8x16x8xf32>
    %307 = vector.shape_cast %306 : vector<1x8x16x8xf32> to vector<8x16x8xf32>
    %308 = vector.shape_cast %305 : vector<8x16x8xf32> to vector<1x8x16x8xf32>
    tpu.vector_store %arg6[%c0_248, %c0_249, %c0_250, %c0_251], %308 {strides = array<i32>} : memref<1x8x16x8xf32, #tpu.memory_space<vmem>>, vector<1x8x16x8xf32>,
    return
  }
  func.func @transform_0(%arg0: i32, %arg1: i32) -> (i32, i32, i32, i32) {
    %c0_i32 = arith.constant 0 : i32
    %c0_i32_0 = arith.constant 0 : i32
    %c0_i32_1 = arith.constant 0 : i32
    %c0_i32_2 = arith.constant 0 : i32
    return %arg0, %c0_i32, %c0_i32_0, %c0_i32_1 : i32, i32, i32, i32
  }
  func.func @transform_1(%arg0: i32, %arg1: i32) -> (i32, i32) {
    %c0_i32 = arith.constant 0 : i32
    %c0_i32_0 = arith.constant 0 : i32
    %c0_i32_1 = arith.constant 0 : i32
    return %c0_i32, %c0_i32_0 : i32, i32
  }
  func.func @transform_2(%arg0: i32, %arg1: i32) -> (i32, i32) {
    %c0_i32 = arith.constant 0 : i32
    %c0_i32_0 = arith.constant 0 : i32
    %c0_i32_1 = arith.constant 0 : i32
    return %c0_i32, %c0_i32_0 : i32, i32
  }
  func.func @transform_3(%arg0: i32, %arg1: i32) -> (i32, i32) {
    %c0_i32 = arith.constant 0 : i32
    %c0_i32_0 = arith.constant 0 : i32
    %c0_i32_1 = arith.constant 0 : i32
    return %c0_i32, %c0_i32_0 : i32, i32
  }
  func.func @transform_4(%arg0: i32, %arg1: i32) -> (i32, i32, i32, i32) {
    %c0_i32 = arith.constant 0 : i32
    %c0_i32_0 = arith.constant 0 : i32
    %c0_i32_1 = arith.constant 0 : i32
    return %arg0, %arg1, %c0_i32, %c0_i32_0 : i32, i32, i32, i32
  }
}

</mosaic_0001>

<llo_original>
// kernel: tpu_custom_call.1
$region0: #{tpu_custom_call.1}
  #allocation0 [shape = 'u32[]', space=smem, size = 0x4, offset = 0x4, fixed_abs, tag = 'smem constant byte address 0x4 - core index']
  #allocation1 [shape = 'u32[144,128]{1,0:T(1,128)}', space=vmem, size = 0x12000, scoped, tag = 'internal scratch']
  #allocation2 [shape = 'f32[12,20,4]{2,1,0:T(8,128)}', space=vmem, size = 0x24000, scoped, tag = 'scratch operand']
  #allocation3 [shape = 'f32[8,16,4]{2,1,0:T(8,128)}', space=vmem, size = 0x10000, scoped, tag = 'scratch operand']
  %s0 = inlined_call_operand.vmem [shape: f32[2,20,20,4], index: 0, kind: input, shape index: {}]
  %s1 = inlined_call_operand.vmem [shape: f32[4,4], index: 1, kind: input, shape index: {}]
  %s2 = inlined_call_operand.vmem [shape: f32[6,4], index: 2, kind: input, shape index: {}]
  %s3 = inlined_call_operand.vmem [shape: f32[25,4], index: 3, kind: input, shape index: {}]
  %s4 = inlined_call_operand.vmem [shape: f32[2,16,16,8], index: 4, kind: output, shape index: {}]
  %s5 = sld [smem:[#allocation0]]
  $region49: #{tpu_custom_call.1} parent=0
    _
  %s7 = ssub.s32 1, %s5
  %s8 = scalar_select 0, %s7, %s5
  loop: start=0, step=1, limit=6
  $region2: #{tpu_custom_call.1} parent=0 // loop_pre_header
    _
  $region3: #{tpu_custom_call.1} parent=0 // loop_header
    %s10 = sphi 0, %s14
    %p11 = scmp.ge.s32.totalorder %s10, 6
    %s17 = sphi 0, %s29
    %s18 = sphi 0, %s25
    %s19 = sphi 0, %s17
    %s20 = sphi 0, %s18
    %s21 = sphi 0, %s19
    %s22 = sphi 0, %s20
    %s32 = sphi 0, %s34
    %s35 = sphi 0, %s32
    %s36 = sphi 0, %s35
    %s52 = sphi 0, %s36
    %s56 = sphi 0, %s56
    %s58 = sphi 0, %s56
    %s59 = sphi 0, %s58
    %s73 = sphi 0, %s59
    %s77 = sphi 0, %s77
    %s79 = sphi 0, %s77
    %s80 = sphi 0, %s79
    %s94 = sphi 0, %s80
    %s98 = sphi 0, %s98
    %s100 = sphi 0, %s98
    %s101 = sphi 0, %s100
    %s115 = sphi 0, %s101
    %s123 = sphi 0, %s125
    %s126 = sphi 0, %s123
    %s127 = sphi 0, %s126
    %s143 = sphi 0, %s127
  $region4: #{tpu_custom_call.1} parent=0 // loop_header_branch
    %13 = sbr.rel (%p11) target = $region8
  $region5: #{tpu_custom_call.1} parent=0 // loop_body
    %s15 = ssub.s32 %s10, 1
    %s16 = ssub.s32 %s10, 2
    %s23 = sadd.s32 1, %s18
    %p24 = scmp.ge.s32.totalorder %s23, 2
    %s25 = scalar_select %p24, 0, %s23
    %s26 = sadd.s32 1, %s17
    %s27 = scalar_select %p24, %s26, %s17
    %p28 = scmp.ge.s32.totalorder %s27, 2
    %s29 = scalar_select %p28, 0, %s27
    %s30 = ssub.s32 %s17, %s29
    %p31 = scmp.eq.s32.totalorder %s30, 0
    %s33 = sadd.s32 %s32, 1
    %s34 = scalar_select %p31, %s32, %s33
    %p37 = pneg %p31
    %p38 = scmp.eq.s32.totalorder %s10, 3
    %p39 = por %p37, %p38
    %p40 = scmp.ne.s32.totalorder %s32, %s35
    %p41 = scmp.eq.s32.totalorder %s10, 0
    %p42 = por %p40, %p41
    %p43 = scmp.ne.s32.totalorder %s32, %s35
    %p44 = scmp.eq.s32.totalorder %s15, 3
    %p45 = por %p43, %p44
    %p46 = scmp.ne.s32.totalorder %s35, %s36
    %p47 = scmp.eq.s32.totalorder %s15, 0
    %p48 = por %p46, %p47
    %p49 = scmp.ne.s32.totalorder %s35, %s36
    %p50 = scmp.eq.s32.totalorder %s16, 3
    %p51 = por %p49, %p50
    %p53 = scmp.ne.s32.totalorder %s36, %s52
    %p54 = scmp.eq.s32.totalorder %s16, 0
    %p55 = por %p53, %p54
    %s57 = sadd.s32 %s56, 1
    %p60 = scmp.eq.s32.totalorder %s10, 3
    %p61 = scmp.ne.s32.totalorder %s56, %s58
    %p62 = scmp.eq.s32.totalorder %s10, 0
    %p63 = por %p61, %p62
    %p64 = scmp.ne.s32.totalorder %s56, %s58
    %p65 = scmp.eq.s32.totalorder %s15, 3
    %p66 = por %p64, %p65
    %p67 = scmp.ne.s32.totalorder %s58, %s59
    %p68 = scmp.eq.s32.totalorder %s15, 0
    %p69 = por %p67, %p68
    %p70 = scmp.ne.s32.totalorder %s58, %s59
    %p71 = scmp.eq.s32.totalorder %s16, 3
    %p72 = por %p70, %p71
    %p74 = scmp.ne.s32.totalorder %s59, %s73
    %p75 = scmp.eq.s32.totalorder %s16, 0
    %p76 = por %p74, %p75
    %s78 = sadd.s32 %s77, 1
    %p81 = scmp.eq.s32.totalorder %s10, 3
    %p82 = scmp.ne.s32.totalorder %s77, %s79
    %p83 = scmp.eq.s32.totalorder %s10, 0
    %p84 = por %p82, %p83
    %p85 = scmp.ne.s32.totalorder %s77, %s79
    %p86 = scmp.eq.s32.totalorder %s15, 3
    %p87 = por %p85, %p86
    %p88 = scmp.ne.s32.totalorder %s79, %s80
    %p89 = scmp.eq.s32.totalorder %s15, 0
    %p90 = por %p88, %p89
    %p91 = scmp.ne.s32.totalorder %s79, %s80
    %p92 = scmp.eq.s32.totalorder %s16, 3
    %p93 = por %p91, %p92
    %p95 = scmp.ne.s32.totalorder %s80, %s94
    %p96 = scmp.eq.s32.totalorder %s16, 0
    %p97 = por %p95, %p96
    %s99 = sadd.s32 %s98, 1
    %p102 = scmp.eq.s32.totalorder %s10, 3
    %p103 = scmp.ne.s32.totalorder %s98, %s100
    %p104 = scmp.eq.s32.totalorder %s10, 0
    %p105 = por %p103, %p104
    %p106 = scmp.ne.s32.totalorder %s98, %s100
    %p107 = scmp.eq.s32.totalorder %s15, 3
    %p108 = por %p106, %p107
    %p109 = scmp.ne.s32.totalorder %s100, %s101
    %p110 = scmp.eq.s32.totalorder %s15, 0
    %p111 = por %p109, %p110
    %p112 = scmp.ne.s32.totalorder %s100, %s101
    %p113 = scmp.eq.s32.totalorder %s16, 3
    %p114 = por %p112, %p113
    %p116 = scmp.ne.s32.totalorder %s101, %s115
    %p117 = scmp.eq.s32.totalorder %s16, 0
    %p118 = por %p116, %p117
    %s119 = ssub.s32 %s17, %s29
    %s120 = ssub.s32 %s18, %s25
    %s121 = sor.u32 %s119, %s120
    %p122 = scmp.eq.s32.totalorder %s121, 0
    %s124 = sadd.s32 %s123, 1
    %s125 = scalar_select %p122, %s123, %s124
    %p128 = pneg %p122
    %p129 = scmp.eq.s32.totalorder %s10, 3
    %p130 = por %p128, %p129
    %p131 = scmp.ne.s32.totalorder %s123, %s126
    %p132 = scmp.eq.s32.totalorder %s10, 0
    %p133 = por %p131, %p132
    %p134 = scmp.ne.s32.totalorder %s123, %s126
    %p135 = scmp.eq.s32.totalorder %s15, 3
    %p136 = por %p134, %p135
    %p137 = scmp.ne.s32.totalorder %s126, %s127
    %p138 = scmp.eq.s32.totalorder %s15, 0
    %p139 = por %p137, %p138
    %p140 = scmp.ne.s32.totalorder %s126, %s127
    %p141 = scmp.eq.s32.totalorder %s16, 3
    %p142 = por %p140, %p141
    %p144 = scmp.ne.s32.totalorder %s127, %s143
    %p145 = scmp.eq.s32.totalorder %s16, 0
    %p146 = por %p144, %p145
    %p147 = scmp.le.s32.totalorder 1, %s10
    %p148 = scmp.lt.s32.totalorder %s10, 5
    %p149 = pnand %p147, %p148
    %p150 = pneg %p149
    // Predicated region
    $region9: #{tpu_custom_call.1} parent=5 // pred_check
      _
    $region10: #{tpu_custom_call.1} parent=5 // pred_check_branch
      %152 = sbr.rel (%p149) target = $region12
    $region11: #{tpu_custom_call.1} parent=5 // pred_region
      %s153 = ssub.s32 %s10, 1
      // Predicated region
      $region13: #{tpu_custom_call.1} parent=11 // pred_check
        %p154 = pneg %p69
      $region14: #{tpu_custom_call.1} parent=11 // pred_check_branch
        %156 = sbr.rel (%p154) target = $region16
      $region15: #{tpu_custom_call.1} parent=11 // pred_region
        _
      $region16: #{tpu_custom_call.1} parent=11 // pred_fallthru
        _
      // Predicated region
      $region17: #{tpu_custom_call.1} parent=11 // pred_check
        %p157 = pneg %p90
      $region18: #{tpu_custom_call.1} parent=11 // pred_check_branch
        %159 = sbr.rel (%p157) target = $region20
      $region19: #{tpu_custom_call.1} parent=11 // pred_region
        _
      $region20: #{tpu_custom_call.1} parent=11 // pred_fallthru
        _
      // Predicated region
      $region21: #{tpu_custom_call.1} parent=11 // pred_check
        %p160 = pneg %p111
      $region22: #{tpu_custom_call.1} parent=11 // pred_check_branch
        %162 = sbr.rel (%p160) target = $region24
      $region23: #{tpu_custom_call.1} parent=11 // pred_region
        _
      $region24: #{tpu_custom_call.1} parent=11 // pred_fallthru
        _
    $region12: #{tpu_custom_call.1} parent=5 // pred_fallthru
      _
    %p163 = scmp.lt.s32.totalorder %s10, 4
    // Predicated region
    $region25: #{tpu_custom_call.1} parent=5 // pred_check
      %p164 = pneg %p163
    $region26: #{tpu_custom_call.1} parent=5 // pred_check_branch
      %166 = sbr.rel (%p164) target = $region28
    $region27: #{tpu_custom_call.1} parent=5 // pred_region
      // Predicated region
      $region29: #{tpu_custom_call.1} parent=27 // pred_check
        %p167 = pneg %p42
      $region30: #{tpu_custom_call.1} parent=27 // pred_check_branch
        %169 = sbr.rel (%p167) target = $region32
      $region31: #{tpu_custom_call.1} parent=27 // pred_region
        %p170 = scmp.lt.s32.totalorder %s17, 1
        %s171 = scalar_select %p170, %s17, 1
        %s172 = smul.addr %s171, 60
        %s173 = smul.addr %s172, 8
        %s174 = scalar_lea.vmem %s0, %s173
      $region32: #{tpu_custom_call.1} parent=27 // pred_fallthru
        _
    $region28: #{tpu_custom_call.1} parent=5 // pred_fallthru
      _
    %p175 = scmp.le.s32.totalorder 1, %s10
    %p176 = scmp.lt.s32.totalorder %s10, 5
    %p177 = pnand %p175, %p176
    %p178 = pneg %p177
    // Predicated region
    $region33: #{tpu_custom_call.1} parent=5 // pred_check
      _
    $region34: #{tpu_custom_call.1} parent=5 // pred_check_branch
      %180 = sbr.rel (%p177) target = $region36
    $region35: #{tpu_custom_call.1} parent=5 // pred_region
      %s181 = ssub.s32 %s10, 1
      %p182 = scmp.lt.s32.totalorder %s19, 1
      %s183 = scalar_select %p182, %s19, 1
      %s184 = smul.addr %s183, 60
      %s185 = smul.addr %s184, 8
      %s186 = scalar_lea.vmem %s0, %s185
      %p187 = pneg %p48
      %p188 = pneg %p45
      %p189 = pneg %p69
      %p190 = pneg %p66
      %p191 = pneg %p90
      %p192 = pneg %p87
      %p193 = pneg %p111
      %p194 = pneg %p108
      %p195 = pneg %p139
      %p196 = pneg %p136
      %s197 = smul.u32 8, %s20
      %p198 = scmp.lt.s32.totalorder %s19, 1
      %s199 = scalar_select %p198, %s19, 1
      %p200 = scmp.lt.s32.totalorder %s197, 15
      %s201 = scalar_select %p200, %s197, 15
      %s202 = smul.addr %s201, 2
      %s203 = smul.addr %s199, 32
      %s204 = sadd.s32 %s202, %s203
      %s205 = smul.addr %s204, 8
      %s206 = scalar_lea.vmem %s4, %s205
      %p207 = scmp.lt.s32.totalorder %s19, 1
      %s208 = scalar_select %p207, %s19, 1
      %s209 = smul.addr %s208, 60
      %s210 = smul.addr %s209, 8
      %s211 = scalar_lea.vmem %s0, %s210
      %s212 = smul.u32 8, %s20
      %p213 = scmp.lt.s32.totalorder %s19, 1
      %s214 = scalar_select %p213, %s19, 1
      %p215 = scmp.lt.s32.totalorder %s212, 15
      %s216 = scalar_select %p215, %s212, 15
      %s217 = smul.addr %s216, 2
      %s218 = smul.addr %s214, 32
      %s219 = sadd.s32 %s217, %s218
      %s220 = smul.addr %s219, 8
      %s221 = scalar_lea.vmem %s4, %s220
      %s222 = smul.u32 8, %s20
      %v223 = vld [vmem:[%s2] sm:$0x3f]
      %s224 = smul.u32 %s20, 8
      %s225 = smul.u32 %s224, 24
      %s226 = scalar_lea.vmem %s211, %s225
      %v227 = vld [vmem:[%s226] sm:$0xff]
      %v228 = vld [vmem:[%s226 + $0x8] sm:$0xff]
      %v229 = vld [vmem:[%s226 + $0x10] sm:$0xf]
      %v230 = vld [vmem:[%s226 + $0x18] sm:$0xff]
      %v231 = vld [vmem:[%s226 + $0x20] sm:$0xff]
      %v232 = vld [vmem:[%s226 + $0x28] sm:$0xf]
      %v233 = vld [vmem:[%s226 + $0x30] sm:$0xff]
      %v234 = vld [vmem:[%s226 + $0x38] sm:$0xff]
      %v235 = vld [vmem:[%s226 + $0x40] sm:$0xf]
      %v236 = vld [vmem:[%s226 + $0x48] sm:$0xff]
      %v237 = vld [vmem:[%s226 + $0x50] sm:$0xff]
      %v238 = vld [vmem:[%s226 + $0x58] sm:$0xf]
      %v239 = vld [vmem:[%s226 + $0x60] sm:$0xff]
      %v240 = vld [vmem:[%s226 + $0x68] sm:$0xff]
      %v241 = vld [vmem:[%s226 + $0x70] sm:$0xf]
      %v242 = vld [vmem:[%s226 + $0x78] sm:$0xff]
      %v243 = vld [vmem:[%s226 + $0x80] sm:$0xff]
      %v244 = vld [vmem:[%s226 + $0x88] sm:$0xf]
      %v245 = vld [vmem:[%s226 + $0x90] sm:$0xff]
      %v246 = vld [vmem:[%s226 + $0x98] sm:$0xff]
      %v247 = vld [vmem:[%s226 + $0xa0] sm:$0xf]
      %v248 = vld [vmem:[%s226 + $0xa8] sm:$0xff]
      %v249 = vld [vmem:[%s226 + $0xb0] sm:$0xff]
      %v250 = vld [vmem:[%s226 + $0xb8] sm:$0xf]
      %v251 = vld [vmem:[%s226 + $0xc0] sm:$0xff]
      %v252 = vld [vmem:[%s226 + $0xc8] sm:$0xff]
      %v253 = vld [vmem:[%s226 + $0xd0] sm:$0xf]
      %v254 = vld [vmem:[%s226 + $0xd8] sm:$0xff]
      %v255 = vld [vmem:[%s226 + $0xe0] sm:$0xff]
      %v256 = vld [vmem:[%s226 + $0xe8] sm:$0xf]
      %v257 = vld [vmem:[%s226 + $0xf0] sm:$0xff]
      %v258 = vld [vmem:[%s226 + $0xf8] sm:$0xff]
      %v259 = vld [vmem:[%s226 + $0x100] sm:$0xf]
      %v260 = vld [vmem:[%s226 + $0x108] sm:$0xff]
      %v261 = vld [vmem:[%s226 + $0x110] sm:$0xff]
      %v262 = vld [vmem:[%s226 + $0x118] sm:$0xf]
      %v299 = vcombine.high %v227, %v227
      %v300 = vcombine.high %v228, %v228
      %v301 = vcombine.high %v230, %v230
      %v302 = vcombine.high %v231, %v231
      %v303 = vcombine.high %v233, %v233
      %v304 = vcombine.high %v234, %v234
      %v305 = vcombine.high %v236, %v236
      %v306 = vcombine.high %v237, %v237
      %v307 = vcombine.high %v239, %v239
      %v308 = vcombine.high %v240, %v240
      %v309 = vcombine.high %v242, %v242
      %v310 = vcombine.high %v243, %v243
      %v311 = vcombine.high %v245, %v245
      %v312 = vcombine.high %v246, %v246
      %v313 = vcombine.high %v248, %v248
      %v314 = vcombine.high %v249, %v249
      %v315 = vcombine.high %v251, %v251
      %v316 = vcombine.high %v252, %v252
      %v317 = vcombine.high %v254, %v254
      %v318 = vcombine.high %v255, %v255
      %v319 = vcombine.high %v257, %v257
      %v320 = vcombine.high %v258, %v258
      %v321 = vcombine.high %v260, %v260
      %v322 = vcombine.high %v261, %v261
      %v323 = vld [vmem:[%s1] sm:$0xf]
      %v324 = vcombine.low %v227, %v299
      %v325 = vcombine.low %v228, %v300
      %v326 = vcombine.low %v229, %v230
      %v327 = vcombine.low %v301, %v231
      %v328 = vcombine.low %v302, %v232
      %v329 = vcombine.low %v233, %v303
      %v330 = vcombine.low %v234, %v304
      %v331 = vcombine.low %v235, %v236
      %v332 = vcombine.low %v305, %v237
      %v333 = vcombine.low %v306, %v238
      %v334 = vcombine.low %v239, %v307
      %v335 = vcombine.low %v240, %v308
      %v336 = vcombine.low %v241, %v242
      %v337 = vcombine.low %v309, %v243
      %v338 = vcombine.low %v310, %v244
      %v339 = vcombine.low %v245, %v311
      %v340 = vcombine.low %v246, %v312
      %v341 = vcombine.low %v247, %v248
      %v342 = vcombine.low %v313, %v249
      %v343 = vcombine.low %v314, %v250
      %v344 = vcombine.low %v251, %v315
      %v345 = vcombine.low %v252, %v316
      %v346 = vcombine.low %v253, %v254
      %v347 = vcombine.low %v317, %v255
      %v348 = vcombine.low %v318, %v256
      %v349 = vcombine.low %v257, %v319
      %v350 = vcombine.low %v258, %v320
      %v351 = vcombine.low %v259, %v260
      %v352 = vcombine.low %v321, %v261
      %v353 = vcombine.low %v322, %v262
      %vm354 = vcmask 31744
      %v355 = vsel %vm354, %v324, 0
      %v357 = vsel %vm354, %v325, 0
      %v359 = vsel %vm354, %v326, 0
      %v361 = vsel %vm354, %v327, 0
      %v363 = vsel %vm354, %v328, 0
      %v365 = vsel %vm354, %v329, 0
      %v367 = vsel %vm354, %v330, 0
      %v369 = vsel %vm354, %v331, 0
      %v371 = vsel %vm354, %v332, 0
      %v373 = vsel %vm354, %v333, 0
      %v375 = vsel %vm354, %v334, 0
      %v377 = vsel %vm354, %v335, 0
      %v379 = vsel %vm354, %v336, 0
      %v381 = vsel %vm354, %v337, 0
      %v383 = vsel %vm354, %v338, 0
      %v385 = vsel %vm354, %v339, 0
      %v387 = vsel %vm354, %v340, 0
      %v389 = vsel %vm354, %v341, 0
      %v391 = vsel %vm354, %v342, 0
      %v393 = vsel %vm354, %v343, 0
      %v395 = vsel %vm354, %v344, 0
      %v397 = vsel %vm354, %v345, 0
      %v399 = vsel %vm354, %v346, 0
      %v401 = vsel %vm354, %v347, 0
      %v403 = vsel %vm354, %v348, 0
      %v405 = vsel %vm354, %v349, 0
      %v407 = vsel %vm354, %v350, 0
      %v409 = vsel %vm354, %v351, 0
      %v411 = vsel %vm354, %v352, 0
      %v413 = vsel %vm354, %v353, 0
      %vm415 = vcmask 1043456
      %v417 = vsel %vm415, %v323, 0
      %419 = vmatprep.subr.mxu0 0.0
      %420 = vmatpush1.msra.mxu0 %v417
      %421 = vmatprep.subr.mxu0 0.0
      %422 = vmatpush1.msra.mxu0 0.0
      %423 = vmatprep.subr.mxu0 0.0
      %424 = vmatpush1.msra.mxu0 0.0
      %425 = vmatprep.subr.mxu0 0.0
      %426 = vmatpush1.msra.mxu0 0.0
      %427 = vmatprep.subr.mxu0 0.0
      %428 = vmatpush1.msra.mxu0 0.0
      %429 = vmatprep.subr.mxu0 0.0
      %430 = vmatpush1.msra.mxu0 0.0
      %431 = vmatprep.subr.mxu0 0.0
      %432 = vmatpush1.msra.mxu0 0.0
      %433 = vmatprep.subr.mxu0 0.0
      %434 = vmatpush1.msra.mxu0 0.0
      %435 = vmatprep.subr.mxu0 0.0
      %436 = vmatpush1.msra.mxu0 0.0
      %437 = vmatprep.subr.mxu0 0.0
      %438 = vmatpush1.msra.mxu0 0.0
      %439 = vmatprep.subr.mxu0 0.0
      %440 = vmatpush1.msra.mxu0 0.0
      %441 = vmatprep.subr.mxu0 0.0
      %442 = vmatpush1.msra.mxu0 0.0
      %443 = vmatprep.subr.mxu0 0.0
      %444 = vmatpush1.msra.mxu0 0.0
      %445 = vmatprep.subr.mxu0 0.0
      %446 = vmatpush1.msra.mxu0 0.0
      %447 = vmatprep.subr.mxu0 0.0
      %448 = vmatpush1.msra.mxu0 0.0
      %449 = vmatprep.subr.mxu0 0.0
      %450 = vmatpush1.msra.mxu0 0.0
      %451 = vmatprep.subr.mxu0 0.0
      %452 = vmatpush1.msra.mxu0 0.0
      %453 = vmatprep.subr.mxu0 0.0
      %454 = vmatpush1.msra.mxu0 0.0
      %455 = vmatprep.subr.mxu0 0.0
      %456 = vmatpush1.msra.mxu0 0.0
      %457 = vmatprep.subr.mxu0 0.0
      %458 = vmatpush1.msra.mxu0 0.0
      %459 = vmatprep.subr.mxu0 0.0
      %460 = vmatpush1.msra.mxu0 0.0
      %461 = vmatprep.subr.mxu0 0.0
      %462 = vmatpush1.msra.mxu0 0.0
      %463 = vmatprep.subr.mxu0 0.0
      %464 = vmatpush1.msra.mxu0 0.0
      %465 = vmatprep.subr.mxu0 0.0
      %466 = vmatpush1.msra.mxu0 0.0
      %467 = vmatprep.subr.mxu0 0.0
      %468 = vmatpush1.msra.mxu0 0.0
      %469 = vmatprep.subr.mxu0 0.0
      %470 = vmatpush1.msra.mxu0 0.0
      %471 = vmatprep.subr.mxu0 0.0
      %472 = vmatpush1.msra.mxu0 0.0
      %473 = vmatprep.subr.mxu0 0.0
      %474 = vmatpush1.msra.mxu0 0.0
      %475 = vmatprep.subr.mxu0 0.0
      %476 = vmatpush1.msra.mxu0 0.0
      %477 = vmatprep.subr.mxu0 0.0
      %478 = vmatpush1.msra.mxu0 0.0
      %479 = vmatprep.subr.mxu0 0.0
      %480 = vmatpush1.msra.mxu0 0.0
      %481 = vmatprep.subr.mxu0 0.0
      %482 = vmatpush1.msra.mxu0 0.0
      %483 = vmatprep.mubr.f32.mxu0 0.0
      %484 = vmatmul.mubr.f32.gmra.mrb[0].mxu0 %v355
      %v485 = vpop.f32.mrb[0].mxu0
      %v486 = vadd.f32 0.0, %v485
      %v487 = vpop.f32.mrb[0].mxu0
      %488 = vmatprep.mubr.f32.mxu0 0.0
      %489 = vmatmul.mubr.f32.gmra.mrb[0].mxu0 %v357
      %v490 = vpop.f32.mrb[0].mxu0
      %v491 = vadd.f32 0.0, %v490
      %v492 = vpop.f32.mrb[0].mxu0
      %493 = vmatprep.mubr.f32.mxu0 0.0
      %494 = vmatmul.mubr.f32.gmra.mrb[0].mxu0 %v359
      %v495 = vpop.f32.mrb[0].mxu0
      %v496 = vadd.f32 0.0, %v495
      %v497 = vpop.f32.mrb[0].mxu0
      %498 = vmatprep.mubr.f32.mxu0 0.0
      %499 = vmatmul.mubr.f32.gmra.mrb[0].mxu0 %v361
      %v500 = vpop.f32.mrb[0].mxu0
      %v501 = vadd.f32 0.0, %v500
      %v502 = vpop.f32.mrb[0].mxu0
      %503 = vmatprep.mubr.f32.mxu0 0.0
      %504 = vmatmul.mubr.f32.gmra.mrb[0].mxu0 %v363
      %v505 = vpop.f32.mrb[0].mxu0
      %v506 = vadd.f32 0.0, %v505
      %v507 = vpop.f32.mrb[0].mxu0
      %508 = vmatprep.mubr.f32.mxu0 0.0
      %509 = vmatmul.mubr.f32.gmra.mrb[0].mxu0 %v365
      %v510 = vpop.f32.mrb[0].mxu0
      %v511 = vadd.f32 0.0, %v510
      %v512 = vpop.f32.mrb[0].mxu0
      %513 = vmatprep.mubr.f32.mxu0 0.0
      %514 = vmatmul.mubr.f32.gmra.mrb[0].mxu0 %v367
      %v515 = vpop.f32.mrb[0].mxu0
      %v516 = vadd.f32 0.0, %v515
      %v517 = vpop.f32.mrb[0].mxu0
      %518 = vmatprep.mubr.f32.mxu0 0.0
      %519 = vmatmul.mubr.f32.gmra.mrb[0].mxu0 %v369
      %v520 = vpop.f32.mrb[0].mxu0
      %v521 = vadd.f32 0.0, %v520
      %v522 = vpop.f32.mrb[0].mxu0
      %523 = vmatprep.mubr.f32.mxu0 0.0
      %524 = vmatmul.mubr.f32.gmra.mrb[0].mxu0 %v371
      %v525 = vpop.f32.mrb[0].mxu0
      %v526 = vadd.f32 0.0, %v525
      %v527 = vpop.f32.mrb[0].mxu0
      %528 = vmatprep.mubr.f32.mxu0 0.0
      %529 = vmatmul.mubr.f32.gmra.mrb[0].mxu0 %v373
      %v530 = vpop.f32.mrb[0].mxu0
      %v531 = vadd.f32 0.0, %v530
      %v532 = vpop.f32.mrb[0].mxu0
      %533 = vmatprep.mubr.f32.mxu0 0.0
      %534 = vmatmul.mubr.f32.gmra.mrb[0].mxu0 %v375
      %v535 = vpop.f32.mrb[0].mxu0
      %v536 = vadd.f32 0.0, %v535
      %v537 = vpop.f32.mrb[0].mxu0
      %538 = vmatprep.mubr.f32.mxu0 0.0
      %539 = vmatmul.mubr.f32.gmra.mrb[0].mxu0 %v377
      %v540 = vpop.f32.mrb[0].mxu0
      %v541 = vadd.f32 0.0, %v540
      %v542 = vpop.f32.mrb[0].mxu0
      %543 = vmatprep.mubr.f32.mxu0 0.0
      %544 = vmatmul.mubr.f32.gmra.mrb[0].mxu0 %v379
      %v545 = vpop.f32.mrb[0].mxu0
      %v546 = vadd.f32 0.0, %v545
      %v547 = vpop.f32.mrb[0].mxu0
      %548 = vmatprep.mubr.f32.mxu0 0.0
      %549 = vmatmul.mubr.f32.gmra.mrb[0].mxu0 %v381
      %v550 = vpop.f32.mrb[0].mxu0
      %v551 = vadd.f32 0.0, %v550
      %v552 = vpop.f32.mrb[0].mxu0
      %553 = vmatprep.mubr.f32.mxu0 0.0
      %554 = vmatmul.mubr.f32.gmra.mrb[0].mxu0 %v383
      %v555 = vpop.f32.mrb[0].mxu0
      %v556 = vadd.f32 0.0, %v555
      %v557 = vpop.f32.mrb[0].mxu0
      %558 = vmatprep.mubr.f32.mxu0 0.0
      %559 = vmatmul.mubr.f32.gmra.mrb[0].mxu0 %v385
      %v560 = vpop.f32.mrb[0].mxu0
      %v561 = vadd.f32 0.0, %v560
      %v562 = vpop.f32.mrb[0].mxu0
      %563 = vmatprep.mubr.f32.mxu0 0.0
      %564 = vmatmul.mubr.f32.gmra.mrb[0].mxu0 %v387
      %v565 = vpop.f32.mrb[0].mxu0
      %v566 = vadd.f32 0.0, %v565
      %v567 = vpop.f32.mrb[0].mxu0
      %568 = vmatprep.mubr.f32.mxu0 0.0
      %569 = vmatmul.mubr.f32.gmra.mrb[0].mxu0 %v389
      %v570 = vpop.f32.mrb[0].mxu0
      %v571 = vadd.f32 0.0, %v570
      %v572 = vpop.f32.mrb[0].mxu0
      %573 = vmatprep.mubr.f32.mxu0 0.0
      %574 = vmatmul.mubr.f32.gmra.mrb[0].mxu0 %v391
      %v575 = vpop.f32.mrb[0].mxu0
      %v576 = vadd.f32 0.0, %v575
      %v577 = vpop.f32.mrb[0].mxu0
      %578 = vmatprep.mubr.f32.mxu0 0.0
      %579 = vmatmul.mubr.f32.gmra.mrb[0].mxu0 %v393
      %v580 = vpop.f32.mrb[0].mxu0
      %v581 = vadd.f32 0.0, %v580
      %v582 = vpop.f32.mrb[0].mxu0
      %583 = vmatprep.mubr.f32.mxu0 0.0
      %584 = vmatmul.mubr.f32.gmra.mrb[0].mxu0 %v395
      %v585 = vpop.f32.mrb[0].mxu0
      %v586 = vadd.f32 0.0, %v585
      %v587 = vpop.f32.mrb[0].mxu0
      %588 = vmatprep.mubr.f32.mxu0 0.0
      %589 = vmatmul.mubr.f32.gmra.mrb[0].mxu0 %v397
      %v590 = vpop.f32.mrb[0].mxu0
      %v591 = vadd.f32 0.0, %v590
      %v592 = vpop.f32.mrb[0].mxu0
      %593 = vmatprep.mubr.f32.mxu0 0.0
      %594 = vmatmul.mubr.f32.gmra.mrb[0].mxu0 %v399
      %v595 = vpop.f32.mrb[0].mxu0
      %v596 = vadd.f32 0.0, %v595
      %v597 = vpop.f32.mrb[0].mxu0
      %598 = vmatprep.mubr.f32.mxu0 0.0
      %599 = vmatmul.mubr.f32.gmra.mrb[0].mxu0 %v401
      %v600 = vpop.f32.mrb[0].mxu0
      %v601 = vadd.f32 0.0, %v600
      %v602 = vpop.f32.mrb[0].mxu0
      %603 = vmatprep.mubr.f32.mxu0 0.0
      %604 = vmatmul.mubr.f32.gmra.mrb[0].mxu0 %v403
      %v605 = vpop.f32.mrb[0].mxu0
      %v606 = vadd.f32 0.0, %v605
      %v607 = vpop.f32.mrb[0].mxu0
      %608 = vmatprep.mubr.f32.mxu0 0.0
      %609 = vmatmul.mubr.f32.gmra.mrb[0].mxu0 %v405
      %v610 = vpop.f32.mrb[0].mxu0
      %v611 = vadd.f32 0.0, %v610
      %v612 = vpop.f32.mrb[0].mxu0
      %613 = vmatprep.mubr.f32.mxu0 0.0
      %614 = vmatmul.mubr.f32.gmra.mrb[0].mxu0 %v407
      %v615 = vpop.f32.mrb[0].mxu0
      %v616 = vadd.f32 0.0, %v615
      %v617 = vpop.f32.mrb[0].mxu0
      %618 = vmatprep.mubr.f32.mxu0 0.0
      %619 = vmatmul.mubr.f32.gmra.mrb[0].mxu0 %v409
      %v620 = vpop.f32.mrb[0].mxu0
      %v621 = vadd.f32 0.0, %v620
      %v622 = vpop.f32.mrb[0].mxu0
      %623 = vmatprep.mubr.f32.mxu0 0.0
      %624 = vmatmul.mubr.f32.gmra.mrb[0].mxu0 %v411
      %v625 = vpop.f32.mrb[0].mxu0
      %v626 = vadd.f32 0.0, %v625
      %v627 = vpop.f32.mrb[0].mxu0
      %628 = vmatprep.mubr.f32.mxu0 0.0
      %629 = vmatmul.mubr.f32.gmra.mrb[0].mxu0 %v413
      %v630 = vpop.f32.mrb[0].mxu0
      %v631 = vadd.f32 0.0, %v630
      %v632 = vpop.f32.mrb[0].mxu0
      %633 = vdwg.mxu0
      %v634 = vlaneseq
      %v635 = vshrl.u32 %v634, 7
      %v636 = vsub.s32 0, %v635
      %v637 = vrot.slane %v223, %v636
      %v638 = vmul.f32 %v486, %v637
      %v639 = vmul.f32 %v491, %v637
      %v640 = vmul.f32 %v496, %v637
      %v641 = vmul.f32 %v501, %v637
      %v642 = vmul.f32 %v506, %v637
      %v643 = vmul.f32 %v511, %v637
      %v644 = vmul.f32 %v516, %v637
      %v645 = vmul.f32 %v521, %v637
      %v646 = vmul.f32 %v526, %v637
      %v647 = vmul.f32 %v531, %v637
      %v648 = vmul.f32 %v536, %v637
      %v649 = vmul.f32 %v541, %v637
      %v650 = vmul.f32 %v546, %v637
      %v651 = vmul.f32 %v551, %v637
      %v652 = vmul.f32 %v556, %v637
      %v653 = vmul.f32 %v561, %v637
      %v654 = vmul.f32 %v566, %v637
      %v655 = vmul.f32 %v571, %v637
      %v656 = vmul.f32 %v576, %v637
      %v657 = vmul.f32 %v581, %v637
      %v658 = vmul.f32 %v586, %v637
      %v659 = vmul.f32 %v591, %v637
      %v660 = vmul.f32 %v596, %v637
      %v661 = vmul.f32 %v601, %v637
      %v662 = vmul.f32 %v606, %v637
      %v663 = vmul.f32 %v611, %v637
      %v664 = vmul.f32 %v616, %v637
      %v665 = vmul.f32 %v621, %v637
      %v666 = vmul.f32 %v626, %v637
      %v667 = vmul.f32 %v631, %v637
      %v668 = vlaneseq
      %v669 = vshrl.u32 %v668, 7
      %v670 = vsub.s32 1, %v669
      %v671 = vrot.slane %v223, %v670
      %v672 = vadd.f32 %v638, %v671
      %v673 = vadd.f32 %v639, %v671
      %v674 = vadd.f32 %v640, %v671
      %v675 = vadd.f32 %v641, %v671
      %v676 = vadd.f32 %v642, %v671
      %v677 = vadd.f32 %v643, %v671
      %v678 = vadd.f32 %v644, %v671
      %v679 = vadd.f32 %v645, %v671
      %v680 = vadd.f32 %v646, %v671
      %v681 = vadd.f32 %v647, %v671
      %v682 = vadd.f32 %v648, %v671
      %v683 = vadd.f32 %v649, %v671
      %v684 = vadd.f32 %v650, %v671
      %v685 = vadd.f32 %v651, %v671
      %v686 = vadd.f32 %v652, %v671
      %v687 = vadd.f32 %v653, %v671
      %v688 = vadd.f32 %v654, %v671
      %v689 = vadd.f32 %v655, %v671
      %v690 = vadd.f32 %v656, %v671
      %v691 = vadd.f32 %v657, %v671
      %v692 = vadd.f32 %v658, %v671
      %v693 = vadd.f32 %v659, %v671
      %v694 = vadd.f32 %v660, %v671
      %v695 = vadd.f32 %v661, %v671
      %v696 = vadd.f32 %v662, %v671
      %v697 = vadd.f32 %v663, %v671
      %v698 = vadd.f32 %v664, %v671
      %v699 = vadd.f32 %v665, %v671
      %v700 = vadd.f32 %v666, %v671
      %v701 = vadd.f32 %v667, %v671
      %v702 = vxor.u32 %v672, 2147483648
      %v703 = vxor.u32 %v673, 2147483648
      %v704 = vxor.u32 %v674, 2147483648
      %v705 = vxor.u32 %v675, 2147483648
      %v706 = vxor.u32 %v676, 2147483648
      %v707 = vxor.u32 %v677, 2147483648
      %v708 = vxor.u32 %v678, 2147483648
      %v709 = vxor.u32 %v679, 2147483648
      %v710 = vxor.u32 %v680, 2147483648
      %v711 = vxor.u32 %v681, 2147483648
      %v712 = vxor.u32 %v682, 2147483648
      %v713 = vxor.u32 %v683, 2147483648
      %v714 = vxor.u32 %v684, 2147483648
      %v715 = vxor.u32 %v685, 2147483648
      %v716 = vxor.u32 %v686, 2147483648
      %v717 = vxor.u32 %v687, 2147483648
      %v718 = vxor.u32 %v688, 2147483648
      %v719 = vxor.u32 %v689, 2147483648
      %v720 = vxor.u32 %v690, 2147483648
      %v721 = vxor.u32 %v691, 2147483648
      %v722 = vxor.u32 %v692, 2147483648
      %v723 = vxor.u32 %v693, 2147483648
      %v724 = vxor.u32 %v694, 2147483648
      %v725 = vxor.u32 %v695, 2147483648
      %v726 = vxor.u32 %v696, 2147483648
      %v727 = vxor.u32 %v697, 2147483648
      %v728 = vxor.u32 %v698, 2147483648
      %v729 = vxor.u32 %v699, 2147483648
      %v730 = vxor.u32 %v700, 2147483648
      %v731 = vxor.u32 %v701, 2147483648
      %v732 = vmul.f32 %v702, 1.442695
      %v733 = vpow.pop %v732
      %v734 = vmul.f32 %v703, 1.442695
      %v735 = vpow.pop %v734
      %v736 = vmul.f32 %v704, 1.442695
      %v737 = vpow.pop %v736
      %v738 = vmul.f32 %v705, 1.442695
      %v739 = vpow.pop %v738
      %v740 = vmul.f32 %v706, 1.442695
      %v741 = vpow.pop %v740
      %v742 = vmul.f32 %v707, 1.442695
      %v743 = vpow.pop %v742
      %v744 = vmul.f32 %v708, 1.442695
      %v745 = vpow.pop %v744
      %v746 = vmul.f32 %v709, 1.442695
      %v747 = vpow.pop %v746
      %v748 = vmul.f32 %v710, 1.442695
      %v749 = vpow.pop %v748
      %v750 = vmul.f32 %v711, 1.442695
      %v751 = vpow.pop %v750
      %v752 = vmul.f32 %v712, 1.442695
      %v753 = vpow.pop %v752
      %v754 = vmul.f32 %v713, 1.442695
      %v755 = vpow.pop %v754
      %v756 = vmul.f32 %v714, 1.442695
      %v757 = vpow.pop %v756
      %v758 = vmul.f32 %v715, 1.442695
      %v759 = vpow.pop %v758
      %v760 = vmul.f32 %v716, 1.442695
      %v761 = vpow.pop %v760
      %v762 = vmul.f32 %v717, 1.442695
      %v763 = vpow.pop %v762
      %v764 = vmul.f32 %v718, 1.442695
      %v765 = vpow.pop %v764
      %v766 = vmul.f32 %v719, 1.442695
      %v767 = vpow.pop %v766
      %v768 = vmul.f32 %v720, 1.442695
      %v769 = vpow.pop %v768
      %v770 = vmul.f32 %v721, 1.442695
      %v771 = vpow.pop %v770
      %v772 = vmul.f32 %v722, 1.442695
      %v773 = vpow.pop %v772
      %v774 = vmul.f32 %v723, 1.442695
      %v775 = vpow.pop %v774
      %v776 = vmul.f32 %v724, 1.442695
      %v777 = vpow.pop %v776
      %v778 = vmul.f32 %v725, 1.442695
      %v779 = vpow.pop %v778
      %v780 = vmul.f32 %v726, 1.442695
      %v781 = vpow.pop %v780
      %v782 = vmul.f32 %v727, 1.442695
      %v783 = vpow.pop %v782
      %v784 = vmul.f32 %v728, 1.442695
      %v785 = vpow.pop %v784
      %v786 = vmul.f32 %v729, 1.442695
      %v787 = vpow.pop %v786
      %v788 = vmul.f32 %v730, 1.442695
      %v789 = vpow.pop %v788
      %v790 = vmul.f32 %v731, 1.442695
      %v791 = vpow.pop %v790
      %v792 = vadd.f32 %v733, 1.0
      %v793 = vadd.f32 %v735, 1.0
      %v794 = vadd.f32 %v737, 1.0
      %v795 = vadd.f32 %v739, 1.0
      %v796 = vadd.f32 %v741, 1.0
      %v797 = vadd.f32 %v743, 1.0
      %v798 = vadd.f32 %v745, 1.0
      %v799 = vadd.f32 %v747, 1.0
      %v800 = vadd.f32 %v749, 1.0
      %v801 = vadd.f32 %v751, 1.0
      %v802 = vadd.f32 %v753, 1.0
      %v803 = vadd.f32 %v755, 1.0
      %v804 = vadd.f32 %v757, 1.0
      %v805 = vadd.f32 %v759, 1.0
      %v806 = vadd.f32 %v761, 1.0
      %v807 = vadd.f32 %v763, 1.0
      %v808 = vadd.f32 %v765, 1.0
      %v809 = vadd.f32 %v767, 1.0
      %v810 = vadd.f32 %v769, 1.0
      %v811 = vadd.f32 %v771, 1.0
      %v812 = vadd.f32 %v773, 1.0
      %v813 = vadd.f32 %v775, 1.0
      %v814 = vadd.f32 %v777, 1.0
      %v815 = vadd.f32 %v779, 1.0
      %v816 = vadd.f32 %v781, 1.0
      %v817 = vadd.f32 %v783, 1.0
      %v818 = vadd.f32 %v785, 1.0
      %v819 = vadd.f32 %v787, 1.0
      %v820 = vadd.f32 %v789, 1.0
      %v821 = vadd.f32 %v791, 1.0
      %v822 = vrcp.pop %v792
      %v823 = vmul.f32 1.0, %v822
      %v824 = vrcp.pop %v793
      %v825 = vmul.f32 1.0, %v824
      %v826 = vrcp.pop %v794
      %v827 = vmul.f32 1.0, %v826
      %v828 = vrcp.pop %v795
      %v829 = vmul.f32 1.0, %v828
      %v830 = vrcp.pop %v796
      %v831 = vmul.f32 1.0, %v830
      %v832 = vrcp.pop %v797
      %v833 = vmul.f32 1.0, %v832
      %v834 = vrcp.pop %v798
      %v835 = vmul.f32 1.0, %v834
      %v836 = vrcp.pop %v799
      %v837 = vmul.f32 1.0, %v836
      %v838 = vrcp.pop %v800
      %v839 = vmul.f32 1.0, %v838
      %v840 = vrcp.pop %v801
      %v841 = vmul.f32 1.0, %v840
      %v842 = vrcp.pop %v802
      %v843 = vmul.f32 1.0, %v842
      %v844 = vrcp.pop %v803
      %v845 = vmul.f32 1.0, %v844
      %v846 = vrcp.pop %v804
      %v847 = vmul.f32 1.0, %v846
      %v848 = vrcp.pop %v805
      %v849 = vmul.f32 1.0, %v848
      %v850 = vrcp.pop %v806
      %v851 = vmul.f32 1.0, %v850
      %v852 = vrcp.pop %v807
      %v853 = vmul.f32 1.0, %v852
      %v854 = vrcp.pop %v808
      %v855 = vmul.f32 1.0, %v854
      %v856 = vrcp.pop %v809
      %v857 = vmul.f32 1.0, %v856
      %v858 = vrcp.pop %v810
      %v859 = vmul.f32 1.0, %v858
      %v860 = vrcp.pop %v811
      %v861 = vmul.f32 1.0, %v860
      %v862 = vrcp.pop %v812
      %v863 = vmul.f32 1.0, %v862
      %v864 = vrcp.pop %v813
      %v865 = vmul.f32 1.0, %v864
      %v866 = vrcp.pop %v814
      %v867 = vmul.f32 1.0, %v866
      %v868 = vrcp.pop %v815
      %v869 = vmul.f32 1.0, %v868
      %v870 = vrcp.pop %v816
      %v871 = vmul.f32 1.0, %v870
      %v872 = vrcp.pop %v817
      %v873 = vmul.f32 1.0, %v872
      %v874 = vrcp.pop %v818
      %v875 = vmul.f32 1.0, %v874
      %v876 = vrcp.pop %v819
      %v877 = vmul.f32 1.0, %v876
      %v878 = vrcp.pop %v820
      %v879 = vmul.f32 1.0, %v878
      %v880 = vrcp.pop %v821
      %v881 = vmul.f32 1.0, %v880
      %v882 = vmul.f32 %v672, %v823
      %v883 = vmul.f32 %v673, %v825
      %v884 = vmul.f32 %v674, %v827
      %v885 = vmul.f32 %v675, %v829
      %v886 = vmul.f32 %v676, %v831
      %v887 = vmul.f32 %v677, %v833
      %v888 = vmul.f32 %v678, %v835
      %v889 = vmul.f32 %v679, %v837
      %v890 = vmul.f32 %v680, %v839
      %v891 = vmul.f32 %v681, %v841
      %v892 = vmul.f32 %v682, %v843
      %v893 = vmul.f32 %v683, %v845
      %v894 = vmul.f32 %v684, %v847
      %v895 = vmul.f32 %v685, %v849
      %v896 = vmul.f32 %v686, %v851
      %v897 = vmul.f32 %v687, %v853
      %v898 = vmul.f32 %v688, %v855
      %v899 = vmul.f32 %v689, %v857
      %v900 = vmul.f32 %v690, %v859
      %v901 = vmul.f32 %v691, %v861
      %v902 = vmul.f32 %v692, %v863
      %v903 = vmul.f32 %v693, %v865
      %v904 = vmul.f32 %v694, %v867
      %v905 = vmul.f32 %v695, %v869
      %v906 = vmul.f32 %v696, %v871
      %v907 = vmul.f32 %v697, %v873
      %v908 = vmul.f32 %v698, %v875
      %v909 = vmul.f32 %v699, %v877
      %v910 = vmul.f32 %v700, %v879
      %v911 = vmul.f32 %v701, %v881
      %v912 = vlaneseq
      %v913 = vshrl.u32 %v912, 7
      %v914 = vsub.s32 2, %v913
      %v915 = vrot.slane %v223, %v914
      %v916 = vmul.f32 %v882, %v915
      %v917 = vmul.f32 %v883, %v915
      %v918 = vmul.f32 %v884, %v915
      %v919 = vmul.f32 %v885, %v915
      %v920 = vmul.f32 %v886, %v915
      %v921 = vmul.f32 %v887, %v915
      %v922 = vmul.f32 %v888, %v915
      %v923 = vmul.f32 %v889, %v915
      %v924 = vmul.f32 %v890, %v915
      %v925 = vmul.f32 %v891, %v915
      %v926 = vmul.f32 %v892, %v915
      %v927 = vmul.f32 %v893, %v915
      %v928 = vmul.f32 %v894, %v915
      %v929 = vmul.f32 %v895, %v915
      %v930 = vmul.f32 %v896, %v915
      %v931 = vmul.f32 %v897, %v915
      %v932 = vmul.f32 %v898, %v915
      %v933 = vmul.f32 %v899, %v915
      %v934 = vmul.f32 %v900, %v915
      %v935 = vmul.f32 %v901, %v915
      %v936 = vmul.f32 %v902, %v915
      %v937 = vmul.f32 %v903, %v915
      %v938 = vmul.f32 %v904, %v915
      %v939 = vmul.f32 %v905, %v915
      %v940 = vmul.f32 %v906, %v915
      %v941 = vmul.f32 %v907, %v915
      %v942 = vmul.f32 %v908, %v915
      %v943 = vmul.f32 %v909, %v915
      %v944 = vmul.f32 %v910, %v915
      %v945 = vmul.f32 %v911, %v915
      %v946 = vlaneseq
      %v947 = vshrl.u32 %v946, 7
      %v948 = vsub.s32 3, %v947
      %v949 = vrot.slane %v223, %v948
      %v950 = vadd.f32 %v916, %v949
      %v951 = vadd.f32 %v917, %v949
      %v952 = vadd.f32 %v918, %v949
      %v953 = vadd.f32 %v919, %v949
      %v954 = vadd.f32 %v920, %v949
      %v955 = vadd.f32 %v921, %v949
      %v956 = vadd.f32 %v922, %v949
      %v957 = vadd.f32 %v923, %v949
      %v958 = vadd.f32 %v924, %v949
      %v959 = vadd.f32 %v925, %v949
      %v960 = vadd.f32 %v926, %v949
      %v961 = vadd.f32 %v927, %v949
      %v962 = vadd.f32 %v928, %v949
      %v963 = vadd.f32 %v929, %v949
      %v964 = vadd.f32 %v930, %v949
      %v965 = vadd.f32 %v931, %v949
      %v966 = vadd.f32 %v932, %v949
      %v967 = vadd.f32 %v933, %v949
      %v968 = vadd.f32 %v934, %v949
      %v969 = vadd.f32 %v935, %v949
      %v970 = vadd.f32 %v936, %v949
      %v971 = vadd.f32 %v937, %v949
      %v972 = vadd.f32 %v938, %v949
      %v973 = vadd.f32 %v939, %v949
      %v974 = vadd.f32 %v940, %v949
      %v975 = vadd.f32 %v941, %v949
      %v976 = vadd.f32 %v942, %v949
      %v977 = vadd.f32 %v943, %v949
      %v978 = vadd.f32 %v944, %v949
      %v979 = vadd.f32 %v945, %v949
      %v1010 = vcombine.high %v950, %v950
      %v1011 = vcombine.high %v951, %v951
      %v1012 = vcombine.high %v952, %v952
      %v1013 = vcombine.high %v953, %v953
      %v1014 = vcombine.high %v954, %v954
      %v1015 = vcombine.high %v955, %v955
      %v1016 = vcombine.high %v956, %v956
      %v1017 = vcombine.high %v957, %v957
      %v1018 = vcombine.high %v958, %v958
      %v1019 = vcombine.high %v959, %v959
      %v1020 = vcombine.high %v960, %v960
      %v1021 = vcombine.high %v961, %v961
      %v1022 = vcombine.high %v962, %v962
      %v1023 = vcombine.high %v963, %v963
      %v1024 = vcombine.high %v964, %v964
      %v1025 = vcombine.high %v965, %v965
      %v1026 = vcombine.high %v966, %v966
      %v1027 = vcombine.high %v967, %v967
      %v1028 = vcombine.high %v968, %v968
      %v1029 = vcombine.high %v969, %v969
      %v1030 = vcombine.high %v970, %v970
      %v1031 = vcombine.high %v971, %v971
      %v1032 = vcombine.high %v972, %v972
      %v1033 = vcombine.high %v973, %v973
      %v1034 = vcombine.high %v974, %v974
      %v1035 = vcombine.high %v975, %v975
      %v1036 = vcombine.high %v976, %v976
      %v1037 = vcombine.high %v977, %v977
      %v1038 = vcombine.high %v978, %v978
      %v1039 = vcombine.high %v979, %v979
      %s1046 = ssub.s32 %s224, 2
      %v1047 = vstv %s1046
      %v1048 = vadd.s32 %v1047, 1
      %v1049 = vadd.s32 %v1047, 2
      %v1050 = vadd.s32 %v1047, 3
      %v1051 = vadd.s32 %v1047, 4
      %v1052 = vadd.s32 %v1047, 5
      %v1053 = vadd.s32 %v1047, 6
      %v1054 = vadd.s32 %v1047, 7
      %v1055 = vadd.s32 %v1047, 8
      %v1056 = vadd.s32 %v1047, 9
      %v1057 = vadd.s32 %v1047, 10
      %v1058 = vadd.s32 %v1047, 11
      %v1059 = vlaneseq
      %v1060 = vshrl.u32 %v1059, 7
      %v1061 = vadd.s32 %v1060, 8
      %v1062 = vadd.s32 %v1060, 16
      %v1063 = vadd.s32 %v1060, 4294967294
      %v1064 = vadd.s32 %v1061, 4294967294
      %v1065 = vadd.s32 %v1062, 4294967294
      %vm1066 = vcmp.ge.s32.totalorder %v1047, 0
      %vm1067 = vcmp.ge.s32.totalorder %v1048, 0
      %vm1068 = vcmp.ge.s32.totalorder %v1049, 0
      %vm1069 = vcmp.ge.s32.totalorder %v1050, 0
      %vm1070 = vcmp.ge.s32.totalorder %v1051, 0
      %vm1071 = vcmp.ge.s32.totalorder %v1052, 0
      %vm1072 = vcmp.ge.s32.totalorder %v1053, 0
      %vm1073 = vcmp.ge.s32.totalorder %v1054, 0
      %vm1074 = vcmp.ge.s32.totalorder %v1055, 0
      %vm1075 = vcmp.ge.s32.totalorder %v1056, 0
      %vm1076 = vcmp.ge.s32.totalorder %v1057, 0
      %vm1077 = vcmp.ge.s32.totalorder %v1058, 0
      %vm1078 = vcmp.lt.s32.totalorder %v1047, 16
      %vm1079 = vcmp.lt.s32.totalorder %v1048, 16
      %vm1080 = vcmp.lt.s32.totalorder %v1049, 16
      %vm1081 = vcmp.lt.s32.totalorder %v1050, 16
      %vm1082 = vcmp.lt.s32.totalorder %v1051, 16
      %vm1083 = vcmp.lt.s32.totalorder %v1052, 16
      %vm1084 = vcmp.lt.s32.totalorder %v1053, 16
      %vm1085 = vcmp.lt.s32.totalorder %v1054, 16
      %vm1086 = vcmp.lt.s32.totalorder %v1055, 16
      %vm1087 = vcmp.lt.s32.totalorder %v1056, 16
      %vm1088 = vcmp.lt.s32.totalorder %v1057, 16
      %vm1089 = vcmp.lt.s32.totalorder %v1058, 16
      %vm1090 = vmand %vm1066, %vm1078
      %vm1091 = vmand %vm1067, %vm1079
      %vm1092 = vmand %vm1068, %vm1080
      %vm1093 = vmand %vm1069, %vm1081
      %vm1094 = vmand %vm1070, %vm1082
      %vm1095 = vmand %vm1071, %vm1083
      %vm1096 = vmand %vm1072, %vm1084
      %vm1097 = vmand %vm1073, %vm1085
      %vm1098 = vmand %vm1074, %vm1086
      %vm1099 = vmand %vm1075, %vm1087
      %vm1100 = vmand %vm1076, %vm1088
      %vm1101 = vmand %vm1077, %vm1089
      %vm1102 = vcmp.ge.s32.totalorder %v1063, 0
      %vm1103 = vcmp.ge.s32.totalorder %v1064, 0
      %vm1104 = vcmp.ge.s32.totalorder %v1065, 0
      %vm1105 = vmand %vm1090, %vm1102
      %vm1106 = vmand %vm1090, %vm1103
      %vm1107 = vmand %vm1090, %vm1104
      %vm1108 = vmand %vm1091, %vm1102
      %vm1109 = vmand %vm1091, %vm1103
      %vm1110 = vmand %vm1091, %vm1104
      %vm1111 = vmand %vm1092, %vm1102
      %vm1112 = vmand %vm1092, %vm1103
      %vm1113 = vmand %vm1092, %vm1104
      %vm1114 = vmand %vm1093, %vm1102
      %vm1115 = vmand %vm1093, %vm1103
      %vm1116 = vmand %vm1093, %vm1104
      %vm1117 = vmand %vm1094, %vm1102
      %vm1118 = vmand %vm1094, %vm1103
      %vm1119 = vmand %vm1094, %vm1104
      %vm1120 = vmand %vm1095, %vm1102
      %vm1121 = vmand %vm1095, %vm1103
      %vm1122 = vmand %vm1095, %vm1104
      %vm1123 = vmand %vm1096, %vm1102
      %vm1124 = vmand %vm1096, %vm1103
      %vm1125 = vmand %vm1096, %vm1104
      %vm1126 = vmand %vm1097, %vm1102
      %vm1127 = vmand %vm1097, %vm1103
      %vm1128 = vmand %vm1097, %vm1104
      %vm1129 = vmand %vm1098, %vm1102
      %vm1130 = vmand %vm1098, %vm1103
      %vm1131 = vmand %vm1098, %vm1104
      %vm1132 = vmand %vm1099, %vm1102
      %vm1133 = vmand %vm1099, %vm1103
      %vm1134 = vmand %vm1099, %vm1104
      %vm1135 = vmand %vm1100, %vm1102
      %vm1136 = vmand %vm1100, %vm1103
      %vm1137 = vmand %vm1100, %vm1104
      %vm1138 = vmand %vm1101, %vm1102
      %vm1139 = vmand %vm1101, %vm1103
      %vm1140 = vmand %vm1101, %vm1104
      %vm1141 = vcmp.lt.s32.totalorder %v1063, 16
      %vm1142 = vcmp.lt.s32.totalorder %v1064, 16
      %vm1143 = vcmp.lt.s32.totalorder %v1065, 16
      %vm1144 = vmand %vm1105, %vm1141
      %vm1145 = vmand %vm1106, %vm1142
      %vm1146 = vmand %vm1107, %vm1143
      %vm1147 = vmand %vm1108, %vm1141
      %vm1148 = vmand %vm1109, %vm1142
      %vm1149 = vmand %vm1110, %vm1143
      %vm1150 = vmand %vm1111, %vm1141
      %vm1151 = vmand %vm1112, %vm1142
      %vm1152 = vmand %vm1113, %vm1143
      %vm1153 = vmand %vm1114, %vm1141
      %vm1154 = vmand %vm1115, %vm1142
      %vm1155 = vmand %vm1116, %vm1143
      %vm1156 = vmand %vm1117, %vm1141
      %vm1157 = vmand %vm1118, %vm1142
      %vm1158 = vmand %vm1119, %vm1143
      %vm1159 = vmand %vm1120, %vm1141
      %vm1160 = vmand %vm1121, %vm1142
      %vm1161 = vmand %vm1122, %vm1143
      %vm1162 = vmand %vm1123, %vm1141
      %vm1163 = vmand %vm1124, %vm1142
      %vm1164 = vmand %vm1125, %vm1143
      %vm1165 = vmand %vm1126, %vm1141
      %vm1166 = vmand %vm1127, %vm1142
      %vm1167 = vmand %vm1128, %vm1143
      %vm1168 = vmand %vm1129, %vm1141
      %vm1169 = vmand %vm1130, %vm1142
      %vm1170 = vmand %vm1131, %vm1143
      %vm1171 = vmand %vm1132, %vm1141
      %vm1172 = vmand %vm1133, %vm1142
      %vm1173 = vmand %vm1134, %vm1143
      %vm1174 = vmand %vm1135, %vm1141
      %vm1175 = vmand %vm1136, %vm1142
      %vm1176 = vmand %vm1137, %vm1143
      %vm1177 = vmand %vm1138, %vm1141
      %vm1178 = vmand %vm1139, %vm1142
      %vm1179 = vmand %vm1140, %vm1143
      %v1180 = vsel %vm1144, 1, 0
      %v1181 = vsel %vm1145, 1, 0
      %v1182 = vsel %vm1146, 1, 0
      %v1183 = vsel %vm1147, 1, 0
      %v1184 = vsel %vm1148, 1, 0
      %v1185 = vsel %vm1149, 1, 0
      %v1186 = vsel %vm1150, 1, 0
      %v1187 = vsel %vm1151, 1, 0
      %v1188 = vsel %vm1152, 1, 0
      %v1189 = vsel %vm1153, 1, 0
      %v1190 = vsel %vm1154, 1, 0
      %v1191 = vsel %vm1155, 1, 0
      %v1192 = vsel %vm1156, 1, 0
      %v1193 = vsel %vm1157, 1, 0
      %v1194 = vsel %vm1158, 1, 0
      %v1195 = vsel %vm1159, 1, 0
      %v1196 = vsel %vm1160, 1, 0
      %v1197 = vsel %vm1161, 1, 0
      %v1198 = vsel %vm1162, 1, 0
      %v1199 = vsel %vm1163, 1, 0
      %v1200 = vsel %vm1164, 1, 0
      %v1201 = vsel %vm1165, 1, 0
      %v1202 = vsel %vm1166, 1, 0
      %v1203 = vsel %vm1167, 1, 0
      %v1204 = vsel %vm1168, 1, 0
      %v1205 = vsel %vm1169, 1, 0
      %v1206 = vsel %vm1170, 1, 0
      %v1207 = vsel %vm1171, 1, 0
      %v1208 = vsel %vm1172, 1, 0
      %v1209 = vsel %vm1173, 1, 0
      %v1210 = vsel %vm1174, 1, 0
      %v1211 = vsel %vm1175, 1, 0
      %v1212 = vsel %vm1176, 1, 0
      %v1213 = vsel %vm1177, 1, 0
      %v1214 = vsel %vm1178, 1, 0
      %v1215 = vsel %vm1179, 1, 0
      %vm1216 = vcmp.eq.s32.totalorder %v1180, 1
      %vm1217 = vcmp.eq.s32.totalorder %v1181, 1
      %vm1218 = vcmp.eq.s32.totalorder %v1182, 1
      %vm1219 = vcmp.eq.s32.totalorder %v1183, 1
      %vm1220 = vcmp.eq.s32.totalorder %v1184, 1
      %vm1221 = vcmp.eq.s32.totalorder %v1185, 1
      %vm1222 = vcmp.eq.s32.totalorder %v1186, 1
      %vm1223 = vcmp.eq.s32.totalorder %v1187, 1
      %vm1224 = vcmp.eq.s32.totalorder %v1188, 1
      %vm1225 = vcmp.eq.s32.totalorder %v1189, 1
      %vm1226 = vcmp.eq.s32.totalorder %v1190, 1
      %vm1227 = vcmp.eq.s32.totalorder %v1191, 1
      %vm1228 = vcmp.eq.s32.totalorder %v1192, 1
      %vm1229 = vcmp.eq.s32.totalorder %v1193, 1
      %vm1230 = vcmp.eq.s32.totalorder %v1194, 1
      %vm1231 = vcmp.eq.s32.totalorder %v1195, 1
      %vm1232 = vcmp.eq.s32.totalorder %v1196, 1
      %vm1233 = vcmp.eq.s32.totalorder %v1197, 1
      %vm1234 = vcmp.eq.s32.totalorder %v1198, 1
      %vm1235 = vcmp.eq.s32.totalorder %v1199, 1
      %vm1236 = vcmp.eq.s32.totalorder %v1200, 1
      %vm1237 = vcmp.eq.s32.totalorder %v1201, 1
      %vm1238 = vcmp.eq.s32.totalorder %v1202, 1
      %vm1239 = vcmp.eq.s32.totalorder %v1203, 1
      %vm1240 = vcmp.eq.s32.totalorder %v1204, 1
      %vm1241 = vcmp.eq.s32.totalorder %v1205, 1
      %vm1242 = vcmp.eq.s32.totalorder %v1206, 1
      %vm1243 = vcmp.eq.s32.totalorder %v1207, 1
      %vm1244 = vcmp.eq.s32.totalorder %v1208, 1
      %vm1245 = vcmp.eq.s32.totalorder %v1209, 1
      %vm1246 = vcmp.eq.s32.totalorder %v1210, 1
      %vm1247 = vcmp.eq.s32.totalorder %v1211, 1
      %vm1248 = vcmp.eq.s32.totalorder %v1212, 1
      %vm1249 = vcmp.eq.s32.totalorder %v1213, 1
      %vm1250 = vcmp.eq.s32.totalorder %v1214, 1
      %vm1251 = vcmp.eq.s32.totalorder %v1215, 1
      %v1252 = vcombine.low %v950, %v1010
      %v1253 = vcombine.low %v951, %v1011
      %v1254 = vcombine.low %v1012, %v953
      %v1255 = vcombine.low %v1013, %v954
      %v1256 = vcombine.low %v955, %v1015
      %v1257 = vcombine.low %v956, %v1016
      %v1258 = vcombine.low %v1017, %v958
      %v1259 = vcombine.low %v1018, %v959
      %v1260 = vcombine.low %v960, %v1020
      %v1261 = vcombine.low %v961, %v1021
      %v1262 = vcombine.low %v1022, %v963
      %v1263 = vcombine.low %v1023, %v964
      %v1264 = vcombine.low %v965, %v1025
      %v1265 = vcombine.low %v966, %v1026
      %v1266 = vcombine.low %v1027, %v968
      %v1267 = vcombine.low %v1028, %v969
      %v1268 = vcombine.low %v970, %v1030
      %v1269 = vcombine.low %v971, %v1031
      %v1270 = vcombine.low %v1032, %v973
      %v1271 = vcombine.low %v1033, %v974
      %v1272 = vcombine.low %v975, %v1035
      %v1273 = vcombine.low %v976, %v1036
      %v1274 = vcombine.low %v1037, %v978
      %v1275 = vcombine.low %v1038, %v979
      %v1300 = vsel %vm1216, %v1252, 0.0
      %v1301 = vsel %vm1217, %v1253, 0.0
      %v1302 = vsel %vm1218, %v952, 0.0
      %v1303 = vsel %vm1219, %v1254, 0.0
      %v1304 = vsel %vm1220, %v1255, 0.0
      %v1305 = vsel %vm1221, %v1014, 0.0
      %v1306 = vsel %vm1222, %v1256, 0.0
      %v1307 = vsel %vm1223, %v1257, 0.0
      %v1308 = vsel %vm1224, %v957, 0.0
      %v1309 = vsel %vm1225, %v1258, 0.0
      %v1310 = vsel %vm1226, %v1259, 0.0
      %v1311 = vsel %vm1227, %v1019, 0.0
      %v1312 = vsel %vm1228, %v1260, 0.0
      %v1313 = vsel %vm1229, %v1261, 0.0
      %v1314 = vsel %vm1230, %v962, 0.0
      %v1315 = vsel %vm1231, %v1262, 0.0
      %v1316 = vsel %vm1232, %v1263, 0.0
      %v1317 = vsel %vm1233, %v1024, 0.0
      %v1318 = vsel %vm1234, %v1264, 0.0
      %v1319 = vsel %vm1235, %v1265, 0.0
      %v1320 = vsel %vm1236, %v967, 0.0
      %v1321 = vsel %vm1237, %v1266, 0.0
      %v1322 = vsel %vm1238, %v1267, 0.0
      %v1323 = vsel %vm1239, %v1029, 0.0
      %v1324 = vsel %vm1240, %v1268, 0.0
      %v1325 = vsel %vm1241, %v1269, 0.0
      %v1326 = vsel %vm1242, %v972, 0.0
      %v1327 = vsel %vm1243, %v1270, 0.0
      %v1328 = vsel %vm1244, %v1271, 0.0
      %v1329 = vsel %vm1245, %v1034, 0.0
      %v1330 = vsel %vm1246, %v1272, 0.0
      %v1331 = vsel %vm1247, %v1273, 0.0
      %v1332 = vsel %vm1248, %v977, 0.0
      %v1333 = vsel %vm1249, %v1274, 0.0
      %v1334 = vsel %vm1250, %v1275, 0.0
      %v1335 = vsel %vm1251, %v1039, 0.0
      %1336 = vst.msk [vmem:[#allocation2] sm:$0xff] %vm354, %v1300
      %1337 = vst.msk [vmem:[#allocation2 + $0x8] sm:$0xff] %vm354, %v1301
      %vm1338 = vcmask 27648
      %1339 = vst.msk [vmem:[#allocation2 + $0x10] sm:$0xf] %vm1338, %v1302
      %1340 = vst.msk [vmem:[#allocation2 + $0x18] sm:$0xff] %vm354, %v1303
      %1341 = vst.msk [vmem:[#allocation2 + $0x20] sm:$0xff] %vm354, %v1304
      %1342 = vst.msk [vmem:[#allocation2 + $0x28] sm:$0xf] %vm1338, %v1305
      %1343 = vst.msk [vmem:[#allocation2 + $0x30] sm:$0xff] %vm354, %v1306
      %1344 = vst.msk [vmem:[#allocation2 + $0x38] sm:$0xff] %vm354, %v1307
      %1345 = vst.msk [vmem:[#allocation2 + $0x40] sm:$0xf] %vm1338, %v1308
      %1346 = vst.msk [vmem:[#allocation2 + $0x48] sm:$0xff] %vm354, %v1309
      %1347 = vst.msk [vmem:[#allocation2 + $0x50] sm:$0xff] %vm354, %v1310
      %1348 = vst.msk [vmem:[#allocation2 + $0x58] sm:$0xf] %vm1338, %v1311
      %1349 = vst.msk [vmem:[#allocation2 + $0x60] sm:$0xff] %vm354, %v1312
      %1350 = vst.msk [vmem:[#allocation2 + $0x68] sm:$0xff] %vm354, %v1313
      %1351 = vst.msk [vmem:[#allocation2 + $0x70] sm:$0xf] %vm1338, %v1314
      %1352 = vst.msk [vmem:[#allocation2 + $0x78] sm:$0xff] %vm354, %v1315
      %1353 = vst.msk [vmem:[#allocation2 + $0x80] sm:$0xff] %vm354, %v1316
      %1354 = vst.msk [vmem:[#allocation2 + $0x88] sm:$0xf] %vm1338, %v1317
      %1355 = vst.msk [vmem:[#allocation2 + $0x90] sm:$0xff] %vm354, %v1318
      %1356 = vst.msk [vmem:[#allocation2 + $0x98] sm:$0xff] %vm354, %v1319
      %1357 = vst.msk [vmem:[#allocation2 + $0xa0] sm:$0xf] %vm1338, %v1320
      %1358 = vst.msk [vmem:[#allocation2 + $0xa8] sm:$0xff] %vm354, %v1321
      %1359 = vst.msk [vmem:[#allocation2 + $0xb0] sm:$0xff] %vm354, %v1322
      %1360 = vst.msk [vmem:[#allocation2 + $0xb8] sm:$0xf] %vm1338, %v1323
      %1361 = vst.msk [vmem:[#allocation2 + $0xc0] sm:$0xff] %vm354, %v1324
      %1362 = vst.msk [vmem:[#allocation2 + $0xc8] sm:$0xff] %vm354, %v1325
      %1363 = vst.msk [vmem:[#allocation2 + $0xd0] sm:$0xf] %vm1338, %v1326
      %1364 = vst.msk [vmem:[#allocation2 + $0xd8] sm:$0xff] %vm354, %v1327
      %1365 = vst.msk [vmem:[#allocation2 + $0xe0] sm:$0xff] %vm354, %v1328
      %1366 = vst.msk [vmem:[#allocation2 + $0xe8] sm:$0xf] %vm1338, %v1329
      %1367 = vst.msk [vmem:[#allocation2 + $0xf0] sm:$0xff] %vm354, %v1330
      %1368 = vst.msk [vmem:[#allocation2 + $0xf8] sm:$0xff] %vm354, %v1331
      %1369 = vst.msk [vmem:[#allocation2 + $0x100] sm:$0xf] %vm1338, %v1332
      %1370 = vst.msk [vmem:[#allocation2 + $0x108] sm:$0xff] %vm354, %v1333
      %1371 = vst.msk [vmem:[#allocation2 + $0x110] sm:$0xff] %vm354, %v1334
      %1372 = vst.msk [vmem:[#allocation2 + $0x118] sm:$0xf] %vm1338, %v1335
      %v1373 = vld [vmem:[%s3] sm:$0xff]
      %v1374 = vld [vmem:[%s3 + $0x8] sm:$0xff]
      %v1375 = vld [vmem:[%s3 + $0x10] sm:$0xff]
      %v1376 = vld [vmem:[%s3 + $0x18] sm:$0x1]
      %1377 = vst.msk [vmem:[#allocation3] sm:$0xff] %vm354, 0.0
      %1378 = vst.msk [vmem:[#allocation3 + $0x8] sm:$0xff] %vm354, 0.0
      %1379 = vst.msk [vmem:[#allocation3 + $0x10] sm:$0xff] %vm354, 0.0
      %1380 = vst.msk [vmem:[#allocation3 + $0x18] sm:$0xff] %vm354, 0.0
      %1381 = vst.msk [vmem:[#allocation3 + $0x20] sm:$0xff] %vm354, 0.0
      %1382 = vst.msk [vmem:[#allocation3 + $0x28] sm:$0xff] %vm354, 0.0
      %1383 = vst.msk [vmem:[#allocation3 + $0x30] sm:$0xff] %vm354, 0.0
      %1384 = vst.msk [vmem:[#allocation3 + $0x38] sm:$0xff] %vm354, 0.0
      %1385 = vst.msk [vmem:[#allocation3 + $0x40] sm:$0xff] %vm354, 0.0
      %1386 = vst.msk [vmem:[#allocation3 + $0x48] sm:$0xff] %vm354, 0.0
      %1387 = vst.msk [vmem:[#allocation3 + $0x50] sm:$0xff] %vm354, 0.0
      %1388 = vst.msk [vmem:[#allocation3 + $0x58] sm:$0xff] %vm354, 0.0
      %1389 = vst.msk [vmem:[#allocation3 + $0x60] sm:$0xff] %vm354, 0.0
      %1390 = vst.msk [vmem:[#allocation3 + $0x68] sm:$0xff] %vm354, 0.0
      %1391 = vst.msk [vmem:[#allocation3 + $0x70] sm:$0xff] %vm354, 0.0
      %1392 = vst.msk [vmem:[#allocation3 + $0x78] sm:$0xff] %vm354, 0.0
      %v1393 = vld [vmem:[#allocation3] sm:$0xff]
      %v1394 = vld [vmem:[#allocation3 + $0x8] sm:$0xff]
      %v1395 = vld [vmem:[#allocation3 + $0x10] sm:$0xff]
      %v1396 = vld [vmem:[#allocation3 + $0x18] sm:$0xff]
      %v1397 = vld [vmem:[#allocation3 + $0x20] sm:$0xff]
      %v1398 = vld [vmem:[#allocation3 + $0x28] sm:$0xff]
      %v1399 = vld [vmem:[#allocation3 + $0x30] sm:$0xff]
      %v1400 = vld [vmem:[#allocation3 + $0x38] sm:$0xff]
      %v1401 = vld [vmem:[#allocation3 + $0x40] sm:$0xff]
      %v1402 = vld [vmem:[#allocation3 + $0x48] sm:$0xff]
      %v1403 = vld [vmem:[#allocation3 + $0x50] sm:$0xff]
      %v1404 = vld [vmem:[#allocation3 + $0x58] sm:$0xff]
      %v1405 = vld [vmem:[#allocation3 + $0x60] sm:$0xff]
      %v1406 = vld [vmem:[#allocation3 + $0x68] sm:$0xff]
      %v1407 = vld [vmem:[#allocation3 + $0x70] sm:$0xff]
      %v1408 = vld [vmem:[#allocation3 + $0x78] sm:$0xff]
      %v1409 = vld [vmem:[#allocation2] sm:$0xff]
      %v1410 = vld [vmem:[#allocation2 + $0x8] sm:$0xff]
      %v1411 = vld [vmem:[#allocation2 + $0x18] sm:$0xff]
      %v1412 = vld [vmem:[#allocation2 + $0x20] sm:$0xff]
      %v1413 = vld [vmem:[#allocation2 + $0x30] sm:$0xff]
      %v1414 = vld [vmem:[#allocation2 + $0x38] sm:$0xff]
      %v1415 = vld [vmem:[#allocation2 + $0x48] sm:$0xff]
      %v1416 = vld [vmem:[#allocation2 + $0x50] sm:$0xff]
      %v1417 = vld [vmem:[#allocation2 + $0x60] sm:$0xff]
      %v1418 = vld [vmem:[#allocation2 + $0x68] sm:$0xff]
      %v1419 = vld [vmem:[#allocation2 + $0x78] sm:$0xff]
      %v1420 = vld [vmem:[#allocation2 + $0x80] sm:$0xff]
      %v1421 = vld [vmem:[#allocation2 + $0x90] sm:$0xff]
      %v1422 = vld [vmem:[#allocation2 + $0x98] sm:$0xff]
      %v1423 = vld [vmem:[#allocation2 + $0xa8] sm:$0xff]
      %v1424 = vld [vmem:[#allocation2 + $0xb0] sm:$0xff]
      %v1425 = vlaneseq
      %v1426 = vshrl.u32 %v1425, 7
      %v1427 = vsub.s32 0, %v1426
      %v1428 = vrot.slane %v1373, %v1427
      %v1429 = vmul.f32 %v1409, %v1428
      %v1430 = vmul.f32 %v1410, %v1428
      %v1431 = vmul.f32 %v1411, %v1428
      %v1432 = vmul.f32 %v1412, %v1428
      %v1433 = vmul.f32 %v1413, %v1428
      %v1434 = vmul.f32 %v1414, %v1428
      %v1435 = vmul.f32 %v1415, %v1428
      %v1436 = vmul.f32 %v1416, %v1428
      %v1437 = vmul.f32 %v1417, %v1428
      %v1438 = vmul.f32 %v1418, %v1428
      %v1439 = vmul.f32 %v1419, %v1428
      %v1440 = vmul.f32 %v1420, %v1428
      %v1441 = vmul.f32 %v1421, %v1428
      %v1442 = vmul.f32 %v1422, %v1428
      %v1443 = vmul.f32 %v1423, %v1428
      %v1444 = vmul.f32 %v1424, %v1428
      %v1445 = vadd.f32 %v1393, %v1429
      %v1446 = vadd.f32 %v1394, %v1430
      %v1447 = vadd.f32 %v1395, %v1431
      %v1448 = vadd.f32 %v1396, %v1432
      %v1449 = vadd.f32 %v1397, %v1433
      %v1450 = vadd.f32 %v1398, %v1434
      %v1451 = vadd.f32 %v1399, %v1435
      %v1452 = vadd.f32 %v1400, %v1436
      %v1453 = vadd.f32 %v1401, %v1437
      %v1454 = vadd.f32 %v1402, %v1438
      %v1455 = vadd.f32 %v1403, %v1439
      %v1456 = vadd.f32 %v1404, %v1440
      %v1457 = vadd.f32 %v1405, %v1441
      %v1458 = vadd.f32 %v1406, %v1442
      %v1459 = vadd.f32 %v1407, %v1443
      %v1460 = vadd.f32 %v1408, %v1444
      %1461 = vst.msk [vmem:[#allocation3] sm:$0xff] %vm354, %v1445
      %1462 = vst.msk [vmem:[#allocation3 + $0x8] sm:$0xff] %vm354, %v1446
      %1463 = vst.msk [vmem:[#allocation3 + $0x10] sm:$0xff] %vm354, %v1447
      %1464 = vst.msk [vmem:[#allocation3 + $0x18] sm:$0xff] %vm354, %v1448
      %1465 = vst.msk [vmem:[#allocation3 + $0x20] sm:$0xff] %vm354, %v1449
      %1466 = vst.msk [vmem:[#allocation3 + $0x28] sm:$0xff] %vm354, %v1450
      %1467 = vst.msk [vmem:[#allocation3 + $0x30] sm:$0xff] %vm354, %v1451
      %1468 = vst.msk [vmem:[#allocation3 + $0x38] sm:$0xff] %vm354, %v1452
      %1469 = vst.msk [vmem:[#allocation3 + $0x40] sm:$0xff] %vm354, %v1453
      %1470 = vst.msk [vmem:[#allocation3 + $0x48] sm:$0xff] %vm354, %v1454
      %1471 = vst.msk [vmem:[#allocation3 + $0x50] sm:$0xff] %vm354, %v1455
      %1472 = vst.msk [vmem:[#allocation3 + $0x58] sm:$0xff] %vm354, %v1456
      %1473 = vst.msk [vmem:[#allocation3 + $0x60] sm:$0xff] %vm354, %v1457
      %1474 = vst.msk [vmem:[#allocation3 + $0x68] sm:$0xff] %vm354, %v1458
      %1475 = vst.msk [vmem:[#allocation3 + $0x70] sm:$0xff] %vm354, %v1459
      %1476 = vst.msk [vmem:[#allocation3 + $0x78] sm:$0xff] %vm354, %v1460
      %v1477 = vld [vmem:[#allocation3] sm:$0xff]
      %v1478 = vld [vmem:[#allocation3 + $0x8] sm:$0xff]
      %v1479 = vld [vmem:[#allocation3 + $0x10] sm:$0xff]
      %v1480 = vld [vmem:[#allocation3 + $0x18] sm:$0xff]
      %v1481 = vld [vmem:[#allocation3 + $0x20] sm:$0xff]
      %v1482 = vld [vmem:[#allocation3 + $0x28] sm:$0xff]
      %v1483 = vld [vmem:[#allocation3 + $0x30] sm:$0xff]
      %v1484 = vld [vmem:[#allocation3 + $0x38] sm:$0xff]
      %v1485 = vld [vmem:[#allocation3 + $0x40] sm:$0xff]
      %v1486 = vld [vmem:[#allocation3 + $0x48] sm:$0xff]
      %v1487 = vld [vmem:[#allocation3 + $0x50] sm:$0xff]
      %v1488 = vld [vmem:[#allocation3 + $0x58] sm:$0xff]
      %v1489 = vld [vmem:[#allocation3 + $0x60] sm:$0xff]
      %v1490 = vld [vmem:[#allocation3 + $0x68] sm:$0xff]
      %v1491 = vld [vmem:[#allocation3 + $0x70] sm:$0xff]
      %v1492 = vld [vmem:[#allocation3 + $0x78] sm:$0xff]
      %v1493 = vld [vmem:[#allocation2 + $0x1] sm:$0xff]
      %v1494 = vld [vmem:[#allocation2 + $0x9] sm:$0xff]
      %v1495 = vld [vmem:[#allocation2 + $0x19] sm:$0xff]
      %v1496 = vld [vmem:[#allocation2 + $0x21] sm:$0xff]
      %v1497 = vld [vmem:[#allocation2 + $0x31] sm:$0xff]
      %v1498 = vld [vmem:[#allocation2 + $0x39] sm:$0xff]
      %v1499 = vld [vmem:[#allocation2 + $0x49] sm:$0xff]
      %v1500 = vld [vmem:[#allocation2 + $0x51] sm:$0xff]
      %v1501 = vld [vmem:[#allocation2 + $0x61] sm:$0xff]
      %v1502 = vld [vmem:[#allocation2 + $0x69] sm:$0xff]
      %v1503 = vld [vmem:[#allocation2 + $0x79] sm:$0xff]
      %v1504 = vld [vmem:[#allocation2 + $0x81] sm:$0xff]
      %v1505 = vld [vmem:[#allocation2 + $0x91] sm:$0xff]
      %v1506 = vld [vmem:[#allocation2 + $0x99] sm:$0xff]
      %v1507 = vld [vmem:[#allocation2 + $0xa9] sm:$0xff]
      %v1508 = vld [vmem:[#allocation2 + $0xb1] sm:$0xff]
      %v1509 = vlaneseq
      %v1510 = vshrl.u32 %v1509, 7
      %v1511 = vsub.s32 1, %v1510
      %v1512 = vrot.slane %v1373, %v1511
      %v1513 = vmul.f32 %v1493, %v1512
      %v1514 = vmul.f32 %v1494, %v1512
      %v1515 = vmul.f32 %v1495, %v1512
      %v1516 = vmul.f32 %v1496, %v1512
      %v1517 = vmul.f32 %v1497, %v1512
      %v1518 = vmul.f32 %v1498, %v1512
      %v1519 = vmul.f32 %v1499, %v1512
      %v1520 = vmul.f32 %v1500, %v1512
      %v1521 = vmul.f32 %v1501, %v1512
      %v1522 = vmul.f32 %v1502, %v1512
      %v1523 = vmul.f32 %v1503, %v1512
      %v1524 = vmul.f32 %v1504, %v1512
      %v1525 = vmul.f32 %v1505, %v1512
      %v1526 = vmul.f32 %v1506, %v1512
      %v1527 = vmul.f32 %v1507, %v1512
      %v1528 = vmul.f32 %v1508, %v1512
      %v1529 = vadd.f32 %v1477, %v1513
      %v1530 = vadd.f32 %v1478, %v1514
      %v1531 = vadd.f32 %v1479, %v1515
      %v1532 = vadd.f32 %v1480, %v1516
      %v1533 = vadd.f32 %v1481, %v1517
      %v1534 = vadd.f32 %v1482, %v1518
      %v1535 = vadd.f32 %v1483, %v1519
      %v1536 = vadd.f32 %v1484, %v1520
      %v1537 = vadd.f32 %v1485, %v1521
      %v1538 = vadd.f32 %v1486, %v1522
      %v1539 = vadd.f32 %v1487, %v1523
      %v1540 = vadd.f32 %v1488, %v1524
      %v1541 = vadd.f32 %v1489, %v1525
      %v1542 = vadd.f32 %v1490, %v1526
      %v1543 = vadd.f32 %v1491, %v1527
      %v1544 = vadd.f32 %v1492, %v1528
      %1545 = vst.msk [vmem:[#allocation3] sm:$0xff] %vm354, %v1529
      %1546 = vst.msk [vmem:[#allocation3 + $0x8] sm:$0xff] %vm354, %v1530
      %1547 = vst.msk [vmem:[#allocation3 + $0x10] sm:$0xff] %vm354, %v1531
      %1548 = vst.msk [vmem:[#allocation3 + $0x18] sm:$0xff] %vm354, %v1532
      %1549 = vst.msk [vmem:[#allocation3 + $0x20] sm:$0xff] %vm354, %v1533
      %1550 = vst.msk [vmem:[#allocation3 + $0x28] sm:$0xff] %vm354, %v1534
      %1551 = vst.msk [vmem:[#allocation3 + $0x30] sm:$0xff] %vm354, %v1535
      %1552 = vst.msk [vmem:[#allocation3 + $0x38] sm:$0xff] %vm354, %v1536
      %1553 = vst.msk [vmem:[#allocation3 + $0x40] sm:$0xff] %vm354, %v1537
      %1554 = vst.msk [vmem:[#allocation3 + $0x48] sm:$0xff] %vm354, %v1538
      %1555 = vst.msk [vmem:[#allocation3 + $0x50] sm:$0xff] %vm354, %v1539
      %1556 = vst.msk [vmem:[#allocation3 + $0x58] sm:$0xff] %vm354, %v1540
      %1557 = vst.msk [vmem:[#allocation3 + $0x60] sm:$0xff] %vm354, %v1541
      %1558 = vst.msk [vmem:[#allocation3 + $0x68] sm:$0xff] %vm354, %v1542
      %1559 = vst.msk [vmem:[#allocation3 + $0x70] sm:$0xff] %vm354, %v1543
      %1560 = vst.msk [vmem:[#allocation3 + $0x78] sm:$0xff] %vm354, %v1544
      %v1561 = vld [vmem:[#allocation3] sm:$0xff]
      %v1562 = vld [vmem:[#allocation3 + $0x8] sm:$0xff]
      %v1563 = vld [vmem:[#allocation3 + $0x10] sm:$0xff]
      %v1564 = vld [vmem:[#allocation3 + $0x18] sm:$0xff]
      %v1565 = vld [vmem:[#allocation3 + $0x20] sm:$0xff]
      %v1566 = vld [vmem:[#allocation3 + $0x28] sm:$0xff]
      %v1567 = vld [vmem:[#allocation3 + $0x30] sm:$0xff]
      %v1568 = vld [vmem:[#allocation3 + $0x38] sm:$0xff]
      %v1569 = vld [vmem:[#allocation3 + $0x40] sm:$0xff]
      %v1570 = vld [vmem:[#allocation3 + $0x48] sm:$0xff]
      %v1571 = vld [vmem:[#allocation3 + $0x50] sm:$0xff]
      %v1572 = vld [vmem:[#allocation3 + $0x58] sm:$0xff]
      %v1573 = vld [vmem:[#allocation3 + $0x60] sm:$0xff]
      %v1574 = vld [vmem:[#allocation3 + $0x68] sm:$0xff]
      %v1575 = vld [vmem:[#allocation3 + $0x70] sm:$0xff]
      %v1576 = vld [vmem:[#allocation3 + $0x78] sm:$0xff]
      %v1577 = vld [vmem:[#allocation2 + $0x2] sm:$0xff]
      %v1578 = vld [vmem:[#allocation2 + $0xa] sm:$0xff]
      %v1579 = vld [vmem:[#allocation2 + $0x1a] sm:$0xff]
      %v1580 = vld [vmem:[#allocation2 + $0x22] sm:$0xff]
      %v1581 = vld [vmem:[#allocation2 + $0x32] sm:$0xff]
      %v1582 = vld [vmem:[#allocation2 + $0x3a] sm:$0xff]
      %v1583 = vld [vmem:[#allocation2 + $0x4a] sm:$0xff]
      %v1584 = vld [vmem:[#allocation2 + $0x52] sm:$0xff]
      %v1585 = vld [vmem:[#allocation2 + $0x62] sm:$0xff]
      %v1586 = vld [vmem:[#allocation2 + $0x6a] sm:$0xff]
      %v1587 = vld [vmem:[#allocation2 + $0x7a] sm:$0xff]
      %v1588 = vld [vmem:[#allocation2 + $0x82] sm:$0xff]
      %v1589 = vld [vmem:[#allocation2 + $0x92] sm:$0xff]
      %v1590 = vld [vmem:[#allocation2 + $0x9a] sm:$0xff]
      %v1591 = vld [vmem:[#allocation2 + $0xaa] sm:$0xff]
      %v1592 = vld [vmem:[#allocation2 + $0xb2] sm:$0xff]
      %v1593 = vlaneseq
      %v1594 = vshrl.u32 %v1593, 7
      %v1595 = vsub.s32 2, %v1594
      %v1596 = vrot.slane %v1373, %v1595
      %v1597 = vmul.f32 %v1577, %v1596
      %v1598 = vmul.f32 %v1578, %v1596
      %v1599 = vmul.f32 %v1579, %v1596
      %v1600 = vmul.f32 %v1580, %v1596
      %v1601 = vmul.f32 %v1581, %v1596
      %v1602 = vmul.f32 %v1582, %v1596
      %v1603 = vmul.f32 %v1583, %v1596
      %v1604 = vmul.f32 %v1584, %v1596
      %v1605 = vmul.f32 %v1585, %v1596
      %v1606 = vmul.f32 %v1586, %v1596
      %v1607 = vmul.f32 %v1587, %v1596
      %v1608 = vmul.f32 %v1588, %v1596
      %v1609 = vmul.f32 %v1589, %v1596
      %v1610 = vmul.f32 %v1590, %v1596
      %v1611 = vmul.f32 %v1591, %v1596
      %v1612 = vmul.f32 %v1592, %v1596
      %v1613 = vadd.f32 %v1561, %v1597
      %v1614 = vadd.f32 %v1562, %v1598
      %v1615 = vadd.f32 %v1563, %v1599
      %v1616 = vadd.f32 %v1564, %v1600
      %v1617 = vadd.f32 %v1565, %v1601
      %v1618 = vadd.f32 %v1566, %v1602
      %v1619 = vadd.f32 %v1567, %v1603
      %v1620 = vadd.f32 %v1568, %v1604
      %v1621 = vadd.f32 %v1569, %v1605
      %v1622 = vadd.f32 %v1570, %v1606
      %v1623 = vadd.f32 %v1571, %v1607
      %v1624 = vadd.f32 %v1572, %v1608
      %v1625 = vadd.f32 %v1573, %v1609
      %v1626 = vadd.f32 %v1574, %v1610
      %v1627 = vadd.f32 %v1575, %v1611
      %v1628 = vadd.f32 %v1576, %v1612
      %1629 = vst.msk [vmem:[#allocation3] sm:$0xff] %vm354, %v1613
      %1630 = vst.msk [vmem:[#allocation3 + $0x8] sm:$0xff] %vm354, %v1614
      %1631 = vst.msk [vmem:[#allocation3 + $0x10] sm:$0xff] %vm354, %v1615
      %1632 = vst.msk [vmem:[#allocation3 + $0x18] sm:$0xff] %vm354, %v1616
      %1633 = vst.msk [vmem:[#allocation3 + $0x20] sm:$0xff] %vm354, %v1617
      %1634 = vst.msk [vmem:[#allocation3 + $0x28] sm:$0xff] %vm354, %v1618
      %1635 = vst.msk [vmem:[#allocation3 + $0x30] sm:$0xff] %vm354, %v1619
      %1636 = vst.msk [vmem:[#allocation3 + $0x38] sm:$0xff] %vm354, %v1620
      %1637 = vst.msk [vmem:[#allocation3 + $0x40] sm:$0xff] %vm354, %v1621
      %1638 = vst.msk [vmem:[#allocation3 + $0x48] sm:$0xff] %vm354, %v1622
      %1639 = vst.msk [vmem:[#allocation3 + $0x50] sm:$0xff] %vm354, %v1623
      %1640 = vst.msk [vmem:[#allocation3 + $0x58] sm:$0xff] %vm354, %v1624
      %1641 = vst.msk [vmem:[#allocation3 + $0x60] sm:$0xff] %vm354, %v1625
      %1642 = vst.msk [vmem:[#allocation3 + $0x68] sm:$0xff] %vm354, %v1626
      %1643 = vst.msk [vmem:[#allocation3 + $0x70] sm:$0xff] %vm354, %v1627
      %1644 = vst.msk [vmem:[#allocation3 + $0x78] sm:$0xff] %vm354, %v1628
      %v1645 = vld [vmem:[#allocation3] sm:$0xff]
      %v1646 = vld [vmem:[#allocation3 + $0x8] sm:$0xff]
      %v1647 = vld [vmem:[#allocation3 + $0x10] sm:$0xff]
      %v1648 = vld [vmem:[#allocation3 + $0x18] sm:$0xff]
      %v1649 = vld [vmem:[#allocation3 + $0x20] sm:$0xff]
      %v1650 = vld [vmem:[#allocation3 + $0x28] sm:$0xff]
      %v1651 = vld [vmem:[#allocation3 + $0x30] sm:$0xff]
      %v1652 = vld [vmem:[#allocation3 + $0x38] sm:$0xff]
      %v1653 = vld [vmem:[#allocation3 + $0x40] sm:$0xff]
      %v1654 = vld [vmem:[#allocation3 + $0x48] sm:$0xff]
      %v1655 = vld [vmem:[#allocation3 + $0x50] sm:$0xff]
      %v1656 = vld [vmem:[#allocation3 + $0x58] sm:$0xff]
      %v1657 = vld [vmem:[#allocation3 + $0x60] sm:$0xff]
      %v1658 = vld [vmem:[#allocation3 + $0x68] sm:$0xff]
      %v1659 = vld [vmem:[#allocation3 + $0x70] sm:$0xff]
      %v1660 = vld [vmem:[#allocation3 + $0x78] sm:$0xff]
      %v1661 = vld [vmem:[#allocation2 + $0x3] sm:$0xff]
      %v1662 = vld [vmem:[#allocation2 + $0xb] sm:$0xff]
      %v1663 = vld [vmem:[#allocation2 + $0x1b] sm:$0xff]
      %v1664 = vld [vmem:[#allocation2 + $0x23] sm:$0xff]
      %v1665 = vld [vmem:[#allocation2 + $0x33] sm:$0xff]
      %v1666 = vld [vmem:[#allocation2 + $0x3b] sm:$0xff]
      %v1667 = vld [vmem:[#allocation2 + $0x4b] sm:$0xff]
      %v1668 = vld [vmem:[#allocation2 + $0x53] sm:$0xff]
      %v1669 = vld [vmem:[#allocation2 + $0x63] sm:$0xff]
      %v1670 = vld [vmem:[#allocation2 + $0x6b] sm:$0xff]
      %v1671 = vld [vmem:[#allocation2 + $0x7b] sm:$0xff]
      %v1672 = vld [vmem:[#allocation2 + $0x83] sm:$0xff]
      %v1673 = vld [vmem:[#allocation2 + $0x93] sm:$0xff]
      %v1674 = vld [vmem:[#allocation2 + $0x9b] sm:$0xff]
      %v1675 = vld [vmem:[#allocation2 + $0xab] sm:$0xff]
      %v1676 = vld [vmem:[#allocation2 + $0xb3] sm:$0xff]
      %v1677 = vlaneseq
      %v1678 = vshrl.u32 %v1677, 7
      %v1679 = vsub.s32 3, %v1678
      %v1680 = vrot.slane %v1373, %v1679
      %v1681 = vmul.f32 %v1661, %v1680
      %v1682 = vmul.f32 %v1662, %v1680
      %v1683 = vmul.f32 %v1663, %v1680
      %v1684 = vmul.f32 %v1664, %v1680
      %v1685 = vmul.f32 %v1665, %v1680
      %v1686 = vmul.f32 %v1666, %v1680
      %v1687 = vmul.f32 %v1667, %v1680
      %v1688 = vmul.f32 %v1668, %v1680
      %v1689 = vmul.f32 %v1669, %v1680
      %v1690 = vmul.f32 %v1670, %v1680
      %v1691 = vmul.f32 %v1671, %v1680
      %v1692 = vmul.f32 %v1672, %v1680
      %v1693 = vmul.f32 %v1673, %v1680
      %v1694 = vmul.f32 %v1674, %v1680
      %v1695 = vmul.f32 %v1675, %v1680
      %v1696 = vmul.f32 %v1676, %v1680
      %v1697 = vadd.f32 %v1645, %v1681
      %v1698 = vadd.f32 %v1646, %v1682
      %v1699 = vadd.f32 %v1647, %v1683
      %v1700 = vadd.f32 %v1648, %v1684
      %v1701 = vadd.f32 %v1649, %v1685
      %v1702 = vadd.f32 %v1650, %v1686
      %v1703 = vadd.f32 %v1651, %v1687
      %v1704 = vadd.f32 %v1652, %v1688
      %v1705 = vadd.f32 %v1653, %v1689
      %v1706 = vadd.f32 %v1654, %v1690
      %v1707 = vadd.f32 %v1655, %v1691
      %v1708 = vadd.f32 %v1656, %v1692
      %v1709 = vadd.f32 %v1657, %v1693
      %v1710 = vadd.f32 %v1658, %v1694
      %v1711 = vadd.f32 %v1659, %v1695
      %v1712 = vadd.f32 %v1660, %v1696
      %1713 = vst.msk [vmem:[#allocation3] sm:$0xff] %vm354, %v1697
      %1714 = vst.msk [vmem:[#allocation3 + $0x8] sm:$0xff] %vm354, %v1698
      %1715 = vst.msk [vmem:[#allocation3 + $0x10] sm:$0xff] %vm354, %v1699
      %1716 = vst.msk [vmem:[#allocation3 + $0x18] sm:$0xff] %vm354, %v1700
      %1717 = vst.msk [vmem:[#allocation3 + $0x20] sm:$0xff] %vm354, %v1701
      %1718 = vst.msk [vmem:[#allocation3 + $0x28] sm:$0xff] %vm354, %v1702
      %1719 = vst.msk [vmem:[#allocation3 + $0x30] sm:$0xff] %vm354, %v1703
      %1720 = vst.msk [vmem:[#allocation3 + $0x38] sm:$0xff] %vm354, %v1704
      %1721 = vst.msk [vmem:[#allocation3 + $0x40] sm:$0xff] %vm354, %v1705
      %1722 = vst.msk [vmem:[#allocation3 + $0x48] sm:$0xff] %vm354, %v1706
      %1723 = vst.msk [vmem:[#allocation3 + $0x50] sm:$0xff] %vm354, %v1707
      %1724 = vst.msk [vmem:[#allocation3 + $0x58] sm:$0xff] %vm354, %v1708
      %1725 = vst.msk [vmem:[#allocation3 + $0x60] sm:$0xff] %vm354, %v1709
      %1726 = vst.msk [vmem:[#allocation3 + $0x68] sm:$0xff] %vm354, %v1710
      %1727 = vst.msk [vmem:[#allocation3 + $0x70] sm:$0xff] %vm354, %v1711
      %1728 = vst.msk [vmem:[#allocation3 + $0x78] sm:$0xff] %vm354, %v1712
      %v1729 = vld [vmem:[#allocation3] sm:$0xff]
      %v1730 = vld [vmem:[#allocation3 + $0x8] sm:$0xff]
      %v1731 = vld [vmem:[#allocation3 + $0x10] sm:$0xff]
      %v1732 = vld [vmem:[#allocation3 + $0x18] sm:$0xff]
      %v1733 = vld [vmem:[#allocation3 + $0x20] sm:$0xff]
      %v1734 = vld [vmem:[#allocation3 + $0x28] sm:$0xff]
      %v1735 = vld [vmem:[#allocation3 + $0x30] sm:$0xff]
      %v1736 = vld [vmem:[#allocation3 + $0x38] sm:$0xff]
      %v1737 = vld [vmem:[#allocation3 + $0x40] sm:$0xff]
      %v1738 = vld [vmem:[#allocation3 + $0x48] sm:$0xff]
      %v1739 = vld [vmem:[#allocation3 + $0x50] sm:$0xff]
      %v1740 = vld [vmem:[#allocation3 + $0x58] sm:$0xff]
      %v1741 = vld [vmem:[#allocation3 + $0x60] sm:$0xff]
      %v1742 = vld [vmem:[#allocation3 + $0x68] sm:$0xff]
      %v1743 = vld [vmem:[#allocation3 + $0x70] sm:$0xff]
      %v1744 = vld [vmem:[#allocation3 + $0x78] sm:$0xff]
      %v1745 = vld [vmem:[#allocation2 + $0x4] sm:$0xff]
      %v1746 = vld [vmem:[#allocation2 + $0xc] sm:$0xff]
      %v1747 = vld [vmem:[#allocation2 + $0x1c] sm:$0xff]
      %v1748 = vld [vmem:[#allocation2 + $0x24] sm:$0xff]
      %v1749 = vld [vmem:[#allocation2 + $0x34] sm:$0xff]
      %v1750 = vld [vmem:[#allocation2 + $0x3c] sm:$0xff]
      %v1751 = vld [vmem:[#allocation2 + $0x4c] sm:$0xff]
      %v1752 = vld [vmem:[#allocation2 + $0x54] sm:$0xff]
      %v1753 = vld [vmem:[#allocation2 + $0x64] sm:$0xff]
      %v1754 = vld [vmem:[#allocation2 + $0x6c] sm:$0xff]
      %v1755 = vld [vmem:[#allocation2 + $0x7c] sm:$0xff]
      %v1756 = vld [vmem:[#allocation2 + $0x84] sm:$0xff]
      %v1757 = vld [vmem:[#allocation2 + $0x94] sm:$0xff]
      %v1758 = vld [vmem:[#allocation2 + $0x9c] sm:$0xff]
      %v1759 = vld [vmem:[#allocation2 + $0xac] sm:$0xff]
      %v1760 = vld [vmem:[#allocation2 + $0xb4] sm:$0xff]
      %v1761 = vlaneseq
      %v1762 = vshrl.u32 %v1761, 7
      %v1763 = vsub.s32 4, %v1762
      %v1764 = vrot.slane %v1373, %v1763
      %v1765 = vmul.f32 %v1745, %v1764
      %v1766 = vmul.f32 %v1746, %v1764
      %v1767 = vmul.f32 %v1747, %v1764
      %v1768 = vmul.f32 %v1748, %v1764
      %v1769 = vmul.f32 %v1749, %v1764
      %v1770 = vmul.f32 %v1750, %v1764
      %v1771 = vmul.f32 %v1751, %v1764
      %v1772 = vmul.f32 %v1752, %v1764
      %v1773 = vmul.f32 %v1753, %v1764
      %v1774 = vmul.f32 %v1754, %v1764
      %v1775 = vmul.f32 %v1755, %v1764
      %v1776 = vmul.f32 %v1756, %v1764
      %v1777 = vmul.f32 %v1757, %v1764
      %v1778 = vmul.f32 %v1758, %v1764
      %v1779 = vmul.f32 %v1759, %v1764
      %v1780 = vmul.f32 %v1760, %v1764
      %v1781 = vadd.f32 %v1729, %v1765
      %v1782 = vadd.f32 %v1730, %v1766
      %v1783 = vadd.f32 %v1731, %v1767
      %v1784 = vadd.f32 %v1732, %v1768
      %v1785 = vadd.f32 %v1733, %v1769
      %v1786 = vadd.f32 %v1734, %v1770
      %v1787 = vadd.f32 %v1735, %v1771
      %v1788 = vadd.f32 %v1736, %v1772
      %v1789 = vadd.f32 %v1737, %v1773
      %v1790 = vadd.f32 %v1738, %v1774
      %v1791 = vadd.f32 %v1739, %v1775
      %v1792 = vadd.f32 %v1740, %v1776
      %v1793 = vadd.f32 %v1741, %v1777
      %v1794 = vadd.f32 %v1742, %v1778
      %v1795 = vadd.f32 %v1743, %v1779
      %v1796 = vadd.f32 %v1744, %v1780
      %1797 = vst.msk [vmem:[#allocation3] sm:$0xff] %vm354, %v1781
      %1798 = vst.msk [vmem:[#allocation3 + $0x8] sm:$0xff] %vm354, %v1782
      %1799 = vst.msk [vmem:[#allocation3 + $0x10] sm:$0xff] %vm354, %v1783
      %1800 = vst.msk [vmem:[#allocation3 + $0x18] sm:$0xff] %vm354, %v1784
      %1801 = vst.msk [vmem:[#allocation3 + $0x20] sm:$0xff] %vm354, %v1785
      %1802 = vst.msk [vmem:[#allocation3 + $0x28] sm:$0xff] %vm354, %v1786
      %1803 = vst.msk [vmem:[#allocation3 + $0x30] sm:$0xff] %vm354, %v1787
      %1804 = vst.msk [vmem:[#allocation3 + $0x38] sm:$0xff] %vm354, %v1788
      %1805 = vst.msk [vmem:[#allocation3 + $0x40] sm:$0xff] %vm354, %v1789
      %1806 = vst.msk [vmem:[#allocation3 + $0x48] sm:$0xff] %vm354, %v1790
      %1807 = vst.msk [vmem:[#allocation3 + $0x50] sm:$0xff] %vm354, %v1791
      %1808 = vst.msk [vmem:[#allocation3 + $0x58] sm:$0xff] %vm354, %v1792
      %1809 = vst.msk [vmem:[#allocation3 + $0x60] sm:$0xff] %vm354, %v1793
      %1810 = vst.msk [vmem:[#allocation3 + $0x68] sm:$0xff] %vm354, %v1794
      %1811 = vst.msk [vmem:[#allocation3 + $0x70] sm:$0xff] %vm354, %v1795
      %1812 = vst.msk [vmem:[#allocation3 + $0x78] sm:$0xff] %vm354, %v1796
      %v1813 = vld [vmem:[#allocation3] sm:$0xff]
      %v1814 = vld [vmem:[#allocation3 + $0x8] sm:$0xff]
      %v1815 = vld [vmem:[#allocation3 + $0x10] sm:$0xff]
      %v1816 = vld [vmem:[#allocation3 + $0x18] sm:$0xff]
      %v1817 = vld [vmem:[#allocation3 + $0x20] sm:$0xff]
      %v1818 = vld [vmem:[#allocation3 + $0x28] sm:$0xff]
      %v1819 = vld [vmem:[#allocation3 + $0x30] sm:$0xff]
      %v1820 = vld [vmem:[#allocation3 + $0x38] sm:$0xff]
      %v1821 = vld [vmem:[#allocation3 + $0x40] sm:$0xff]
      %v1822 = vld [vmem:[#allocation3 + $0x48] sm:$0xff]
      %v1823 = vld [vmem:[#allocation3 + $0x50] sm:$0xff]
      %v1824 = vld [vmem:[#allocation3 + $0x58] sm:$0xff]
      %v1825 = vld [vmem:[#allocation3 + $0x60] sm:$0xff]
      %v1826 = vld [vmem:[#allocation3 + $0x68] sm:$0xff]
      %v1827 = vld [vmem:[#allocation3 + $0x70] sm:$0xff]
      %v1828 = vld [vmem:[#allocation3 + $0x78] sm:$0xff]
      %s1829 = scalar_lea.vmem [#allocation2], 24
      %v1830 = vld [vmem:[%s1829] sm:$0xff]
      %v1831 = vld [vmem:[%s1829 + $0x8] sm:$0xff]
      %v1832 = vld [vmem:[%s1829 + $0x18] sm:$0xff]
      %v1833 = vld [vmem:[%s1829 + $0x20] sm:$0xff]
      %v1834 = vld [vmem:[%s1829 + $0x30] sm:$0xff]
      %v1835 = vld [vmem:[%s1829 + $0x38] sm:$0xff]
      %v1836 = vld [vmem:[%s1829 + $0x48] sm:$0xff]
      %v1837 = vld [vmem:[%s1829 + $0x50] sm:$0xff]
      %v1838 = vld [vmem:[%s1829 + $0x60] sm:$0xff]
      %v1839 = vld [vmem:[%s1829 + $0x68] sm:$0xff]
      %v1840 = vld [vmem:[%s1829 + $0x78] sm:$0xff]
      %v1841 = vld [vmem:[%s1829 + $0x80] sm:$0xff]
      %v1842 = vld [vmem:[%s1829 + $0x90] sm:$0xff]
      %v1843 = vld [vmem:[%s1829 + $0x98] sm:$0xff]
      %v1844 = vld [vmem:[%s1829 + $0xa8] sm:$0xff]
      %v1845 = vld [vmem:[%s1829 + $0xb0] sm:$0xff]
      %v1846 = vlaneseq
      %v1847 = vshrl.u32 %v1846, 7
      %v1848 = vsub.s32 5, %v1847
      %v1849 = vrot.slane %v1373, %v1848
      %v1850 = vmul.f32 %v1830, %v1849
      %v1851 = vmul.f32 %v1831, %v1849
      %v1852 = vmul.f32 %v1832, %v1849
      %v1853 = vmul.f32 %v1833, %v1849
      %v1854 = vmul.f32 %v1834, %v1849
      %v1855 = vmul.f32 %v1835, %v1849
      %v1856 = vmul.f32 %v1836, %v1849
      %v1857 = vmul.f32 %v1837, %v1849
      %v1858 = vmul.f32 %v1838, %v1849
      %v1859 = vmul.f32 %v1839, %v1849
      %v1860 = vmul.f32 %v1840, %v1849
      %v1861 = vmul.f32 %v1841, %v1849
      %v1862 = vmul.f32 %v1842, %v1849
      %v1863 = vmul.f32 %v1843, %v1849
      %v1864 = vmul.f32 %v1844, %v1849
      %v1865 = vmul.f32 %v1845, %v1849
      %v1866 = vadd.f32 %v1813, %v1850
      %v1867 = vadd.f32 %v1814, %v1851
      %v1868 = vadd.f32 %v1815, %v1852
      %v1869 = vadd.f32 %v1816, %v1853
      %v1870 = vadd.f32 %v1817, %v1854
      %v1871 = vadd.f32 %v1818, %v1855
      %v1872 = vadd.f32 %v1819, %v1856
      %v1873 = vadd.f32 %v1820, %v1857
      %v1874 = vadd.f32 %v1821, %v1858
      %v1875 = vadd.f32 %v1822, %v1859
      %v1876 = vadd.f32 %v1823, %v1860
      %v1877 = vadd.f32 %v1824, %v1861
      %v1878 = vadd.f32 %v1825, %v1862
      %v1879 = vadd.f32 %v1826, %v1863
      %v1880 = vadd.f32 %v1827, %v1864
      %v1881 = vadd.f32 %v1828, %v1865
      %1882 = vst.msk [vmem:[#allocation3] sm:$0xff] %vm354, %v1866
      %1883 = vst.msk [vmem:[#allocation3 + $0x8] sm:$0xff] %vm354, %v1867
      %1884 = vst.msk [vmem:[#allocation3 + $0x10] sm:$0xff] %vm354, %v1868
      %1885 = vst.msk [vmem:[#allocation3 + $0x18] sm:$0xff] %vm354, %v1869
      %1886 = vst.msk [vmem:[#allocation3 + $0x20] sm:$0xff] %vm354, %v1870
      %1887 = vst.msk [vmem:[#allocation3 + $0x28] sm:$0xff] %vm354, %v1871
      %1888 = vst.msk [vmem:[#allocation3 + $0x30] sm:$0xff] %vm354, %v1872
      %1889 = vst.msk [vmem:[#allocation3 + $0x38] sm:$0xff] %vm354, %v1873
      %1890 = vst.msk [vmem:[#allocation3 + $0x40] sm:$0xff] %vm354, %v1874
      %1891 = vst.msk [vmem:[#allocation3 + $0x48] sm:$0xff] %vm354, %v1875
      %1892 = vst.msk [vmem:[#allocation3 + $0x50] sm:$0xff] %vm354, %v1876
      %1893 = vst.msk [vmem:[#allocation3 + $0x58] sm:$0xff] %vm354, %v1877
      %1894 = vst.msk [vmem:[#allocation3 + $0x60] sm:$0xff] %vm354, %v1878
      %1895 = vst.msk [vmem:[#allocation3 + $0x68] sm:$0xff] %vm354, %v1879
      %1896 = vst.msk [vmem:[#allocation3 + $0x70] sm:$0xff] %vm354, %v1880
      %1897 = vst.msk [vmem:[#allocation3 + $0x78] sm:$0xff] %vm354, %v1881
      %v1898 = vld [vmem:[#allocation3] sm:$0xff]
      %v1899 = vld [vmem:[#allocation3 + $0x8] sm:$0xff]
      %v1900 = vld [vmem:[#allocation3 + $0x10] sm:$0xff]
      %v1901 = vld [vmem:[#allocation3 + $0x18] sm:$0xff]
      %v1902 = vld [vmem:[#allocation3 + $0x20] sm:$0xff]
      %v1903 = vld [vmem:[#allocation3 + $0x28] sm:$0xff]
      %v1904 = vld [vmem:[#allocation3 + $0x30] sm:$0xff]
      %v1905 = vld [vmem:[#allocation3 + $0x38] sm:$0xff]
      %v1906 = vld [vmem:[#allocation3 + $0x40] sm:$0xff]
      %v1907 = vld [vmem:[#allocation3 + $0x48] sm:$0xff]
      %v1908 = vld [vmem:[#allocation3 + $0x50] sm:$0xff]
      %v1909 = vld [vmem:[#allocation3 + $0x58] sm:$0xff]
      %v1910 = vld [vmem:[#allocation3 + $0x60] sm:$0xff]
      %v1911 = vld [vmem:[#allocation3 + $0x68] sm:$0xff]
      %v1912 = vld [vmem:[#allocation3 + $0x70] sm:$0xff]
      %v1913 = vld [vmem:[#allocation3 + $0x78] sm:$0xff]
      %v1914 = vld [vmem:[%s1829 + $0x1] sm:$0xff]
      %v1915 = vld [vmem:[%s1829 + $0x9] sm:$0xff]
      %v1916 = vld [vmem:[%s1829 + $0x19] sm:$0xff]
      %v1917 = vld [vmem:[%s1829 + $0x21] sm:$0xff]
      %v1918 = vld [vmem:[%s1829 + $0x31] sm:$0xff]
      %v1919 = vld [vmem:[%s1829 + $0x39] sm:$0xff]
      %v1920 = vld [vmem:[%s1829 + $0x49] sm:$0xff]
      %v1921 = vld [vmem:[%s1829 + $0x51] sm:$0xff]
      %v1922 = vld [vmem:[%s1829 + $0x61] sm:$0xff]
      %v1923 = vld [vmem:[%s1829 + $0x69] sm:$0xff]
      %v1924 = vld [vmem:[%s1829 + $0x79] sm:$0xff]
      %v1925 = vld [vmem:[%s1829 + $0x81] sm:$0xff]
      %v1926 = vld [vmem:[%s1829 + $0x91] sm:$0xff]
      %v1927 = vld [vmem:[%s1829 + $0x99] sm:$0xff]
      %v1928 = vld [vmem:[%s1829 + $0xa9] sm:$0xff]
      %v1929 = vld [vmem:[%s1829 + $0xb1] sm:$0xff]
      %v1930 = vlaneseq
      %v1931 = vshrl.u32 %v1930, 7
      %v1932 = vsub.s32 6, %v1931
      %v1933 = vrot.slane %v1373, %v1932
      %v1934 = vmul.f32 %v1914, %v1933
      %v1935 = vmul.f32 %v1915, %v1933
      %v1936 = vmul.f32 %v1916, %v1933
      %v1937 = vmul.f32 %v1917, %v1933
      %v1938 = vmul.f32 %v1918, %v1933
      %v1939 = vmul.f32 %v1919, %v1933
      %v1940 = vmul.f32 %v1920, %v1933
      %v1941 = vmul.f32 %v1921, %v1933
      %v1942 = vmul.f32 %v1922, %v1933
      %v1943 = vmul.f32 %v1923, %v1933
      %v1944 = vmul.f32 %v1924, %v1933
      %v1945 = vmul.f32 %v1925, %v1933
      %v1946 = vmul.f32 %v1926, %v1933
      %v1947 = vmul.f32 %v1927, %v1933
      %v1948 = vmul.f32 %v1928, %v1933
      %v1949 = vmul.f32 %v1929, %v1933
      %v1950 = vadd.f32 %v1898, %v1934
      %v1951 = vadd.f32 %v1899, %v1935
      %v1952 = vadd.f32 %v1900, %v1936
      %v1953 = vadd.f32 %v1901, %v1937
      %v1954 = vadd.f32 %v1902, %v1938
      %v1955 = vadd.f32 %v1903, %v1939
      %v1956 = vadd.f32 %v1904, %v1940
      %v1957 = vadd.f32 %v1905, %v1941
      %v1958 = vadd.f32 %v1906, %v1942
      %v1959 = vadd.f32 %v1907, %v1943
      %v1960 = vadd.f32 %v1908, %v1944
      %v1961 = vadd.f32 %v1909, %v1945
      %v1962 = vadd.f32 %v1910, %v1946
      %v1963 = vadd.f32 %v1911, %v1947
      %v1964 = vadd.f32 %v1912, %v1948
      %v1965 = vadd.f32 %v1913, %v1949
      %1966 = vst.msk [vmem:[#allocation3] sm:$0xff] %vm354, %v1950
      %1967 = vst.msk [vmem:[#allocation3 + $0x8] sm:$0xff] %vm354, %v1951
      %1968 = vst.msk [vmem:[#allocation3 + $0x10] sm:$0xff] %vm354, %v1952
      %1969 = vst.msk [vmem:[#allocation3 + $0x18] sm:$0xff] %vm354, %v1953
      %1970 = vst.msk [vmem:[#allocation3 + $0x20] sm:$0xff] %vm354, %v1954
      %1971 = vst.msk [vmem:[#allocation3 + $0x28] sm:$0xff] %vm354, %v1955
      %1972 = vst.msk [vmem:[#allocation3 + $0x30] sm:$0xff] %vm354, %v1956
      %1973 = vst.msk [vmem:[#allocation3 + $0x38] sm:$0xff] %vm354, %v1957
      %1974 = vst.msk [vmem:[#allocation3 + $0x40] sm:$0xff] %vm354, %v1958
      %1975 = vst.msk [vmem:[#allocation3 + $0x48] sm:$0xff] %vm354, %v1959
      %1976 = vst.msk [vmem:[#allocation3 + $0x50] sm:$0xff] %vm354, %v1960
      %1977 = vst.msk [vmem:[#allocation3 + $0x58] sm:$0xff] %vm354, %v1961
      %1978 = vst.msk [vmem:[#allocation3 + $0x60] sm:$0xff] %vm354, %v1962
      %1979 = vst.msk [vmem:[#allocation3 + $0x68] sm:$0xff] %vm354, %v1963
      %1980 = vst.msk [vmem:[#allocation3 + $0x70] sm:$0xff] %vm354, %v1964
      %1981 = vst.msk [vmem:[#allocation3 + $0x78] sm:$0xff] %vm354, %v1965
      %v1982 = vld [vmem:[#allocation3] sm:$0xff]
      %v1983 = vld [vmem:[#allocation3 + $0x8] sm:$0xff]
      %v1984 = vld [vmem:[#allocation3 + $0x10] sm:$0xff]
      %v1985 = vld [vmem:[#allocation3 + $0x18] sm:$0xff]
      %v1986 = vld [vmem:[#allocation3 + $0x20] sm:$0xff]
      %v1987 = vld [vmem:[#allocation3 + $0x28] sm:$0xff]
      %v1988 = vld [vmem:[#allocation3 + $0x30] sm:$0xff]
      %v1989 = vld [vmem:[#allocation3 + $0x38] sm:$0xff]
      %v1990 = vld [vmem:[#allocation3 + $0x40] sm:$0xff]
      %v1991 = vld [vmem:[#allocation3 + $0x48] sm:$0xff]
      %v1992 = vld [vmem:[#allocation3 + $0x50] sm:$0xff]
      %v1993 = vld [vmem:[#allocation3 + $0x58] sm:$0xff]
      %v1994 = vld [vmem:[#allocation3 + $0x60] sm:$0xff]
      %v1995 = vld [vmem:[#allocation3 + $0x68] sm:$0xff]
      %v1996 = vld [vmem:[#allocation3 + $0x70] sm:$0xff]
      %v1997 = vld [vmem:[#allocation3 + $0x78] sm:$0xff]
      %v1998 = vld [vmem:[%s1829 + $0x2] sm:$0xff]
      %v1999 = vld [vmem:[%s1829 + $0xa] sm:$0xff]
      %v2000 = vld [vmem:[%s1829 + $0x1a] sm:$0xff]
      %v2001 = vld [vmem:[%s1829 + $0x22] sm:$0xff]
      %v2002 = vld [vmem:[%s1829 + $0x32] sm:$0xff]
      %v2003 = vld [vmem:[%s1829 + $0x3a] sm:$0xff]
      %v2004 = vld [vmem:[%s1829 + $0x4a] sm:$0xff]
      %v2005 = vld [vmem:[%s1829 + $0x52] sm:$0xff]
      %v2006 = vld [vmem:[%s1829 + $0x62] sm:$0xff]
      %v2007 = vld [vmem:[%s1829 + $0x6a] sm:$0xff]
      %v2008 = vld [vmem:[%s1829 + $0x7a] sm:$0xff]
      %v2009 = vld [vmem:[%s1829 + $0x82] sm:$0xff]
      %v2010 = vld [vmem:[%s1829 + $0x92] sm:$0xff]
      %v2011 = vld [vmem:[%s1829 + $0x9a] sm:$0xff]
      %v2012 = vld [vmem:[%s1829 + $0xaa] sm:$0xff]
      %v2013 = vld [vmem:[%s1829 + $0xb2] sm:$0xff]
      %v2014 = vlaneseq
      %v2015 = vshrl.u32 %v2014, 7
      %v2016 = vsub.s32 7, %v2015
      %v2017 = vrot.slane %v1373, %v2016
      %v2018 = vmul.f32 %v1998, %v2017
      %v2019 = vmul.f32 %v1999, %v2017
      %v2020 = vmul.f32 %v2000, %v2017
      %v2021 = vmul.f32 %v2001, %v2017
      %v2022 = vmul.f32 %v2002, %v2017
      %v2023 = vmul.f32 %v2003, %v2017
      %v2024 = vmul.f32 %v2004, %v2017
      %v2025 = vmul.f32 %v2005, %v2017
      %v2026 = vmul.f32 %v2006, %v2017
      %v2027 = vmul.f32 %v2007, %v2017
      %v2028 = vmul.f32 %v2008, %v2017
      %v2029 = vmul.f32 %v2009, %v2017
      %v2030 = vmul.f32 %v2010, %v2017
      %v2031 = vmul.f32 %v2011, %v2017
      %v2032 = vmul.f32 %v2012, %v2017
      %v2033 = vmul.f32 %v2013, %v2017
      %v2034 = vadd.f32 %v1982, %v2018
      %v2035 = vadd.f32 %v1983, %v2019
      %v2036 = vadd.f32 %v1984, %v2020
      %v2037 = vadd.f32 %v1985, %v2021
      %v2038 = vadd.f32 %v1986, %v2022
      %v2039 = vadd.f32 %v1987, %v2023
      %v2040 = vadd.f32 %v1988, %v2024
      %v2041 = vadd.f32 %v1989, %v2025
      %v2042 = vadd.f32 %v1990, %v2026
      %v2043 = vadd.f32 %v1991, %v2027
      %v2044 = vadd.f32 %v1992, %v2028
      %v2045 = vadd.f32 %v1993, %v2029
      %v2046 = vadd.f32 %v1994, %v2030
      %v2047 = vadd.f32 %v1995, %v2031
      %v2048 = vadd.f32 %v1996, %v2032
      %v2049 = vadd.f32 %v1997, %v2033
      %2050 = vst.msk [vmem:[#allocation3] sm:$0xff] %vm354, %v2034
      %2051 = vst.msk [vmem:[#allocation3 + $0x8] sm:$0xff] %vm354, %v2035
      %2052 = vst.msk [vmem:[#allocation3 + $0x10] sm:$0xff] %vm354, %v2036
      %2053 = vst.msk [vmem:[#allocation3 + $0x18] sm:$0xff] %vm354, %v2037
      %2054 = vst.msk [vmem:[#allocation3 + $0x20] sm:$0xff] %vm354, %v2038
      %2055 = vst.msk [vmem:[#allocation3 + $0x28] sm:$0xff] %vm354, %v2039
      %2056 = vst.msk [vmem:[#allocation3 + $0x30] sm:$0xff] %vm354, %v2040
      %2057 = vst.msk [vmem:[#allocation3 + $0x38] sm:$0xff] %vm354, %v2041
      %2058 = vst.msk [vmem:[#allocation3 + $0x40] sm:$0xff] %vm354, %v2042
      %2059 = vst.msk [vmem:[#allocation3 + $0x48] sm:$0xff] %vm354, %v2043
      %2060 = vst.msk [vmem:[#allocation3 + $0x50] sm:$0xff] %vm354, %v2044
      %2061 = vst.msk [vmem:[#allocation3 + $0x58] sm:$0xff] %vm354, %v2045
      %2062 = vst.msk [vmem:[#allocation3 + $0x60] sm:$0xff] %vm354, %v2046
      %2063 = vst.msk [vmem:[#allocation3 + $0x68] sm:$0xff] %vm354, %v2047
      %2064 = vst.msk [vmem:[#allocation3 + $0x70] sm:$0xff] %vm354, %v2048
      %2065 = vst.msk [vmem:[#allocation3 + $0x78] sm:$0xff] %vm354, %v2049
      %v2066 = vld [vmem:[#allocation3] sm:$0xff]
      %v2067 = vld [vmem:[#allocation3 + $0x8] sm:$0xff]
      %v2068 = vld [vmem:[#allocation3 + $0x10] sm:$0xff]
      %v2069 = vld [vmem:[#allocation3 + $0x18] sm:$0xff]
      %v2070 = vld [vmem:[#allocation3 + $0x20] sm:$0xff]
      %v2071 = vld [vmem:[#allocation3 + $0x28] sm:$0xff]
      %v2072 = vld [vmem:[#allocation3 + $0x30] sm:$0xff]
      %v2073 = vld [vmem:[#allocation3 + $0x38] sm:$0xff]
      %v2074 = vld [vmem:[#allocation3 + $0x40] sm:$0xff]
      %v2075 = vld [vmem:[#allocation3 + $0x48] sm:$0xff]
      %v2076 = vld [vmem:[#allocation3 + $0x50] sm:$0xff]
      %v2077 = vld [vmem:[#allocation3 + $0x58] sm:$0xff]
      %v2078 = vld [vmem:[#allocation3 + $0x60] sm:$0xff]
      %v2079 = vld [vmem:[#allocation3 + $0x68] sm:$0xff]
      %v2080 = vld [vmem:[#allocation3 + $0x70] sm:$0xff]
      %v2081 = vld [vmem:[#allocation3 + $0x78] sm:$0xff]
      %v2082 = vld [vmem:[%s1829 + $0x3] sm:$0xff]
      %v2083 = vld [vmem:[%s1829 + $0xb] sm:$0xff]
      %v2084 = vld [vmem:[%s1829 + $0x1b] sm:$0xff]
      %v2085 = vld [vmem:[%s1829 + $0x23] sm:$0xff]
      %v2086 = vld [vmem:[%s1829 + $0x33] sm:$0xff]
      %v2087 = vld [vmem:[%s1829 + $0x3b] sm:$0xff]
      %v2088 = vld [vmem:[%s1829 + $0x4b] sm:$0xff]
      %v2089 = vld [vmem:[%s1829 + $0x53] sm:$0xff]
      %v2090 = vld [vmem:[%s1829 + $0x63] sm:$0xff]
      %v2091 = vld [vmem:[%s1829 + $0x6b] sm:$0xff]
      %v2092 = vld [vmem:[%s1829 + $0x7b] sm:$0xff]
      %v2093 = vld [vmem:[%s1829 + $0x83] sm:$0xff]
      %v2094 = vld [vmem:[%s1829 + $0x93] sm:$0xff]
      %v2095 = vld [vmem:[%s1829 + $0x9b] sm:$0xff]
      %v2096 = vld [vmem:[%s1829 + $0xab] sm:$0xff]
      %v2097 = vld [vmem:[%s1829 + $0xb3] sm:$0xff]
      %v2098 = vlaneseq
      %v2099 = vshrl.u32 %v2098, 7
      %v2100 = vsub.s32 0, %v2099
      %v2101 = vrot.slane %v1374, %v2100
      %v2102 = vmul.f32 %v2082, %v2101
      %v2103 = vmul.f32 %v2083, %v2101
      %v2104 = vmul.f32 %v2084, %v2101
      %v2105 = vmul.f32 %v2085, %v2101
      %v2106 = vmul.f32 %v2086, %v2101
      %v2107 = vmul.f32 %v2087, %v2101
      %v2108 = vmul.f32 %v2088, %v2101
      %v2109 = vmul.f32 %v2089, %v2101
      %v2110 = vmul.f32 %v2090, %v2101
      %v2111 = vmul.f32 %v2091, %v2101
      %v2112 = vmul.f32 %v2092, %v2101
      %v2113 = vmul.f32 %v2093, %v2101
      %v2114 = vmul.f32 %v2094, %v2101
      %v2115 = vmul.f32 %v2095, %v2101
      %v2116 = vmul.f32 %v2096, %v2101
      %v2117 = vmul.f32 %v2097, %v2101
      %v2118 = vadd.f32 %v2066, %v2102
      %v2119 = vadd.f32 %v2067, %v2103
      %v2120 = vadd.f32 %v2068, %v2104
      %v2121 = vadd.f32 %v2069, %v2105
      %v2122 = vadd.f32 %v2070, %v2106
      %v2123 = vadd.f32 %v2071, %v2107
      %v2124 = vadd.f32 %v2072, %v2108
      %v2125 = vadd.f32 %v2073, %v2109
      %v2126 = vadd.f32 %v2074, %v2110
      %v2127 = vadd.f32 %v2075, %v2111
      %v2128 = vadd.f32 %v2076, %v2112
      %v2129 = vadd.f32 %v2077, %v2113
      %v2130 = vadd.f32 %v2078, %v2114
      %v2131 = vadd.f32 %v2079, %v2115
      %v2132 = vadd.f32 %v2080, %v2116
      %v2133 = vadd.f32 %v2081, %v2117
      %2134 = vst.msk [vmem:[#allocation3] sm:$0xff] %vm354, %v2118
      %2135 = vst.msk [vmem:[#allocation3 + $0x8] sm:$0xff] %vm354, %v2119
      %2136 = vst.msk [vmem:[#allocation3 + $0x10] sm:$0xff] %vm354, %v2120
      %2137 = vst.msk [vmem:[#allocation3 + $0x18] sm:$0xff] %vm354, %v2121
      %2138 = vst.msk [vmem:[#allocation3 + $0x20] sm:$0xff] %vm354, %v2122
      %2139 = vst.msk [vmem:[#allocation3 + $0x28] sm:$0xff] %vm354, %v2123
      %2140 = vst.msk [vmem:[#allocation3 + $0x30] sm:$0xff] %vm354, %v2124
      %2141 = vst.msk [vmem:[#allocation3 + $0x38] sm:$0xff] %vm354, %v2125
      %2142 = vst.msk [vmem:[#allocation3 + $0x40] sm:$0xff] %vm354, %v2126
      %2143 = vst.msk [vmem:[#allocation3 + $0x48] sm:$0xff] %vm354, %v2127
      %2144 = vst.msk [vmem:[#allocation3 + $0x50] sm:$0xff] %vm354, %v2128
      %2145 = vst.msk [vmem:[#allocation3 + $0x58] sm:$0xff] %vm354, %v2129
      %2146 = vst.msk [vmem:[#allocation3 + $0x60] sm:$0xff] %vm354, %v2130
      %2147 = vst.msk [vmem:[#allocation3 + $0x68] sm:$0xff] %vm354, %v2131
      %2148 = vst.msk [vmem:[#allocation3 + $0x70] sm:$0xff] %vm354, %v2132
      %2149 = vst.msk [vmem:[#allocation3 + $0x78] sm:$0xff] %vm354, %v2133
      %v2150 = vld [vmem:[#allocation3] sm:$0xff]
      %v2151 = vld [vmem:[#allocation3 + $0x8] sm:$0xff]
      %v2152 = vld [vmem:[#allocation3 + $0x10] sm:$0xff]
      %v2153 = vld [vmem:[#allocation3 + $0x18] sm:$0xff]
      %v2154 = vld [vmem:[#allocation3 + $0x20] sm:$0xff]
      %v2155 = vld [vmem:[#allocation3 + $0x28] sm:$0xff]
      %v2156 = vld [vmem:[#allocation3 + $0x30] sm:$0xff]
      %v2157 = vld [vmem:[#allocation3 + $0x38] sm:$0xff]
      %v2158 = vld [vmem:[#allocation3 + $0x40] sm:$0xff]
      %v2159 = vld [vmem:[#allocation3 + $0x48] sm:$0xff]
      %v2160 = vld [vmem:[#allocation3 + $0x50] sm:$0xff]
      %v2161 = vld [vmem:[#allocation3 + $0x58] sm:$0xff]
      %v2162 = vld [vmem:[#allocation3 + $0x60] sm:$0xff]
      %v2163 = vld [vmem:[#allocation3 + $0x68] sm:$0xff]
      %v2164 = vld [vmem:[#allocation3 + $0x70] sm:$0xff]
      %v2165 = vld [vmem:[#allocation3 + $0x78] sm:$0xff]
      %v2166 = vld [vmem:[%s1829 + $0x4] sm:$0xff]
      %v2167 = vld [vmem:[%s1829 + $0xc] sm:$0xff]
      %v2168 = vld [vmem:[%s1829 + $0x1c] sm:$0xff]
      %v2169 = vld [vmem:[%s1829 + $0x24] sm:$0xff]
      %v2170 = vld [vmem:[%s1829 + $0x34] sm:$0xff]
      %v2171 = vld [vmem:[%s1829 + $0x3c] sm:$0xff]
      %v2172 = vld [vmem:[%s1829 + $0x4c] sm:$0xff]
      %v2173 = vld [vmem:[%s1829 + $0x54] sm:$0xff]
      %v2174 = vld [vmem:[%s1829 + $0x64] sm:$0xff]
      %v2175 = vld [vmem:[%s1829 + $0x6c] sm:$0xff]
      %v2176 = vld [vmem:[%s1829 + $0x7c] sm:$0xff]
      %v2177 = vld [vmem:[%s1829 + $0x84] sm:$0xff]
      %v2178 = vld [vmem:[%s1829 + $0x94] sm:$0xff]
      %v2179 = vld [vmem:[%s1829 + $0x9c] sm:$0xff]
      %v2180 = vld [vmem:[%s1829 + $0xac] sm:$0xff]
      %v2181 = vld [vmem:[%s1829 + $0xb4] sm:$0xff]
      %v2182 = vlaneseq
      %v2183 = vshrl.u32 %v2182, 7
      %v2184 = vsub.s32 1, %v2183
      %v2185 = vrot.slane %v1374, %v2184
      %v2186 = vmul.f32 %v2166, %v2185
      %v2187 = vmul.f32 %v2167, %v2185
      %v2188 = vmul.f32 %v2168, %v2185
      %v2189 = vmul.f32 %v2169, %v2185
      %v2190 = vmul.f32 %v2170, %v2185
      %v2191 = vmul.f32 %v2171, %v2185
      %v2192 = vmul.f32 %v2172, %v2185
      %v2193 = vmul.f32 %v2173, %v2185
      %v2194 = vmul.f32 %v2174, %v2185
      %v2195 = vmul.f32 %v2175, %v2185
      %v2196 = vmul.f32 %v2176, %v2185
      %v2197 = vmul.f32 %v2177, %v2185
      %v2198 = vmul.f32 %v2178, %v2185
      %v2199 = vmul.f32 %v2179, %v2185
      %v2200 = vmul.f32 %v2180, %v2185
      %v2201 = vmul.f32 %v2181, %v2185
      %v2202 = vadd.f32 %v2150, %v2186
      %v2203 = vadd.f32 %v2151, %v2187
      %v2204 = vadd.f32 %v2152, %v2188
      %v2205 = vadd.f32 %v2153, %v2189
      %v2206 = vadd.f32 %v2154, %v2190
      %v2207 = vadd.f32 %v2155, %v2191
      %v2208 = vadd.f32 %v2156, %v2192
      %v2209 = vadd.f32 %v2157, %v2193
      %v2210 = vadd.f32 %v2158, %v2194
      %v2211 = vadd.f32 %v2159, %v2195
      %v2212 = vadd.f32 %v2160, %v2196
      %v2213 = vadd.f32 %v2161, %v2197
      %v2214 = vadd.f32 %v2162, %v2198
      %v2215 = vadd.f32 %v2163, %v2199
      %v2216 = vadd.f32 %v2164, %v2200
      %v2217 = vadd.f32 %v2165, %v2201
      %2218 = vst.msk [vmem:[#allocation3] sm:$0xff] %vm354, %v2202
      %2219 = vst.msk [vmem:[#allocation3 + $0x8] sm:$0xff] %vm354, %v2203
      %2220 = vst.msk [vmem:[#allocation3 + $0x10] sm:$0xff] %vm354, %v2204
      %2221 = vst.msk [vmem:[#allocation3 + $0x18] sm:$0xff] %vm354, %v2205
      %2222 = vst.msk [vmem:[#allocation3 + $0x20] sm:$0xff] %vm354, %v2206
      %2223 = vst.msk [vmem:[#allocation3 + $0x28] sm:$0xff] %vm354, %v2207
      %2224 = vst.msk [vmem:[#allocation3 + $0x30] sm:$0xff] %vm354, %v2208
      %2225 = vst.msk [vmem:[#allocation3 + $0x38] sm:$0xff] %vm354, %v2209
      %2226 = vst.msk [vmem:[#allocation3 + $0x40] sm:$0xff] %vm354, %v2210
      %2227 = vst.msk [vmem:[#allocation3 + $0x48] sm:$0xff] %vm354, %v2211
      %2228 = vst.msk [vmem:[#allocation3 + $0x50] sm:$0xff] %vm354, %v2212
      %2229 = vst.msk [vmem:[#allocation3 + $0x58] sm:$0xff] %vm354, %v2213
      %2230 = vst.msk [vmem:[#allocation3 + $0x60] sm:$0xff] %vm354, %v2214
      %2231 = vst.msk [vmem:[#allocation3 + $0x68] sm:$0xff] %vm354, %v2215
      %2232 = vst.msk [vmem:[#allocation3 + $0x70] sm:$0xff] %vm354, %v2216
      %2233 = vst.msk [vmem:[#allocation3 + $0x78] sm:$0xff] %vm354, %v2217
      %v2234 = vld [vmem:[#allocation3] sm:$0xff]
      %v2235 = vld [vmem:[#allocation3 + $0x8] sm:$0xff]
      %v2236 = vld [vmem:[#allocation3 + $0x10] sm:$0xff]
      %v2237 = vld [vmem:[#allocation3 + $0x18] sm:$0xff]
      %v2238 = vld [vmem:[#allocation3 + $0x20] sm:$0xff]
      %v2239 = vld [vmem:[#allocation3 + $0x28] sm:$0xff]
      %v2240 = vld [vmem:[#allocation3 + $0x30] sm:$0xff]
      %v2241 = vld [vmem:[#allocation3 + $0x38] sm:$0xff]
      %v2242 = vld [vmem:[#allocation3 + $0x40] sm:$0xff]
      %v2243 = vld [vmem:[#allocation3 + $0x48] sm:$0xff]
      %v2244 = vld [vmem:[#allocation3 + $0x50] sm:$0xff]
      %v2245 = vld [vmem:[#allocation3 + $0x58] sm:$0xff]
      %v2246 = vld [vmem:[#allocation3 + $0x60] sm:$0xff]
      %v2247 = vld [vmem:[#allocation3 + $0x68] sm:$0xff]
      %v2248 = vld [vmem:[#allocation3 + $0x70] sm:$0xff]
      %v2249 = vld [vmem:[#allocation3 + $0x78] sm:$0xff]
      %s2250 = scalar_lea.vmem [#allocation2], 48
      %v2251 = vld [vmem:[%s2250] sm:$0xff]
      %v2252 = vld [vmem:[%s2250 + $0x8] sm:$0xff]
      %v2253 = vld [vmem:[%s2250 + $0x18] sm:$0xff]
      %v2254 = vld [vmem:[%s2250 + $0x20] sm:$0xff]
      %v2255 = vld [vmem:[%s2250 + $0x30] sm:$0xff]
      %v2256 = vld [vmem:[%s2250 + $0x38] sm:$0xff]
      %v2257 = vld [vmem:[%s2250 + $0x48] sm:$0xff]
      %v2258 = vld [vmem:[%s2250 + $0x50] sm:$0xff]
      %v2259 = vld [vmem:[%s2250 + $0x60] sm:$0xff]
      %v2260 = vld [vmem:[%s2250 + $0x68] sm:$0xff]
      %v2261 = vld [vmem:[%s2250 + $0x78] sm:$0xff]
      %v2262 = vld [vmem:[%s2250 + $0x80] sm:$0xff]
      %v2263 = vld [vmem:[%s2250 + $0x90] sm:$0xff]
      %v2264 = vld [vmem:[%s2250 + $0x98] sm:$0xff]
      %v2265 = vld [vmem:[%s2250 + $0xa8] sm:$0xff]
      %v2266 = vld [vmem:[%s2250 + $0xb0] sm:$0xff]
      %v2267 = vlaneseq
      %v2268 = vshrl.u32 %v2267, 7
      %v2269 = vsub.s32 2, %v2268
      %v2270 = vrot.slane %v1374, %v2269
      %v2271 = vmul.f32 %v2251, %v2270
      %v2272 = vmul.f32 %v2252, %v2270
      %v2273 = vmul.f32 %v2253, %v2270
      %v2274 = vmul.f32 %v2254, %v2270
      %v2275 = vmul.f32 %v2255, %v2270
      %v2276 = vmul.f32 %v2256, %v2270
      %v2277 = vmul.f32 %v2257, %v2270
      %v2278 = vmul.f32 %v2258, %v2270
      %v2279 = vmul.f32 %v2259, %v2270
      %v2280 = vmul.f32 %v2260, %v2270
      %v2281 = vmul.f32 %v2261, %v2270
      %v2282 = vmul.f32 %v2262, %v2270
      %v2283 = vmul.f32 %v2263, %v2270
      %v2284 = vmul.f32 %v2264, %v2270
      %v2285 = vmul.f32 %v2265, %v2270
      %v2286 = vmul.f32 %v2266, %v2270
      %v2287 = vadd.f32 %v2234, %v2271
      %v2288 = vadd.f32 %v2235, %v2272
      %v2289 = vadd.f32 %v2236, %v2273
      %v2290 = vadd.f32 %v2237, %v2274
      %v2291 = vadd.f32 %v2238, %v2275
      %v2292 = vadd.f32 %v2239, %v2276
      %v2293 = vadd.f32 %v2240, %v2277
      %v2294 = vadd.f32 %v2241, %v2278
      %v2295 = vadd.f32 %v2242, %v2279
      %v2296 = vadd.f32 %v2243, %v2280
      %v2297 = vadd.f32 %v2244, %v2281
      %v2298 = vadd.f32 %v2245, %v2282
      %v2299 = vadd.f32 %v2246, %v2283
      %v2300 = vadd.f32 %v2247, %v2284
      %v2301 = vadd.f32 %v2248, %v2285
      %v2302 = vadd.f32 %v2249, %v2286
      %2303 = vst.msk [vmem:[#allocation3] sm:$0xff] %vm354, %v2287
      %2304 = vst.msk [vmem:[#allocation3 + $0x8] sm:$0xff] %vm354, %v2288
      %2305 = vst.msk [vmem:[#allocation3 + $0x10] sm:$0xff] %vm354, %v2289
      %2306 = vst.msk [vmem:[#allocation3 + $0x18] sm:$0xff] %vm354, %v2290
      %2307 = vst.msk [vmem:[#allocation3 + $0x20] sm:$0xff] %vm354, %v2291
      %2308 = vst.msk [vmem:[#allocation3 + $0x28] sm:$0xff] %vm354, %v2292
      %2309 = vst.msk [vmem:[#allocation3 + $0x30] sm:$0xff] %vm354, %v2293
      %2310 = vst.msk [vmem:[#allocation3 + $0x38] sm:$0xff] %vm354, %v2294
      %2311 = vst.msk [vmem:[#allocation3 + $0x40] sm:$0xff] %vm354, %v2295
      %2312 = vst.msk [vmem:[#allocation3 + $0x48] sm:$0xff] %vm354, %v2296
      %2313 = vst.msk [vmem:[#allocation3 + $0x50] sm:$0xff] %vm354, %v2297
      %2314 = vst.msk [vmem:[#allocation3 + $0x58] sm:$0xff] %vm354, %v2298
      %2315 = vst.msk [vmem:[#allocation3 + $0x60] sm:$0xff] %vm354, %v2299
      %2316 = vst.msk [vmem:[#allocation3 + $0x68] sm:$0xff] %vm354, %v2300
      %2317 = vst.msk [vmem:[#allocation3 + $0x70] sm:$0xff] %vm354, %v2301
      %2318 = vst.msk [vmem:[#allocation3 + $0x78] sm:$0xff] %vm354, %v2302
      %v2319 = vld [vmem:[#allocation3] sm:$0xff]
      %v2320 = vld [vmem:[#allocation3 + $0x8] sm:$0xff]
      %v2321 = vld [vmem:[#allocation3 + $0x10] sm:$0xff]
      %v2322 = vld [vmem:[#allocation3 + $0x18] sm:$0xff]
      %v2323 = vld [vmem:[#allocation3 + $0x20] sm:$0xff]
      %v2324 = vld [vmem:[#allocation3 + $0x28] sm:$0xff]
      %v2325 = vld [vmem:[#allocation3 + $0x30] sm:$0xff]
      %v2326 = vld [vmem:[#allocation3 + $0x38] sm:$0xff]
      %v2327 = vld [vmem:[#allocation3 + $0x40] sm:$0xff]
      %v2328 = vld [vmem:[#allocation3 + $0x48] sm:$0xff]
      %v2329 = vld [vmem:[#allocation3 + $0x50] sm:$0xff]
      %v2330 = vld [vmem:[#allocation3 + $0x58] sm:$0xff]
      %v2331 = vld [vmem:[#allocation3 + $0x60] sm:$0xff]
      %v2332 = vld [vmem:[#allocation3 + $0x68] sm:$0xff]
      %v2333 = vld [vmem:[#allocation3 + $0x70] sm:$0xff]
      %v2334 = vld [vmem:[#allocation3 + $0x78] sm:$0xff]
      %v2335 = vld [vmem:[%s2250 + $0x1] sm:$0xff]
      %v2336 = vld [vmem:[%s2250 + $0x9] sm:$0xff]
      %v2337 = vld [vmem:[%s2250 + $0x19] sm:$0xff]
      %v2338 = vld [vmem:[%s2250 + $0x21] sm:$0xff]
      %v2339 = vld [vmem:[%s2250 + $0x31] sm:$0xff]
      %v2340 = vld [vmem:[%s2250 + $0x39] sm:$0xff]
      %v2341 = vld [vmem:[%s2250 + $0x49] sm:$0xff]
      %v2342 = vld [vmem:[%s2250 + $0x51] sm:$0xff]
      %v2343 = vld [vmem:[%s2250 + $0x61] sm:$0xff]
      %v2344 = vld [vmem:[%s2250 + $0x69] sm:$0xff]
      %v2345 = vld [vmem:[%s2250 + $0x79] sm:$0xff]
      %v2346 = vld [vmem:[%s2250 + $0x81] sm:$0xff]
      %v2347 = vld [vmem:[%s2250 + $0x91] sm:$0xff]
      %v2348 = vld [vmem:[%s2250 + $0x99] sm:$0xff]
      %v2349 = vld [vmem:[%s2250 + $0xa9] sm:$0xff]
      %v2350 = vld [vmem:[%s2250 + $0xb1] sm:$0xff]
      %v2351 = vlaneseq
      %v2352 = vshrl.u32 %v2351, 7
      %v2353 = vsub.s32 3, %v2352
      %v2354 = vrot.slane %v1374, %v2353
      %v2355 = vmul.f32 %v2335, %v2354
      %v2356 = vmul.f32 %v2336, %v2354
      %v2357 = vmul.f32 %v2337, %v2354
      %v2358 = vmul.f32 %v2338, %v2354
      %v2359 = vmul.f32 %v2339, %v2354
      %v2360 = vmul.f32 %v2340, %v2354
      %v2361 = vmul.f32 %v2341, %v2354
      %v2362 = vmul.f32 %v2342, %v2354
      %v2363 = vmul.f32 %v2343, %v2354
      %v2364 = vmul.f32 %v2344, %v2354
      %v2365 = vmul.f32 %v2345, %v2354
      %v2366 = vmul.f32 %v2346, %v2354
      %v2367 = vmul.f32 %v2347, %v2354
      %v2368 = vmul.f32 %v2348, %v2354
      %v2369 = vmul.f32 %v2349, %v2354
      %v2370 = vmul.f32 %v2350, %v2354
      %v2371 = vadd.f32 %v2319, %v2355
      %v2372 = vadd.f32 %v2320, %v2356
      %v2373 = vadd.f32 %v2321, %v2357
      %v2374 = vadd.f32 %v2322, %v2358
      %v2375 = vadd.f32 %v2323, %v2359
      %v2376 = vadd.f32 %v2324, %v2360
      %v2377 = vadd.f32 %v2325, %v2361
      %v2378 = vadd.f32 %v2326, %v2362
      %v2379 = vadd.f32 %v2327, %v2363
      %v2380 = vadd.f32 %v2328, %v2364
      %v2381 = vadd.f32 %v2329, %v2365
      %v2382 = vadd.f32 %v2330, %v2366
      %v2383 = vadd.f32 %v2331, %v2367
      %v2384 = vadd.f32 %v2332, %v2368
      %v2385 = vadd.f32 %v2333, %v2369
      %v2386 = vadd.f32 %v2334, %v2370
      %2387 = vst.msk [vmem:[#allocation3] sm:$0xff] %vm354, %v2371
      %2388 = vst.msk [vmem:[#allocation3 + $0x8] sm:$0xff] %vm354, %v2372
      %2389 = vst.msk [vmem:[#allocation3 + $0x10] sm:$0xff] %vm354, %v2373
      %2390 = vst.msk [vmem:[#allocation3 + $0x18] sm:$0xff] %vm354, %v2374
      %2391 = vst.msk [vmem:[#allocation3 + $0x20] sm:$0xff] %vm354, %v2375
      %2392 = vst.msk [vmem:[#allocation3 + $0x28] sm:$0xff] %vm354, %v2376
      %2393 = vst.msk [vmem:[#allocation3 + $0x30] sm:$0xff] %vm354, %v2377
      %2394 = vst.msk [vmem:[#allocation3 + $0x38] sm:$0xff] %vm354, %v2378
      %2395 = vst.msk [vmem:[#allocation3 + $0x40] sm:$0xff] %vm354, %v2379
      %2396 = vst.msk [vmem:[#allocation3 + $0x48] sm:$0xff] %vm354, %v2380
      %2397 = vst.msk [vmem:[#allocation3 + $0x50] sm:$0xff] %vm354, %v2381
      %2398 = vst.msk [vmem:[#allocation3 + $0x58] sm:$0xff] %vm354, %v2382
      %2399 = vst.msk [vmem:[#allocation3 + $0x60] sm:$0xff] %vm354, %v2383
      %2400 = vst.msk [vmem:[#allocation3 + $0x68] sm:$0xff] %vm354, %v2384
      %2401 = vst.msk [vmem:[#allocation3 + $0x70] sm:$0xff] %vm354, %v2385
      %2402 = vst.msk [vmem:[#allocation3 + $0x78] sm:$0xff] %vm354, %v2386
      %v2403 = vld [vmem:[#allocation3] sm:$0xff]
      %v2404 = vld [vmem:[#allocation3 + $0x8] sm:$0xff]
      %v2405 = vld [vmem:[#allocation3 + $0x10] sm:$0xff]
      %v2406 = vld [vmem:[#allocation3 + $0x18] sm:$0xff]
      %v2407 = vld [vmem:[#allocation3 + $0x20] sm:$0xff]
      %v2408 = vld [vmem:[#allocation3 + $0x28] sm:$0xff]
      %v2409 = vld [vmem:[#allocation3 + $0x30] sm:$0xff]
      %v2410 = vld [vmem:[#allocation3 + $0x38] sm:$0xff]
      %v2411 = vld [vmem:[#allocation3 + $0x40] sm:$0xff]
      %v2412 = vld [vmem:[#allocation3 + $0x48] sm:$0xff]
      %v2413 = vld [vmem:[#allocation3 + $0x50] sm:$0xff]
      %v2414 = vld [vmem:[#allocation3 + $0x58] sm:$0xff]
      %v2415 = vld [vmem:[#allocation3 + $0x60] sm:$0xff]
      %v2416 = vld [vmem:[#allocation3 + $0x68] sm:$0xff]
      %v2417 = vld [vmem:[#allocation3 + $0x70] sm:$0xff]
      %v2418 = vld [vmem:[#allocation3 + $0x78] sm:$0xff]
      %v2419 = vld [vmem:[%s2250 + $0x2] sm:$0xff]
      %v2420 = vld [vmem:[%s2250 + $0xa] sm:$0xff]
      %v2421 = vld [vmem:[%s2250 + $0x1a] sm:$0xff]
      %v2422 = vld [vmem:[%s2250 + $0x22] sm:$0xff]
      %v2423 = vld [vmem:[%s2250 + $0x32] sm:$0xff]
      %v2424 = vld [vmem:[%s2250 + $0x3a] sm:$0xff]
      %v2425 = vld [vmem:[%s2250 + $0x4a] sm:$0xff]
      %v2426 = vld [vmem:[%s2250 + $0x52] sm:$0xff]
      %v2427 = vld [vmem:[%s2250 + $0x62] sm:$0xff]
      %v2428 = vld [vmem:[%s2250 + $0x6a] sm:$0xff]
      %v2429 = vld [vmem:[%s2250 + $0x7a] sm:$0xff]
      %v2430 = vld [vmem:[%s2250 + $0x82] sm:$0xff]
      %v2431 = vld [vmem:[%s2250 + $0x92] sm:$0xff]
      %v2432 = vld [vmem:[%s2250 + $0x9a] sm:$0xff]
      %v2433 = vld [vmem:[%s2250 + $0xaa] sm:$0xff]
      %v2434 = vld [vmem:[%s2250 + $0xb2] sm:$0xff]
      %v2435 = vlaneseq
      %v2436 = vshrl.u32 %v2435, 7
      %v2437 = vsub.s32 4, %v2436
      %v2438 = vrot.slane %v1374, %v2437
      %v2439 = vmul.f32 %v2419, %v2438
      %v2440 = vmul.f32 %v2420, %v2438
      %v2441 = vmul.f32 %v2421, %v2438
      %v2442 = vmul.f32 %v2422, %v2438
      %v2443 = vmul.f32 %v2423, %v2438
      %v2444 = vmul.f32 %v2424, %v2438
      %v2445 = vmul.f32 %v2425, %v2438
      %v2446 = vmul.f32 %v2426, %v2438
      %v2447 = vmul.f32 %v2427, %v2438
      %v2448 = vmul.f32 %v2428, %v2438
      %v2449 = vmul.f32 %v2429, %v2438
      %v2450 = vmul.f32 %v2430, %v2438
      %v2451 = vmul.f32 %v2431, %v2438
      %v2452 = vmul.f32 %v2432, %v2438
      %v2453 = vmul.f32 %v2433, %v2438
      %v2454 = vmul.f32 %v2434, %v2438
      %v2455 = vadd.f32 %v2403, %v2439
      %v2456 = vadd.f32 %v2404, %v2440
      %v2457 = vadd.f32 %v2405, %v2441
      %v2458 = vadd.f32 %v2406, %v2442
      %v2459 = vadd.f32 %v2407, %v2443
      %v2460 = vadd.f32 %v2408, %v2444
      %v2461 = vadd.f32 %v2409, %v2445
      %v2462 = vadd.f32 %v2410, %v2446
      %v2463 = vadd.f32 %v2411, %v2447
      %v2464 = vadd.f32 %v2412, %v2448
      %v2465 = vadd.f32 %v2413, %v2449
      %v2466 = vadd.f32 %v2414, %v2450
      %v2467 = vadd.f32 %v2415, %v2451
      %v2468 = vadd.f32 %v2416, %v2452
      %v2469 = vadd.f32 %v2417, %v2453
      %v2470 = vadd.f32 %v2418, %v2454
      %2471 = vst.msk [vmem:[#allocation3] sm:$0xff] %vm354, %v2455
      %2472 = vst.msk [vmem:[#allocation3 + $0x8] sm:$0xff] %vm354, %v2456
      %2473 = vst.msk [vmem:[#allocation3 + $0x10] sm:$0xff] %vm354, %v2457
      %2474 = vst.msk [vmem:[#allocation3 + $0x18] sm:$0xff] %vm354, %v2458
      %2475 = vst.msk [vmem:[#allocation3 + $0x20] sm:$0xff] %vm354, %v2459
      %2476 = vst.msk [vmem:[#allocation3 + $0x28] sm:$0xff] %vm354, %v2460
      %2477 = vst.msk [vmem:[#allocation3 + $0x30] sm:$0xff] %vm354, %v2461
      %2478 = vst.msk [vmem:[#allocation3 + $0x38] sm:$0xff] %vm354, %v2462
      %2479 = vst.msk [vmem:[#allocation3 + $0x40] sm:$0xff] %vm354, %v2463
      %2480 = vst.msk [vmem:[#allocation3 + $0x48] sm:$0xff] %vm354, %v2464
      %2481 = vst.msk [vmem:[#allocation3 + $0x50] sm:$0xff] %vm354, %v2465
      %2482 = vst.msk [vmem:[#allocation3 + $0x58] sm:$0xff] %vm354, %v2466
      %2483 = vst.msk [vmem:[#allocation3 + $0x60] sm:$0xff] %vm354, %v2467
      %2484 = vst.msk [vmem:[#allocation3 + $0x68] sm:$0xff] %vm354, %v2468
      %2485 = vst.msk [vmem:[#allocation3 + $0x70] sm:$0xff] %vm354, %v2469
      %2486 = vst.msk [vmem:[#allocation3 + $0x78] sm:$0xff] %vm354, %v2470
      %v2487 = vld [vmem:[#allocation3] sm:$0xff]
      %v2488 = vld [vmem:[#allocation3 + $0x8] sm:$0xff]
      %v2489 = vld [vmem:[#allocation3 + $0x10] sm:$0xff]
      %v2490 = vld [vmem:[#allocation3 + $0x18] sm:$0xff]
      %v2491 = vld [vmem:[#allocation3 + $0x20] sm:$0xff]
      %v2492 = vld [vmem:[#allocation3 + $0x28] sm:$0xff]
      %v2493 = vld [vmem:[#allocation3 + $0x30] sm:$0xff]
      %v2494 = vld [vmem:[#allocation3 + $0x38] sm:$0xff]
      %v2495 = vld [vmem:[#allocation3 + $0x40] sm:$0xff]
      %v2496 = vld [vmem:[#allocation3 + $0x48] sm:$0xff]
      %v2497 = vld [vmem:[#allocation3 + $0x50] sm:$0xff]
      %v2498 = vld [vmem:[#allocation3 + $0x58] sm:$0xff]
      %v2499 = vld [vmem:[#allocation3 + $0x60] sm:$0xff]
      %v2500 = vld [vmem:[#allocation3 + $0x68] sm:$0xff]
      %v2501 = vld [vmem:[#allocation3 + $0x70] sm:$0xff]
      %v2502 = vld [vmem:[#allocation3 + $0x78] sm:$0xff]
      %v2503 = vld [vmem:[%s2250 + $0x3] sm:$0xff]
      %v2504 = vld [vmem:[%s2250 + $0xb] sm:$0xff]
      %v2505 = vld [vmem:[%s2250 + $0x1b] sm:$0xff]
      %v2506 = vld [vmem:[%s2250 + $0x23] sm:$0xff]
      %v2507 = vld [vmem:[%s2250 + $0x33] sm:$0xff]
      %v2508 = vld [vmem:[%s2250 + $0x3b] sm:$0xff]
      %v2509 = vld [vmem:[%s2250 + $0x4b] sm:$0xff]
      %v2510 = vld [vmem:[%s2250 + $0x53] sm:$0xff]
      %v2511 = vld [vmem:[%s2250 + $0x63] sm:$0xff]
      %v2512 = vld [vmem:[%s2250 + $0x6b] sm:$0xff]
      %v2513 = vld [vmem:[%s2250 + $0x7b] sm:$0xff]
      %v2514 = vld [vmem:[%s2250 + $0x83] sm:$0xff]
      %v2515 = vld [vmem:[%s2250 + $0x93] sm:$0xff]
      %v2516 = vld [vmem:[%s2250 + $0x9b] sm:$0xff]
      %v2517 = vld [vmem:[%s2250 + $0xab] sm:$0xff]
      %v2518 = vld [vmem:[%s2250 + $0xb3] sm:$0xff]
      %v2519 = vlaneseq
      %v2520 = vshrl.u32 %v2519, 7
      %v2521 = vsub.s32 5, %v2520
      %v2522 = vrot.slane %v1374, %v2521
      %v2523 = vmul.f32 %v2503, %v2522
      %v2524 = vmul.f32 %v2504, %v2522
      %v2525 = vmul.f32 %v2505, %v2522
      %v2526 = vmul.f32 %v2506, %v2522
      %v2527 = vmul.f32 %v2507, %v2522
      %v2528 = vmul.f32 %v2508, %v2522
      %v2529 = vmul.f32 %v2509, %v2522
      %v2530 = vmul.f32 %v2510, %v2522
      %v2531 = vmul.f32 %v2511, %v2522
      %v2532 = vmul.f32 %v2512, %v2522
      %v2533 = vmul.f32 %v2513, %v2522
      %v2534 = vmul.f32 %v2514, %v2522
      %v2535 = vmul.f32 %v2515, %v2522
      %v2536 = vmul.f32 %v2516, %v2522
      %v2537 = vmul.f32 %v2517, %v2522
      %v2538 = vmul.f32 %v2518, %v2522
      %v2539 = vadd.f32 %v2487, %v2523
      %v2540 = vadd.f32 %v2488, %v2524
      %v2541 = vadd.f32 %v2489, %v2525
      %v2542 = vadd.f32 %v2490, %v2526
      %v2543 = vadd.f32 %v2491, %v2527
      %v2544 = vadd.f32 %v2492, %v2528
      %v2545 = vadd.f32 %v2493, %v2529
      %v2546 = vadd.f32 %v2494, %v2530
      %v2547 = vadd.f32 %v2495, %v2531
      %v2548 = vadd.f32 %v2496, %v2532
      %v2549 = vadd.f32 %v2497, %v2533
      %v2550 = vadd.f32 %v2498, %v2534
      %v2551 = vadd.f32 %v2499, %v2535
      %v2552 = vadd.f32 %v2500, %v2536
      %v2553 = vadd.f32 %v2501, %v2537
      %v2554 = vadd.f32 %v2502, %v2538
      %2555 = vst.msk [vmem:[#allocation3] sm:$0xff] %vm354, %v2539
      %2556 = vst.msk [vmem:[#allocation3 + $0x8] sm:$0xff] %vm354, %v2540
      %2557 = vst.msk [vmem:[#allocation3 + $0x10] sm:$0xff] %vm354, %v2541
      %2558 = vst.msk [vmem:[#allocation3 + $0x18] sm:$0xff] %vm354, %v2542
      %2559 = vst.msk [vmem:[#allocation3 + $0x20] sm:$0xff] %vm354, %v2543
      %2560 = vst.msk [vmem:[#allocation3 + $0x28] sm:$0xff] %vm354, %v2544
      %2561 = vst.msk [vmem:[#allocation3 + $0x30] sm:$0xff] %vm354, %v2545
      %2562 = vst.msk [vmem:[#allocation3 + $0x38] sm:$0xff] %vm354, %v2546
      %2563 = vst.msk [vmem:[#allocation3 + $0x40] sm:$0xff] %vm354, %v2547
      %2564 = vst.msk [vmem:[#allocation3 + $0x48] sm:$0xff] %vm354, %v2548
      %2565 = vst.msk [vmem:[#allocation3 + $0x50] sm:$0xff] %vm354, %v2549
      %2566 = vst.msk [vmem:[#allocation3 + $0x58] sm:$0xff] %vm354, %v2550
      %2567 = vst.msk [vmem:[#allocation3 + $0x60] sm:$0xff] %vm354, %v2551
      %2568 = vst.msk [vmem:[#allocation3 + $0x68] sm:$0xff] %vm354, %v2552
      %2569 = vst.msk [vmem:[#allocation3 + $0x70] sm:$0xff] %vm354, %v2553
      %2570 = vst.msk [vmem:[#allocation3 + $0x78] sm:$0xff] %vm354, %v2554
      %v2571 = vld [vmem:[#allocation3] sm:$0xff]
      %v2572 = vld [vmem:[#allocation3 + $0x8] sm:$0xff]
      %v2573 = vld [vmem:[#allocation3 + $0x10] sm:$0xff]
      %v2574 = vld [vmem:[#allocation3 + $0x18] sm:$0xff]
      %v2575 = vld [vmem:[#allocation3 + $0x20] sm:$0xff]
      %v2576 = vld [vmem:[#allocation3 + $0x28] sm:$0xff]
      %v2577 = vld [vmem:[#allocation3 + $0x30] sm:$0xff]
      %v2578 = vld [vmem:[#allocation3 + $0x38] sm:$0xff]
      %v2579 = vld [vmem:[#allocation3 + $0x40] sm:$0xff]
      %v2580 = vld [vmem:[#allocation3 + $0x48] sm:$0xff]
      %v2581 = vld [vmem:[#allocation3 + $0x50] sm:$0xff]
      %v2582 = vld [vmem:[#allocation3 + $0x58] sm:$0xff]
      %v2583 = vld [vmem:[#allocation3 + $0x60] sm:$0xff]
      %v2584 = vld [vmem:[#allocation3 + $0x68] sm:$0xff]
      %v2585 = vld [vmem:[#allocation3 + $0x70] sm:$0xff]
      %v2586 = vld [vmem:[#allocation3 + $0x78] sm:$0xff]
      %v2587 = vld [vmem:[%s2250 + $0x4] sm:$0xff]
      %v2588 = vld [vmem:[%s2250 + $0xc] sm:$0xff]
      %v2589 = vld [vmem:[%s2250 + $0x1c] sm:$0xff]
      %v2590 = vld [vmem:[%s2250 + $0x24] sm:$0xff]
      %v2591 = vld [vmem:[%s2250 + $0x34] sm:$0xff]
      %v2592 = vld [vmem:[%s2250 + $0x3c] sm:$0xff]
      %v2593 = vld [vmem:[%s2250 + $0x4c] sm:$0xff]
      %v2594 = vld [vmem:[%s2250 + $0x54] sm:$0xff]
      %v2595 = vld [vmem:[%s2250 + $0x64] sm:$0xff]
      %v2596 = vld [vmem:[%s2250 + $0x6c] sm:$0xff]
      %v2597 = vld [vmem:[%s2250 + $0x7c] sm:$0xff]
      %v2598 = vld [vmem:[%s2250 + $0x84] sm:$0xff]
      %v2599 = vld [vmem:[%s2250 + $0x94] sm:$0xff]
      %v2600 = vld [vmem:[%s2250 + $0x9c] sm:$0xff]
      %v2601 = vld [vmem:[%s2250 + $0xac] sm:$0xff]
      %v2602 = vld [vmem:[%s2250 + $0xb4] sm:$0xff]
      %v2603 = vlaneseq
      %v2604 = vshrl.u32 %v2603, 7
      %v2605 = vsub.s32 6, %v2604
      %v2606 = vrot.slane %v1374, %v2605
      %v2607 = vmul.f32 %v2587, %v2606
      %v2608 = vmul.f32 %v2588, %v2606
      %v2609 = vmul.f32 %v2589, %v2606
      %v2610 = vmul.f32 %v2590, %v2606
      %v2611 = vmul.f32 %v2591, %v2606
      %v2612 = vmul.f32 %v2592, %v2606
      %v2613 = vmul.f32 %v2593, %v2606
      %v2614 = vmul.f32 %v2594, %v2606
      %v2615 = vmul.f32 %v2595, %v2606
      %v2616 = vmul.f32 %v2596, %v2606
      %v2617 = vmul.f32 %v2597, %v2606
      %v2618 = vmul.f32 %v2598, %v2606
      %v2619 = vmul.f32 %v2599, %v2606
      %v2620 = vmul.f32 %v2600, %v2606
      %v2621 = vmul.f32 %v2601, %v2606
      %v2622 = vmul.f32 %v2602, %v2606
      %v2623 = vadd.f32 %v2571, %v2607
      %v2624 = vadd.f32 %v2572, %v2608
      %v2625 = vadd.f32 %v2573, %v2609
      %v2626 = vadd.f32 %v2574, %v2610
      %v2627 = vadd.f32 %v2575, %v2611
      %v2628 = vadd.f32 %v2576, %v2612
      %v2629 = vadd.f32 %v2577, %v2613
      %v2630 = vadd.f32 %v2578, %v2614
      %v2631 = vadd.f32 %v2579, %v2615
      %v2632 = vadd.f32 %v2580, %v2616
      %v2633 = vadd.f32 %v2581, %v2617
      %v2634 = vadd.f32 %v2582, %v2618
      %v2635 = vadd.f32 %v2583, %v2619
      %v2636 = vadd.f32 %v2584, %v2620
      %v2637 = vadd.f32 %v2585, %v2621
      %v2638 = vadd.f32 %v2586, %v2622
      %2639 = vst.msk [vmem:[#allocation3] sm:$0xff] %vm354, %v2623
      %2640 = vst.msk [vmem:[#allocation3 + $0x8] sm:$0xff] %vm354, %v2624
      %2641 = vst.msk [vmem:[#allocation3 + $0x10] sm:$0xff] %vm354, %v2625
      %2642 = vst.msk [vmem:[#allocation3 + $0x18] sm:$0xff] %vm354, %v2626
      %2643 = vst.msk [vmem:[#allocation3 + $0x20] sm:$0xff] %vm354, %v2627
      %2644 = vst.msk [vmem:[#allocation3 + $0x28] sm:$0xff] %vm354, %v2628
      %2645 = vst.msk [vmem:[#allocation3 + $0x30] sm:$0xff] %vm354, %v2629
      %2646 = vst.msk [vmem:[#allocation3 + $0x38] sm:$0xff] %vm354, %v2630
      %2647 = vst.msk [vmem:[#allocation3 + $0x40] sm:$0xff] %vm354, %v2631
      %2648 = vst.msk [vmem:[#allocation3 + $0x48] sm:$0xff] %vm354, %v2632
      %2649 = vst.msk [vmem:[#allocation3 + $0x50] sm:$0xff] %vm354, %v2633
      %2650 = vst.msk [vmem:[#allocation3 + $0x58] sm:$0xff] %vm354, %v2634
      %2651 = vst.msk [vmem:[#allocation3 + $0x60] sm:$0xff] %vm354, %v2635
      %2652 = vst.msk [vmem:[#allocation3 + $0x68] sm:$0xff] %vm354, %v2636
      %2653 = vst.msk [vmem:[#allocation3 + $0x70] sm:$0xff] %vm354, %v2637
      %2654 = vst.msk [vmem:[#allocation3 + $0x78] sm:$0xff] %vm354, %v2638
      %v2655 = vld [vmem:[#allocation3] sm:$0xff]
      %v2656 = vld [vmem:[#allocation3 + $0x8] sm:$0xff]
      %v2657 = vld [vmem:[#allocation3 + $0x10] sm:$0xff]
      %v2658 = vld [vmem:[#allocation3 + $0x18] sm:$0xff]
      %v2659 = vld [vmem:[#allocation3 + $0x20] sm:$0xff]
      %v2660 = vld [vmem:[#allocation3 + $0x28] sm:$0xff]
      %v2661 = vld [vmem:[#allocation3 + $0x30] sm:$0xff]
      %v2662 = vld [vmem:[#allocation3 + $0x38] sm:$0xff]
      %v2663 = vld [vmem:[#allocation3 + $0x40] sm:$0xff]
      %v2664 = vld [vmem:[#allocation3 + $0x48] sm:$0xff]
      %v2665 = vld [vmem:[#allocation3 + $0x50] sm:$0xff]
      %v2666 = vld [vmem:[#allocation3 + $0x58] sm:$0xff]
      %v2667 = vld [vmem:[#allocation3 + $0x60] sm:$0xff]
      %v2668 = vld [vmem:[#allocation3 + $0x68] sm:$0xff]
      %v2669 = vld [vmem:[#allocation3 + $0x70] sm:$0xff]
      %v2670 = vld [vmem:[#allocation3 + $0x78] sm:$0xff]
      %s2671 = scalar_lea.vmem [#allocation2], 72
      %v2672 = vld [vmem:[%s2671] sm:$0xff]
      %v2673 = vld [vmem:[%s2671 + $0x8] sm:$0xff]
      %v2674 = vld [vmem:[%s2671 + $0x18] sm:$0xff]
      %v2675 = vld [vmem:[%s2671 + $0x20] sm:$0xff]
      %v2676 = vld [vmem:[%s2671 + $0x30] sm:$0xff]
      %v2677 = vld [vmem:[%s2671 + $0x38] sm:$0xff]
      %v2678 = vld [vmem:[%s2671 + $0x48] sm:$0xff]
      %v2679 = vld [vmem:[%s2671 + $0x50] sm:$0xff]
      %v2680 = vld [vmem:[%s2671 + $0x60] sm:$0xff]
      %v2681 = vld [vmem:[%s2671 + $0x68] sm:$0xff]
      %v2682 = vld [vmem:[%s2671 + $0x78] sm:$0xff]
      %v2683 = vld [vmem:[%s2671 + $0x80] sm:$0xff]
      %v2684 = vld [vmem:[%s2671 + $0x90] sm:$0xff]
      %v2685 = vld [vmem:[%s2671 + $0x98] sm:$0xff]
      %v2686 = vld [vmem:[%s2671 + $0xa8] sm:$0xff]
      %v2687 = vld [vmem:[%s2671 + $0xb0] sm:$0xff]
      %v2688 = vlaneseq
      %v2689 = vshrl.u32 %v2688, 7
      %v2690 = vsub.s32 7, %v2689
      %v2691 = vrot.slane %v1374, %v2690
      %v2692 = vmul.f32 %v2672, %v2691
      %v2693 = vmul.f32 %v2673, %v2691
      %v2694 = vmul.f32 %v2674, %v2691
      %v2695 = vmul.f32 %v2675, %v2691
      %v2696 = vmul.f32 %v2676, %v2691
      %v2697 = vmul.f32 %v2677, %v2691
      %v2698 = vmul.f32 %v2678, %v2691
      %v2699 = vmul.f32 %v2679, %v2691
      %v2700 = vmul.f32 %v2680, %v2691
      %v2701 = vmul.f32 %v2681, %v2691
      %v2702 = vmul.f32 %v2682, %v2691
      %v2703 = vmul.f32 %v2683, %v2691
      %v2704 = vmul.f32 %v2684, %v2691
      %v2705 = vmul.f32 %v2685, %v2691
      %v2706 = vmul.f32 %v2686, %v2691
      %v2707 = vmul.f32 %v2687, %v2691
      %v2708 = vadd.f32 %v2655, %v2692
      %v2709 = vadd.f32 %v2656, %v2693
      %v2710 = vadd.f32 %v2657, %v2694
      %v2711 = vadd.f32 %v2658, %v2695
      %v2712 = vadd.f32 %v2659, %v2696
      %v2713 = vadd.f32 %v2660, %v2697
      %v2714 = vadd.f32 %v2661, %v2698
      %v2715 = vadd.f32 %v2662, %v2699
      %v2716 = vadd.f32 %v2663, %v2700
      %v2717 = vadd.f32 %v2664, %v2701
      %v2718 = vadd.f32 %v2665, %v2702
      %v2719 = vadd.f32 %v2666, %v2703
      %v2720 = vadd.f32 %v2667, %v2704
      %v2721 = vadd.f32 %v2668, %v2705
      %v2722 = vadd.f32 %v2669, %v2706
      %v2723 = vadd.f32 %v2670, %v2707
      %2724 = vst.msk [vmem:[#allocation3] sm:$0xff] %vm354, %v2708
      %2725 = vst.msk [vmem:[#allocation3 + $0x8] sm:$0xff] %vm354, %v2709
      %2726 = vst.msk [vmem:[#allocation3 + $0x10] sm:$0xff] %vm354, %v2710
      %2727 = vst.msk [vmem:[#allocation3 + $0x18] sm:$0xff] %vm354, %v2711
      %2728 = vst.msk [vmem:[#allocation3 + $0x20] sm:$0xff] %vm354, %v2712
      %2729 = vst.msk [vmem:[#allocation3 + $0x28] sm:$0xff] %vm354, %v2713
      %2730 = vst.msk [vmem:[#allocation3 + $0x30] sm:$0xff] %vm354, %v2714
      %2731 = vst.msk [vmem:[#allocation3 + $0x38] sm:$0xff] %vm354, %v2715
      %2732 = vst.msk [vmem:[#allocation3 + $0x40] sm:$0xff] %vm354, %v2716
      %2733 = vst.msk [vmem:[#allocation3 + $0x48] sm:$0xff] %vm354, %v2717
      %2734 = vst.msk [vmem:[#allocation3 + $0x50] sm:$0xff] %vm354, %v2718
      %2735 = vst.msk [vmem:[#allocation3 + $0x58] sm:$0xff] %vm354, %v2719
      %2736 = vst.msk [vmem:[#allocation3 + $0x60] sm:$0xff] %vm354, %v2720
      %2737 = vst.msk [vmem:[#allocation3 + $0x68] sm:$0xff] %vm354, %v2721
      %2738 = vst.msk [vmem:[#allocation3 + $0x70] sm:$0xff] %vm354, %v2722
      %2739 = vst.msk [vmem:[#allocation3 + $0x78] sm:$0xff] %vm354, %v2723
      %v2740 = vld [vmem:[#allocation3] sm:$0xff]
      %v2741 = vld [vmem:[#allocation3 + $0x8] sm:$0xff]
      %v2742 = vld [vmem:[#allocation3 + $0x10] sm:$0xff]
      %v2743 = vld [vmem:[#allocation3 + $0x18] sm:$0xff]
      %v2744 = vld [vmem:[#allocation3 + $0x20] sm:$0xff]
      %v2745 = vld [vmem:[#allocation3 + $0x28] sm:$0xff]
      %v2746 = vld [vmem:[#allocation3 + $0x30] sm:$0xff]
      %v2747 = vld [vmem:[#allocation3 + $0x38] sm:$0xff]
      %v2748 = vld [vmem:[#allocation3 + $0x40] sm:$0xff]
      %v2749 = vld [vmem:[#allocation3 + $0x48] sm:$0xff]
      %v2750 = vld [vmem:[#allocation3 + $0x50] sm:$0xff]
      %v2751 = vld [vmem:[#allocation3 + $0x58] sm:$0xff]
      %v2752 = vld [vmem:[#allocation3 + $0x60] sm:$0xff]
      %v2753 = vld [vmem:[#allocation3 + $0x68] sm:$0xff]
      %v2754 = vld [vmem:[#allocation3 + $0x70] sm:$0xff]
      %v2755 = vld [vmem:[#allocation3 + $0x78] sm:$0xff]
      %v2756 = vld [vmem:[%s2671 + $0x1] sm:$0xff]
      %v2757 = vld [vmem:[%s2671 + $0x9] sm:$0xff]
      %v2758 = vld [vmem:[%s2671 + $0x19] sm:$0xff]
      %v2759 = vld [vmem:[%s2671 + $0x21] sm:$0xff]
      %v2760 = vld [vmem:[%s2671 + $0x31] sm:$0xff]
      %v2761 = vld [vmem:[%s2671 + $0x39] sm:$0xff]
      %v2762 = vld [vmem:[%s2671 + $0x49] sm:$0xff]
      %v2763 = vld [vmem:[%s2671 + $0x51] sm:$0xff]
      %v2764 = vld [vmem:[%s2671 + $0x61] sm:$0xff]
      %v2765 = vld [vmem:[%s2671 + $0x69] sm:$0xff]
      %v2766 = vld [vmem:[%s2671 + $0x79] sm:$0xff]
      %v2767 = vld [vmem:[%s2671 + $0x81] sm:$0xff]
      %v2768 = vld [vmem:[%s2671 + $0x91] sm:$0xff]
      %v2769 = vld [vmem:[%s2671 + $0x99] sm:$0xff]
      %v2770 = vld [vmem:[%s2671 + $0xa9] sm:$0xff]
      %v2771 = vld [vmem:[%s2671 + $0xb1] sm:$0xff]
      %v2772 = vlaneseq
      %v2773 = vshrl.u32 %v2772, 7
      %v2774 = vsub.s32 0, %v2773
      %v2775 = vrot.slane %v1375, %v2774
      %v2776 = vmul.f32 %v2756, %v2775
      %v2777 = vmul.f32 %v2757, %v2775
      %v2778 = vmul.f32 %v2758, %v2775
      %v2779 = vmul.f32 %v2759, %v2775
      %v2780 = vmul.f32 %v2760, %v2775
      %v2781 = vmul.f32 %v2761, %v2775
      %v2782 = vmul.f32 %v2762, %v2775
      %v2783 = vmul.f32 %v2763, %v2775
      %v2784 = vmul.f32 %v2764, %v2775
      %v2785 = vmul.f32 %v2765, %v2775
      %v2786 = vmul.f32 %v2766, %v2775
      %v2787 = vmul.f32 %v2767, %v2775
      %v2788 = vmul.f32 %v2768, %v2775
      %v2789 = vmul.f32 %v2769, %v2775
      %v2790 = vmul.f32 %v2770, %v2775
      %v2791 = vmul.f32 %v2771, %v2775
      %v2792 = vadd.f32 %v2740, %v2776
      %v2793 = vadd.f32 %v2741, %v2777
      %v2794 = vadd.f32 %v2742, %v2778
      %v2795 = vadd.f32 %v2743, %v2779
      %v2796 = vadd.f32 %v2744, %v2780
      %v2797 = vadd.f32 %v2745, %v2781
      %v2798 = vadd.f32 %v2746, %v2782
      %v2799 = vadd.f32 %v2747, %v2783
      %v2800 = vadd.f32 %v2748, %v2784
      %v2801 = vadd.f32 %v2749, %v2785
      %v2802 = vadd.f32 %v2750, %v2786
      %v2803 = vadd.f32 %v2751, %v2787
      %v2804 = vadd.f32 %v2752, %v2788
      %v2805 = vadd.f32 %v2753, %v2789
      %v2806 = vadd.f32 %v2754, %v2790
      %v2807 = vadd.f32 %v2755, %v2791
      %2808 = vst.msk [vmem:[#allocation3] sm:$0xff] %vm354, %v2792
      %2809 = vst.msk [vmem:[#allocation3 + $0x8] sm:$0xff] %vm354, %v2793
      %2810 = vst.msk [vmem:[#allocation3 + $0x10] sm:$0xff] %vm354, %v2794
      %2811 = vst.msk [vmem:[#allocation3 + $0x18] sm:$0xff] %vm354, %v2795
      %2812 = vst.msk [vmem:[#allocation3 + $0x20] sm:$0xff] %vm354, %v2796
      %2813 = vst.msk [vmem:[#allocation3 + $0x28] sm:$0xff] %vm354, %v2797
      %2814 = vst.msk [vmem:[#allocation3 + $0x30] sm:$0xff] %vm354, %v2798
      %2815 = vst.msk [vmem:[#allocation3 + $0x38] sm:$0xff] %vm354, %v2799
      %2816 = vst.msk [vmem:[#allocation3 + $0x40] sm:$0xff] %vm354, %v2800
      %2817 = vst.msk [vmem:[#allocation3 + $0x48] sm:$0xff] %vm354, %v2801
      %2818 = vst.msk [vmem:[#allocation3 + $0x50] sm:$0xff] %vm354, %v2802
      %2819 = vst.msk [vmem:[#allocation3 + $0x58] sm:$0xff] %vm354, %v2803
      %2820 = vst.msk [vmem:[#allocation3 + $0x60] sm:$0xff] %vm354, %v2804
      %2821 = vst.msk [vmem:[#allocation3 + $0x68] sm:$0xff] %vm354, %v2805
      %2822 = vst.msk [vmem:[#allocation3 + $0x70] sm:$0xff] %vm354, %v2806
      %2823 = vst.msk [vmem:[#allocation3 + $0x78] sm:$0xff] %vm354, %v2807
      %v2824 = vld [vmem:[#allocation3] sm:$0xff]
      %v2825 = vld [vmem:[#allocation3 + $0x8] sm:$0xff]
      %v2826 = vld [vmem:[#allocation3 + $0x10] sm:$0xff]
      %v2827 = vld [vmem:[#allocation3 + $0x18] sm:$0xff]
      %v2828 = vld [vmem:[#allocation3 + $0x20] sm:$0xff]
      %v2829 = vld [vmem:[#allocation3 + $0x28] sm:$0xff]
      %v2830 = vld [vmem:[#allocation3 + $0x30] sm:$0xff]
      %v2831 = vld [vmem:[#allocation3 + $0x38] sm:$0xff]
      %v2832 = vld [vmem:[#allocation3 + $0x40] sm:$0xff]
      %v2833 = vld [vmem:[#allocation3 + $0x48] sm:$0xff]
      %v2834 = vld [vmem:[#allocation3 + $0x50] sm:$0xff]
      %v2835 = vld [vmem:[#allocation3 + $0x58] sm:$0xff]
      %v2836 = vld [vmem:[#allocation3 + $0x60] sm:$0xff]
      %v2837 = vld [vmem:[#allocation3 + $0x68] sm:$0xff]
      %v2838 = vld [vmem:[#allocation3 + $0x70] sm:$0xff]
      %v2839 = vld [vmem:[#allocation3 + $0x78] sm:$0xff]
      %v2840 = vld [vmem:[%s2671 + $0x2] sm:$0xff]
      %v2841 = vld [vmem:[%s2671 + $0xa] sm:$0xff]
      %v2842 = vld [vmem:[%s2671 + $0x1a] sm:$0xff]
      %v2843 = vld [vmem:[%s2671 + $0x22] sm:$0xff]
      %v2844 = vld [vmem:[%s2671 + $0x32] sm:$0xff]
      %v2845 = vld [vmem:[%s2671 + $0x3a] sm:$0xff]
      %v2846 = vld [vmem:[%s2671 + $0x4a] sm:$0xff]
      %v2847 = vld [vmem:[%s2671 + $0x52] sm:$0xff]
      %v2848 = vld [vmem:[%s2671 + $0x62] sm:$0xff]
      %v2849 = vld [vmem:[%s2671 + $0x6a] sm:$0xff]
      %v2850 = vld [vmem:[%s2671 + $0x7a] sm:$0xff]
      %v2851 = vld [vmem:[%s2671 + $0x82] sm:$0xff]
      %v2852 = vld [vmem:[%s2671 + $0x92] sm:$0xff]
      %v2853 = vld [vmem:[%s2671 + $0x9a] sm:$0xff]
      %v2854 = vld [vmem:[%s2671 + $0xaa] sm:$0xff]
      %v2855 = vld [vmem:[%s2671 + $0xb2] sm:$0xff]
      %v2856 = vlaneseq
      %v2857 = vshrl.u32 %v2856, 7
      %v2858 = vsub.s32 1, %v2857
      %v2859 = vrot.slane %v1375, %v2858
      %v2860 = vmul.f32 %v2840, %v2859
      %v2861 = vmul.f32 %v2841, %v2859
      %v2862 = vmul.f32 %v2842, %v2859
      %v2863 = vmul.f32 %v2843, %v2859
      %v2864 = vmul.f32 %v2844, %v2859
      %v2865 = vmul.f32 %v2845, %v2859
      %v2866 = vmul.f32 %v2846, %v2859
      %v2867 = vmul.f32 %v2847, %v2859
      %v2868 = vmul.f32 %v2848, %v2859
      %v2869 = vmul.f32 %v2849, %v2859
      %v2870 = vmul.f32 %v2850, %v2859
      %v2871 = vmul.f32 %v2851, %v2859
      %v2872 = vmul.f32 %v2852, %v2859
      %v2873 = vmul.f32 %v2853, %v2859
      %v2874 = vmul.f32 %v2854, %v2859
      %v2875 = vmul.f32 %v2855, %v2859
      %v2876 = vadd.f32 %v2824, %v2860
      %v2877 = vadd.f32 %v2825, %v2861
      %v2878 = vadd.f32 %v2826, %v2862
      %v2879 = vadd.f32 %v2827, %v2863
      %v2880 = vadd.f32 %v2828, %v2864
      %v2881 = vadd.f32 %v2829, %v2865
      %v2882 = vadd.f32 %v2830, %v2866
      %v2883 = vadd.f32 %v2831, %v2867
      %v2884 = vadd.f32 %v2832, %v2868
      %v2885 = vadd.f32 %v2833, %v2869
      %v2886 = vadd.f32 %v2834, %v2870
      %v2887 = vadd.f32 %v2835, %v2871
      %v2888 = vadd.f32 %v2836, %v2872
      %v2889 = vadd.f32 %v2837, %v2873
      %v2890 = vadd.f32 %v2838, %v2874
      %v2891 = vadd.f32 %v2839, %v2875
      %2892 = vst.msk [vmem:[#allocation3] sm:$0xff] %vm354, %v2876
      %2893 = vst.msk [vmem:[#allocation3 + $0x8] sm:$0xff] %vm354, %v2877
      %2894 = vst.msk [vmem:[#allocation3 + $0x10] sm:$0xff] %vm354, %v2878
      %2895 = vst.msk [vmem:[#allocation3 + $0x18] sm:$0xff] %vm354, %v2879
      %2896 = vst.msk [vmem:[#allocation3 + $0x20] sm:$0xff] %vm354, %v2880
      %2897 = vst.msk [vmem:[#allocation3 + $0x28] sm:$0xff] %vm354, %v2881
      %2898 = vst.msk [vmem:[#allocation3 + $0x30] sm:$0xff] %vm354, %v2882
      %2899 = vst.msk [vmem:[#allocation3 + $0x38] sm:$0xff] %vm354, %v2883
      %2900 = vst.msk [vmem:[#allocation3 + $0x40] sm:$0xff] %vm354, %v2884
      %2901 = vst.msk [vmem:[#allocation3 + $0x48] sm:$0xff] %vm354, %v2885
      %2902 = vst.msk [vmem:[#allocation3 + $0x50] sm:$0xff] %vm354, %v2886
      %2903 = vst.msk [vmem:[#allocation3 + $0x58] sm:$0xff] %vm354, %v2887
      %2904 = vst.msk [vmem:[#allocation3 + $0x60] sm:$0xff] %vm354, %v2888
      %2905 = vst.msk [vmem:[#allocation3 + $0x68] sm:$0xff] %vm354, %v2889
      %2906 = vst.msk [vmem:[#allocation3 + $0x70] sm:$0xff] %vm354, %v2890
      %2907 = vst.msk [vmem:[#allocation3 + $0x78] sm:$0xff] %vm354, %v2891
      %v2908 = vld [vmem:[#allocation3] sm:$0xff]
      %v2909 = vld [vmem:[#allocation3 + $0x8] sm:$0xff]
      %v2910 = vld [vmem:[#allocation3 + $0x10] sm:$0xff]
      %v2911 = vld [vmem:[#allocation3 + $0x18] sm:$0xff]
      %v2912 = vld [vmem:[#allocation3 + $0x20] sm:$0xff]
      %v2913 = vld [vmem:[#allocation3 + $0x28] sm:$0xff]
      %v2914 = vld [vmem:[#allocation3 + $0x30] sm:$0xff]
      %v2915 = vld [vmem:[#allocation3 + $0x38] sm:$0xff]
      %v2916 = vld [vmem:[#allocation3 + $0x40] sm:$0xff]
      %v2917 = vld [vmem:[#allocation3 + $0x48] sm:$0xff]
      %v2918 = vld [vmem:[#allocation3 + $0x50] sm:$0xff]
      %v2919 = vld [vmem:[#allocation3 + $0x58] sm:$0xff]
      %v2920 = vld [vmem:[#allocation3 + $0x60] sm:$0xff]
      %v2921 = vld [vmem:[#allocation3 + $0x68] sm:$0xff]
      %v2922 = vld [vmem:[#allocation3 + $0x70] sm:$0xff]
      %v2923 = vld [vmem:[#allocation3 + $0x78] sm:$0xff]
      %v2924 = vld [vmem:[%s2671 + $0x3] sm:$0xff]
      %v2925 = vld [vmem:[%s2671 + $0xb] sm:$0xff]
      %v2926 = vld [vmem:[%s2671 + $0x1b] sm:$0xff]
      %v2927 = vld [vmem:[%s2671 + $0x23] sm:$0xff]
      %v2928 = vld [vmem:[%s2671 + $0x33] sm:$0xff]
      %v2929 = vld [vmem:[%s2671 + $0x3b] sm:$0xff]
      %v2930 = vld [vmem:[%s2671 + $0x4b] sm:$0xff]
      %v2931 = vld [vmem:[%s2671 + $0x53] sm:$0xff]
      %v2932 = vld [vmem:[%s2671 + $0x63] sm:$0xff]
      %v2933 = vld [vmem:[%s2671 + $0x6b] sm:$0xff]
      %v2934 = vld [vmem:[%s2671 + $0x7b] sm:$0xff]
      %v2935 = vld [vmem:[%s2671 + $0x83] sm:$0xff]
      %v2936 = vld [vmem:[%s2671 + $0x93] sm:$0xff]
      %v2937 = vld [vmem:[%s2671 + $0x9b] sm:$0xff]
      %v2938 = vld [vmem:[%s2671 + $0xab] sm:$0xff]
      %v2939 = vld [vmem:[%s2671 + $0xb3] sm:$0xff]
      %v2940 = vlaneseq
      %v2941 = vshrl.u32 %v2940, 7
      %v2942 = vsub.s32 2, %v2941
      %v2943 = vrot.slane %v1375, %v2942
      %v2944 = vmul.f32 %v2924, %v2943
      %v2945 = vmul.f32 %v2925, %v2943
      %v2946 = vmul.f32 %v2926, %v2943
      %v2947 = vmul.f32 %v2927, %v2943
      %v2948 = vmul.f32 %v2928, %v2943
      %v2949 = vmul.f32 %v2929, %v2943
      %v2950 = vmul.f32 %v2930, %v2943
      %v2951 = vmul.f32 %v2931, %v2943
      %v2952 = vmul.f32 %v2932, %v2943
      %v2953 = vmul.f32 %v2933, %v2943
      %v2954 = vmul.f32 %v2934, %v2943
      %v2955 = vmul.f32 %v2935, %v2943
      %v2956 = vmul.f32 %v2936, %v2943
      %v2957 = vmul.f32 %v2937, %v2943
      %v2958 = vmul.f32 %v2938, %v2943
      %v2959 = vmul.f32 %v2939, %v2943
      %v2960 = vadd.f32 %v2908, %v2944
      %v2961 = vadd.f32 %v2909, %v2945
      %v2962 = vadd.f32 %v2910, %v2946
      %v2963 = vadd.f32 %v2911, %v2947
      %v2964 = vadd.f32 %v2912, %v2948
      %v2965 = vadd.f32 %v2913, %v2949
      %v2966 = vadd.f32 %v2914, %v2950
      %v2967 = vadd.f32 %v2915, %v2951
      %v2968 = vadd.f32 %v2916, %v2952
      %v2969 = vadd.f32 %v2917, %v2953
      %v2970 = vadd.f32 %v2918, %v2954
      %v2971 = vadd.f32 %v2919, %v2955
      %v2972 = vadd.f32 %v2920, %v2956
      %v2973 = vadd.f32 %v2921, %v2957
      %v2974 = vadd.f32 %v2922, %v2958
      %v2975 = vadd.f32 %v2923, %v2959
      %2976 = vst.msk [vmem:[#allocation3] sm:$0xff] %vm354, %v2960
      %2977 = vst.msk [vmem:[#allocation3 + $0x8] sm:$0xff] %vm354, %v2961
      %2978 = vst.msk [vmem:[#allocation3 + $0x10] sm:$0xff] %vm354, %v2962
      %2979 = vst.msk [vmem:[#allocation3 + $0x18] sm:$0xff] %vm354, %v2963
      %2980 = vst.msk [vmem:[#allocation3 + $0x20] sm:$0xff] %vm354, %v2964
      %2981 = vst.msk [vmem:[#allocation3 + $0x28] sm:$0xff] %vm354, %v2965
      %2982 = vst.msk [vmem:[#allocation3 + $0x30] sm:$0xff] %vm354, %v2966
      %2983 = vst.msk [vmem:[#allocation3 + $0x38] sm:$0xff] %vm354, %v2967
      %2984 = vst.msk [vmem:[#allocation3 + $0x40] sm:$0xff] %vm354, %v2968
      %2985 = vst.msk [vmem:[#allocation3 + $0x48] sm:$0xff] %vm354, %v2969
      %2986 = vst.msk [vmem:[#allocation3 + $0x50] sm:$0xff] %vm354, %v2970
      %2987 = vst.msk [vmem:[#allocation3 + $0x58] sm:$0xff] %vm354, %v2971
      %2988 = vst.msk [vmem:[#allocation3 + $0x60] sm:$0xff] %vm354, %v2972
      %2989 = vst.msk [vmem:[#allocation3 + $0x68] sm:$0xff] %vm354, %v2973
      %2990 = vst.msk [vmem:[#allocation3 + $0x70] sm:$0xff] %vm354, %v2974
      %2991 = vst.msk [vmem:[#allocation3 + $0x78] sm:$0xff] %vm354, %v2975
      %v2992 = vld [vmem:[#allocation3] sm:$0xff]
      %v2993 = vld [vmem:[#allocation3 + $0x8] sm:$0xff]
      %v2994 = vld [vmem:[#allocation3 + $0x10] sm:$0xff]
      %v2995 = vld [vmem:[#allocation3 + $0x18] sm:$0xff]
      %v2996 = vld [vmem:[#allocation3 + $0x20] sm:$0xff]
      %v2997 = vld [vmem:[#allocation3 + $0x28] sm:$0xff]
      %v2998 = vld [vmem:[#allocation3 + $0x30] sm:$0xff]
      %v2999 = vld [vmem:[#allocation3 + $0x38] sm:$0xff]
      %v3000 = vld [vmem:[#allocation3 + $0x40] sm:$0xff]
      %v3001 = vld [vmem:[#allocation3 + $0x48] sm:$0xff]
      %v3002 = vld [vmem:[#allocation3 + $0x50] sm:$0xff]
      %v3003 = vld [vmem:[#allocation3 + $0x58] sm:$0xff]
      %v3004 = vld [vmem:[#allocation3 + $0x60] sm:$0xff]
      %v3005 = vld [vmem:[#allocation3 + $0x68] sm:$0xff]
      %v3006 = vld [vmem:[#allocation3 + $0x70] sm:$0xff]
      %v3007 = vld [vmem:[#allocation3 + $0x78] sm:$0xff]
      %v3008 = vld [vmem:[%s2671 + $0x4] sm:$0xff]
      %v3009 = vld [vmem:[%s2671 + $0xc] sm:$0xff]
      %v3010 = vld [vmem:[%s2671 + $0x1c] sm:$0xff]
      %v3011 = vld [vmem:[%s2671 + $0x24] sm:$0xff]
      %v3012 = vld [vmem:[%s2671 + $0x34] sm:$0xff]
      %v3013 = vld [vmem:[%s2671 + $0x3c] sm:$0xff]
      %v3014 = vld [vmem:[%s2671 + $0x4c] sm:$0xff]
      %v3015 = vld [vmem:[%s2671 + $0x54] sm:$0xff]
      %v3016 = vld [vmem:[%s2671 + $0x64] sm:$0xff]
      %v3017 = vld [vmem:[%s2671 + $0x6c] sm:$0xff]
      %v3018 = vld [vmem:[%s2671 + $0x7c] sm:$0xff]
      %v3019 = vld [vmem:[%s2671 + $0x84] sm:$0xff]
      %v3020 = vld [vmem:[%s2671 + $0x94] sm:$0xff]
      %v3021 = vld [vmem:[%s2671 + $0x9c] sm:$0xff]
      %v3022 = vld [vmem:[%s2671 + $0xac] sm:$0xff]
      %v3023 = vld [vmem:[%s2671 + $0xb4] sm:$0xff]
      %v3024 = vlaneseq
      %v3025 = vshrl.u32 %v3024, 7
      %v3026 = vsub.s32 3, %v3025
      %v3027 = vrot.slane %v1375, %v3026
      %v3028 = vmul.f32 %v3008, %v3027
      %v3029 = vmul.f32 %v3009, %v3027
      %v3030 = vmul.f32 %v3010, %v3027
      %v3031 = vmul.f32 %v3011, %v3027
      %v3032 = vmul.f32 %v3012, %v3027
      %v3033 = vmul.f32 %v3013, %v3027
      %v3034 = vmul.f32 %v3014, %v3027
      %v3035 = vmul.f32 %v3015, %v3027
      %v3036 = vmul.f32 %v3016, %v3027
      %v3037 = vmul.f32 %v3017, %v3027
      %v3038 = vmul.f32 %v3018, %v3027
      %v3039 = vmul.f32 %v3019, %v3027
      %v3040 = vmul.f32 %v3020, %v3027
      %v3041 = vmul.f32 %v3021, %v3027
      %v3042 = vmul.f32 %v3022, %v3027
      %v3043 = vmul.f32 %v3023, %v3027
      %v3044 = vadd.f32 %v2992, %v3028
      %v3045 = vadd.f32 %v2993, %v3029
      %v3046 = vadd.f32 %v2994, %v3030
      %v3047 = vadd.f32 %v2995, %v3031
      %v3048 = vadd.f32 %v2996, %v3032
      %v3049 = vadd.f32 %v2997, %v3033
      %v3050 = vadd.f32 %v2998, %v3034
      %v3051 = vadd.f32 %v2999, %v3035
      %v3052 = vadd.f32 %v3000, %v3036
      %v3053 = vadd.f32 %v3001, %v3037
      %v3054 = vadd.f32 %v3002, %v3038
      %v3055 = vadd.f32 %v3003, %v3039
      %v3056 = vadd.f32 %v3004, %v3040
      %v3057 = vadd.f32 %v3005, %v3041
      %v3058 = vadd.f32 %v3006, %v3042
      %v3059 = vadd.f32 %v3007, %v3043
      %3060 = vst.msk [vmem:[#allocation3] sm:$0xff] %vm354, %v3044
      %3061 = vst.msk [vmem:[#allocation3 + $0x8] sm:$0xff] %vm354, %v3045
      %3062 = vst.msk [vmem:[#allocation3 + $0x10] sm:$0xff] %vm354, %v3046
      %3063 = vst.msk [vmem:[#allocation3 + $0x18] sm:$0xff] %vm354, %v3047
      %3064 = vst.msk [vmem:[#allocation3 + $0x20] sm:$0xff] %vm354, %v3048
      %3065 = vst.msk [vmem:[#allocation3 + $0x28] sm:$0xff] %vm354, %v3049
      %3066 = vst.msk [vmem:[#allocation3 + $0x30] sm:$0xff] %vm354, %v3050
      %3067 = vst.msk [vmem:[#allocation3 + $0x38] sm:$0xff] %vm354, %v3051
      %3068 = vst.msk [vmem:[#allocation3 + $0x40] sm:$0xff] %vm354, %v3052
      %3069 = vst.msk [vmem:[#allocation3 + $0x48] sm:$0xff] %vm354, %v3053
      %3070 = vst.msk [vmem:[#allocation3 + $0x50] sm:$0xff] %vm354, %v3054
      %3071 = vst.msk [vmem:[#allocation3 + $0x58] sm:$0xff] %vm354, %v3055
      %3072 = vst.msk [vmem:[#allocation3 + $0x60] sm:$0xff] %vm354, %v3056
      %3073 = vst.msk [vmem:[#allocation3 + $0x68] sm:$0xff] %vm354, %v3057
      %3074 = vst.msk [vmem:[#allocation3 + $0x70] sm:$0xff] %vm354, %v3058
      %3075 = vst.msk [vmem:[#allocation3 + $0x78] sm:$0xff] %vm354, %v3059
      %v3076 = vld [vmem:[#allocation3] sm:$0xff]
      %v3077 = vld [vmem:[#allocation3 + $0x8] sm:$0xff]
      %v3078 = vld [vmem:[#allocation3 + $0x10] sm:$0xff]
      %v3079 = vld [vmem:[#allocation3 + $0x18] sm:$0xff]
      %v3080 = vld [vmem:[#allocation3 + $0x20] sm:$0xff]
      %v3081 = vld [vmem:[#allocation3 + $0x28] sm:$0xff]
      %v3082 = vld [vmem:[#allocation3 + $0x30] sm:$0xff]
      %v3083 = vld [vmem:[#allocation3 + $0x38] sm:$0xff]
      %v3084 = vld [vmem:[#allocation3 + $0x40] sm:$0xff]
      %v3085 = vld [vmem:[#allocation3 + $0x48] sm:$0xff]
      %v3086 = vld [vmem:[#allocation3 + $0x50] sm:$0xff]
      %v3087 = vld [vmem:[#allocation3 + $0x58] sm:$0xff]
      %v3088 = vld [vmem:[#allocation3 + $0x60] sm:$0xff]
      %v3089 = vld [vmem:[#allocation3 + $0x68] sm:$0xff]
      %v3090 = vld [vmem:[#allocation3 + $0x70] sm:$0xff]
      %v3091 = vld [vmem:[#allocation3 + $0x78] sm:$0xff]
      %s3092 = scalar_lea.vmem [#allocation2], 96
      %v3093 = vld [vmem:[%s3092] sm:$0xff]
      %v3094 = vld [vmem:[%s3092 + $0x8] sm:$0xff]
      %v3095 = vld [vmem:[%s3092 + $0x18] sm:$0xff]
      %v3096 = vld [vmem:[%s3092 + $0x20] sm:$0xff]
      %v3097 = vld [vmem:[%s3092 + $0x30] sm:$0xff]
      %v3098 = vld [vmem:[%s3092 + $0x38] sm:$0xff]
      %v3099 = vld [vmem:[%s3092 + $0x48] sm:$0xff]
      %v3100 = vld [vmem:[%s3092 + $0x50] sm:$0xff]
      %v3101 = vld [vmem:[%s3092 + $0x60] sm:$0xff]
      %v3102 = vld [vmem:[%s3092 + $0x68] sm:$0xff]
      %v3103 = vld [vmem:[%s3092 + $0x78] sm:$0xff]
      %v3104 = vld [vmem:[%s3092 + $0x80] sm:$0xff]
      %v3105 = vld [vmem:[%s3092 + $0x90] sm:$0xff]
      %v3106 = vld [vmem:[%s3092 + $0x98] sm:$0xff]
      %v3107 = vld [vmem:[%s3092 + $0xa8] sm:$0xff]
      %v3108 = vld [vmem:[%s3092 + $0xb0] sm:$0xff]
      %v3109 = vlaneseq
      %v3110 = vshrl.u32 %v3109, 7
      %v3111 = vsub.s32 4, %v3110
      %v3112 = vrot.slane %v1375, %v3111
      %v3113 = vmul.f32 %v3093, %v3112
      %v3114 = vmul.f32 %v3094, %v3112
      %v3115 = vmul.f32 %v3095, %v3112
      %v3116 = vmul.f32 %v3096, %v3112
      %v3117 = vmul.f32 %v3097, %v3112
      %v3118 = vmul.f32 %v3098, %v3112
      %v3119 = vmul.f32 %v3099, %v3112
      %v3120 = vmul.f32 %v3100, %v3112
      %v3121 = vmul.f32 %v3101, %v3112
      %v3122 = vmul.f32 %v3102, %v3112
      %v3123 = vmul.f32 %v3103, %v3112
      %v3124 = vmul.f32 %v3104, %v3112
      %v3125 = vmul.f32 %v3105, %v3112
      %v3126 = vmul.f32 %v3106, %v3112
      %v3127 = vmul.f32 %v3107, %v3112
      %v3128 = vmul.f32 %v3108, %v3112
      %v3129 = vadd.f32 %v3076, %v3113
      %v3130 = vadd.f32 %v3077, %v3114
      %v3131 = vadd.f32 %v3078, %v3115
      %v3132 = vadd.f32 %v3079, %v3116
      %v3133 = vadd.f32 %v3080, %v3117
      %v3134 = vadd.f32 %v3081, %v3118
      %v3135 = vadd.f32 %v3082, %v3119
      %v3136 = vadd.f32 %v3083, %v3120
      %v3137 = vadd.f32 %v3084, %v3121
      %v3138 = vadd.f32 %v3085, %v3122
      %v3139 = vadd.f32 %v3086, %v3123
      %v3140 = vadd.f32 %v3087, %v3124
      %v3141 = vadd.f32 %v3088, %v3125
      %v3142 = vadd.f32 %v3089, %v3126
      %v3143 = vadd.f32 %v3090, %v3127
      %v3144 = vadd.f32 %v3091, %v3128
      %3145 = vst.msk [vmem:[#allocation3] sm:$0xff] %vm354, %v3129
      %3146 = vst.msk [vmem:[#allocation3 + $0x8] sm:$0xff] %vm354, %v3130
      %3147 = vst.msk [vmem:[#allocation3 + $0x10] sm:$0xff] %vm354, %v3131
      %3148 = vst.msk [vmem:[#allocation3 + $0x18] sm:$0xff] %vm354, %v3132
      %3149 = vst.msk [vmem:[#allocation3 + $0x20] sm:$0xff] %vm354, %v3133
      %3150 = vst.msk [vmem:[#allocation3 + $0x28] sm:$0xff] %vm354, %v3134
      %3151 = vst.msk [vmem:[#allocation3 + $0x30] sm:$0xff] %vm354, %v3135
      %3152 = vst.msk [vmem:[#allocation3 + $0x38] sm:$0xff] %vm354, %v3136
      %3153 = vst.msk [vmem:[#allocation3 + $0x40] sm:$0xff] %vm354, %v3137
      %3154 = vst.msk [vmem:[#allocation3 + $0x48] sm:$0xff] %vm354, %v3138
      %3155 = vst.msk [vmem:[#allocation3 + $0x50] sm:$0xff] %vm354, %v3139
      %3156 = vst.msk [vmem:[#allocation3 + $0x58] sm:$0xff] %vm354, %v3140
      %3157 = vst.msk [vmem:[#allocation3 + $0x60] sm:$0xff] %vm354, %v3141
      %3158 = vst.msk [vmem:[#allocation3 + $0x68] sm:$0xff] %vm354, %v3142
      %3159 = vst.msk [vmem:[#allocation3 + $0x70] sm:$0xff] %vm354, %v3143
      %3160 = vst.msk [vmem:[#allocation3 + $0x78] sm:$0xff] %vm354, %v3144
      %v3161 = vld [vmem:[#allocation3] sm:$0xff]
      %v3162 = vld [vmem:[#allocation3 + $0x8] sm:$0xff]
      %v3163 = vld [vmem:[#allocation3 + $0x10] sm:$0xff]
      %v3164 = vld [vmem:[#allocation3 + $0x18] sm:$0xff]
      %v3165 = vld [vmem:[#allocation3 + $0x20] sm:$0xff]
      %v3166 = vld [vmem:[#allocation3 + $0x28] sm:$0xff]
      %v3167 = vld [vmem:[#allocation3 + $0x30] sm:$0xff]
      %v3168 = vld [vmem:[#allocation3 + $0x38] sm:$0xff]
      %v3169 = vld [vmem:[#allocation3 + $0x40] sm:$0xff]
      %v3170 = vld [vmem:[#allocation3 + $0x48] sm:$0xff]
      %v3171 = vld [vmem:[#allocation3 + $0x50] sm:$0xff]
      %v3172 = vld [vmem:[#allocation3 + $0x58] sm:$0xff]
      %v3173 = vld [vmem:[#allocation3 + $0x60] sm:$0xff]
      %v3174 = vld [vmem:[#allocation3 + $0x68] sm:$0xff]
      %v3175 = vld [vmem:[#allocation3 + $0x70] sm:$0xff]
      %v3176 = vld [vmem:[#allocation3 + $0x78] sm:$0xff]
      %v3177 = vld [vmem:[%s3092 + $0x1] sm:$0xff]
      %v3178 = vld [vmem:[%s3092 + $0x9] sm:$0xff]
      %v3179 = vld [vmem:[%s3092 + $0x19] sm:$0xff]
      %v3180 = vld [vmem:[%s3092 + $0x21] sm:$0xff]
      %v3181 = vld [vmem:[%s3092 + $0x31] sm:$0xff]
      %v3182 = vld [vmem:[%s3092 + $0x39] sm:$0xff]
      %v3183 = vld [vmem:[%s3092 + $0x49] sm:$0xff]
      %v3184 = vld [vmem:[%s3092 + $0x51] sm:$0xff]
      %v3185 = vld [vmem:[%s3092 + $0x61] sm:$0xff]
      %v3186 = vld [vmem:[%s3092 + $0x69] sm:$0xff]
      %v3187 = vld [vmem:[%s3092 + $0x79] sm:$0xff]
      %v3188 = vld [vmem:[%s3092 + $0x81] sm:$0xff]
      %v3189 = vld [vmem:[%s3092 + $0x91] sm:$0xff]
      %v3190 = vld [vmem:[%s3092 + $0x99] sm:$0xff]
      %v3191 = vld [vmem:[%s3092 + $0xa9] sm:$0xff]
      %v3192 = vld [vmem:[%s3092 + $0xb1] sm:$0xff]
      %v3193 = vlaneseq
      %v3194 = vshrl.u32 %v3193, 7
      %v3195 = vsub.s32 5, %v3194
      %v3196 = vrot.slane %v1375, %v3195
      %v3197 = vmul.f32 %v3177, %v3196
      %v3198 = vmul.f32 %v3178, %v3196
      %v3199 = vmul.f32 %v3179, %v3196
      %v3200 = vmul.f32 %v3180, %v3196
      %v3201 = vmul.f32 %v3181, %v3196
      %v3202 = vmul.f32 %v3182, %v3196
      %v3203 = vmul.f32 %v3183, %v3196
      %v3204 = vmul.f32 %v3184, %v3196
      %v3205 = vmul.f32 %v3185, %v3196
      %v3206 = vmul.f32 %v3186, %v3196
      %v3207 = vmul.f32 %v3187, %v3196
      %v3208 = vmul.f32 %v3188, %v3196
      %v3209 = vmul.f32 %v3189, %v3196
      %v3210 = vmul.f32 %v3190, %v3196
      %v3211 = vmul.f32 %v3191, %v3196
      %v3212 = vmul.f32 %v3192, %v3196
      %v3213 = vadd.f32 %v3161, %v3197
      %v3214 = vadd.f32 %v3162, %v3198
      %v3215 = vadd.f32 %v3163, %v3199
      %v3216 = vadd.f32 %v3164, %v3200
      %v3217 = vadd.f32 %v3165, %v3201
      %v3218 = vadd.f32 %v3166, %v3202
      %v3219 = vadd.f32 %v3167, %v3203
      %v3220 = vadd.f32 %v3168, %v3204
      %v3221 = vadd.f32 %v3169, %v3205
      %v3222 = vadd.f32 %v3170, %v3206
      %v3223 = vadd.f32 %v3171, %v3207
      %v3224 = vadd.f32 %v3172, %v3208
      %v3225 = vadd.f32 %v3173, %v3209
      %v3226 = vadd.f32 %v3174, %v3210
      %v3227 = vadd.f32 %v3175, %v3211
      %v3228 = vadd.f32 %v3176, %v3212
      %3229 = vst.msk [vmem:[#allocation3] sm:$0xff] %vm354, %v3213
      %3230 = vst.msk [vmem:[#allocation3 + $0x8] sm:$0xff] %vm354, %v3214
      %3231 = vst.msk [vmem:[#allocation3 + $0x10] sm:$0xff] %vm354, %v3215
      %3232 = vst.msk [vmem:[#allocation3 + $0x18] sm:$0xff] %vm354, %v3216
      %3233 = vst.msk [vmem:[#allocation3 + $0x20] sm:$0xff] %vm354, %v3217
      %3234 = vst.msk [vmem:[#allocation3 + $0x28] sm:$0xff] %vm354, %v3218
      %3235 = vst.msk [vmem:[#allocation3 + $0x30] sm:$0xff] %vm354, %v3219
      %3236 = vst.msk [vmem:[#allocation3 + $0x38] sm:$0xff] %vm354, %v3220
      %3237 = vst.msk [vmem:[#allocation3 + $0x40] sm:$0xff] %vm354, %v3221
      %3238 = vst.msk [vmem:[#allocation3 + $0x48] sm:$0xff] %vm354, %v3222
      %3239 = vst.msk [vmem:[#allocation3 + $0x50] sm:$0xff] %vm354, %v3223
      %3240 = vst.msk [vmem:[#allocation3 + $0x58] sm:$0xff] %vm354, %v3224
      %3241 = vst.msk [vmem:[#allocation3 + $0x60] sm:$0xff] %vm354, %v3225
      %3242 = vst.msk [vmem:[#allocation3 + $0x68] sm:$0xff] %vm354, %v3226
      %3243 = vst.msk [vmem:[#allocation3 + $0x70] sm:$0xff] %vm354, %v3227
      %3244 = vst.msk [vmem:[#allocation3 + $0x78] sm:$0xff] %vm354, %v3228
      %v3245 = vld [vmem:[#allocation3] sm:$0xff]
      %v3246 = vld [vmem:[#allocation3 + $0x8] sm:$0xff]
      %v3247 = vld [vmem:[#allocation3 + $0x10] sm:$0xff]
      %v3248 = vld [vmem:[#allocation3 + $0x18] sm:$0xff]
      %v3249 = vld [vmem:[#allocation3 + $0x20] sm:$0xff]
      %v3250 = vld [vmem:[#allocation3 + $0x28] sm:$0xff]
      %v3251 = vld [vmem:[#allocation3 + $0x30] sm:$0xff]
      %v3252 = vld [vmem:[#allocation3 + $0x38] sm:$0xff]
      %v3253 = vld [vmem:[#allocation3 + $0x40] sm:$0xff]
      %v3254 = vld [vmem:[#allocation3 + $0x48] sm:$0xff]
      %v3255 = vld [vmem:[#allocation3 + $0x50] sm:$0xff]
      %v3256 = vld [vmem:[#allocation3 + $0x58] sm:$0xff]
      %v3257 = vld [vmem:[#allocation3 + $0x60] sm:$0xff]
      %v3258 = vld [vmem:[#allocation3 + $0x68] sm:$0xff]
      %v3259 = vld [vmem:[#allocation3 + $0x70] sm:$0xff]
      %v3260 = vld [vmem:[#allocation3 + $0x78] sm:$0xff]
      %v3261 = vld [vmem:[%s3092 + $0x2] sm:$0xff]
      %v3262 = vld [vmem:[%s3092 + $0xa] sm:$0xff]
      %v3263 = vld [vmem:[%s3092 + $0x1a] sm:$0xff]
      %v3264 = vld [vmem:[%s3092 + $0x22] sm:$0xff]
      %v3265 = vld [vmem:[%s3092 + $0x32] sm:$0xff]
      %v3266 = vld [vmem:[%s3092 + $0x3a] sm:$0xff]
      %v3267 = vld [vmem:[%s3092 + $0x4a] sm:$0xff]
      %v3268 = vld [vmem:[%s3092 + $0x52] sm:$0xff]
      %v3269 = vld [vmem:[%s3092 + $0x62] sm:$0xff]
      %v3270 = vld [vmem:[%s3092 + $0x6a] sm:$0xff]
      %v3271 = vld [vmem:[%s3092 + $0x7a] sm:$0xff]
      %v3272 = vld [vmem:[%s3092 + $0x82] sm:$0xff]
      %v3273 = vld [vmem:[%s3092 + $0x92] sm:$0xff]
      %v3274 = vld [vmem:[%s3092 + $0x9a] sm:$0xff]
      %v3275 = vld [vmem:[%s3092 + $0xaa] sm:$0xff]
      %v3276 = vld [vmem:[%s3092 + $0xb2] sm:$0xff]
      %v3277 = vlaneseq
      %v3278 = vshrl.u32 %v3277, 7
      %v3279 = vsub.s32 6, %v3278
      %v3280 = vrot.slane %v1375, %v3279
      %v3281 = vmul.f32 %v3261, %v3280
      %v3282 = vmul.f32 %v3262, %v3280
      %v3283 = vmul.f32 %v3263, %v3280
      %v3284 = vmul.f32 %v3264, %v3280
      %v3285 = vmul.f32 %v3265, %v3280
      %v3286 = vmul.f32 %v3266, %v3280
      %v3287 = vmul.f32 %v3267, %v3280
      %v3288 = vmul.f32 %v3268, %v3280
      %v3289 = vmul.f32 %v3269, %v3280
      %v3290 = vmul.f32 %v3270, %v3280
      %v3291 = vmul.f32 %v3271, %v3280
      %v3292 = vmul.f32 %v3272, %v3280
      %v3293 = vmul.f32 %v3273, %v3280
      %v3294 = vmul.f32 %v3274, %v3280
      %v3295 = vmul.f32 %v3275, %v3280
      %v3296 = vmul.f32 %v3276, %v3280
      %v3297 = vadd.f32 %v3245, %v3281
      %v3298 = vadd.f32 %v3246, %v3282
      %v3299 = vadd.f32 %v3247, %v3283
      %v3300 = vadd.f32 %v3248, %v3284
      %v3301 = vadd.f32 %v3249, %v3285
      %v3302 = vadd.f32 %v3250, %v3286
      %v3303 = vadd.f32 %v3251, %v3287
      %v3304 = vadd.f32 %v3252, %v3288
      %v3305 = vadd.f32 %v3253, %v3289
      %v3306 = vadd.f32 %v3254, %v3290
      %v3307 = vadd.f32 %v3255, %v3291
      %v3308 = vadd.f32 %v3256, %v3292
      %v3309 = vadd.f32 %v3257, %v3293
      %v3310 = vadd.f32 %v3258, %v3294
      %v3311 = vadd.f32 %v3259, %v3295
      %v3312 = vadd.f32 %v3260, %v3296
      %3313 = vst.msk [vmem:[#allocation3] sm:$0xff] %vm354, %v3297
      %3314 = vst.msk [vmem:[#allocation3 + $0x8] sm:$0xff] %vm354, %v3298
      %3315 = vst.msk [vmem:[#allocation3 + $0x10] sm:$0xff] %vm354, %v3299
      %3316 = vst.msk [vmem:[#allocation3 + $0x18] sm:$0xff] %vm354, %v3300
      %3317 = vst.msk [vmem:[#allocation3 + $0x20] sm:$0xff] %vm354, %v3301
      %3318 = vst.msk [vmem:[#allocation3 + $0x28] sm:$0xff] %vm354, %v3302
      %3319 = vst.msk [vmem:[#allocation3 + $0x30] sm:$0xff] %vm354, %v3303
      %3320 = vst.msk [vmem:[#allocation3 + $0x38] sm:$0xff] %vm354, %v3304
      %3321 = vst.msk [vmem:[#allocation3 + $0x40] sm:$0xff] %vm354, %v3305
      %3322 = vst.msk [vmem:[#allocation3 + $0x48] sm:$0xff] %vm354, %v3306
      %3323 = vst.msk [vmem:[#allocation3 + $0x50] sm:$0xff] %vm354, %v3307
      %3324 = vst.msk [vmem:[#allocation3 + $0x58] sm:$0xff] %vm354, %v3308
      %3325 = vst.msk [vmem:[#allocation3 + $0x60] sm:$0xff] %vm354, %v3309
      %3326 = vst.msk [vmem:[#allocation3 + $0x68] sm:$0xff] %vm354, %v3310
      %3327 = vst.msk [vmem:[#allocation3 + $0x70] sm:$0xff] %vm354, %v3311
      %3328 = vst.msk [vmem:[#allocation3 + $0x78] sm:$0xff] %vm354, %v3312
      %v3329 = vld [vmem:[#allocation3] sm:$0xff]
      %v3330 = vld [vmem:[#allocation3 + $0x8] sm:$0xff]
      %v3331 = vld [vmem:[#allocation3 + $0x10] sm:$0xff]
      %v3332 = vld [vmem:[#allocation3 + $0x18] sm:$0xff]
      %v3333 = vld [vmem:[#allocation3 + $0x20] sm:$0xff]
      %v3334 = vld [vmem:[#allocation3 + $0x28] sm:$0xff]
      %v3335 = vld [vmem:[#allocation3 + $0x30] sm:$0xff]
      %v3336 = vld [vmem:[#allocation3 + $0x38] sm:$0xff]
      %v3337 = vld [vmem:[#allocation3 + $0x40] sm:$0xff]
      %v3338 = vld [vmem:[#allocation3 + $0x48] sm:$0xff]
      %v3339 = vld [vmem:[#allocation3 + $0x50] sm:$0xff]
      %v3340 = vld [vmem:[#allocation3 + $0x58] sm:$0xff]
      %v3341 = vld [vmem:[#allocation3 + $0x60] sm:$0xff]
      %v3342 = vld [vmem:[#allocation3 + $0x68] sm:$0xff]
      %v3343 = vld [vmem:[#allocation3 + $0x70] sm:$0xff]
      %v3344 = vld [vmem:[#allocation3 + $0x78] sm:$0xff]
      %v3345 = vld [vmem:[%s3092 + $0x3] sm:$0xff]
      %v3346 = vld [vmem:[%s3092 + $0xb] sm:$0xff]
      %v3347 = vld [vmem:[%s3092 + $0x1b] sm:$0xff]
      %v3348 = vld [vmem:[%s3092 + $0x23] sm:$0xff]
      %v3349 = vld [vmem:[%s3092 + $0x33] sm:$0xff]
      %v3350 = vld [vmem:[%s3092 + $0x3b] sm:$0xff]
      %v3351 = vld [vmem:[%s3092 + $0x4b] sm:$0xff]
      %v3352 = vld [vmem:[%s3092 + $0x53] sm:$0xff]
      %v3353 = vld [vmem:[%s3092 + $0x63] sm:$0xff]
      %v3354 = vld [vmem:[%s3092 + $0x6b] sm:$0xff]
      %v3355 = vld [vmem:[%s3092 + $0x7b] sm:$0xff]
      %v3356 = vld [vmem:[%s3092 + $0x83] sm:$0xff]
      %v3357 = vld [vmem:[%s3092 + $0x93] sm:$0xff]
      %v3358 = vld [vmem:[%s3092 + $0x9b] sm:$0xff]
      %v3359 = vld [vmem:[%s3092 + $0xab] sm:$0xff]
      %v3360 = vld [vmem:[%s3092 + $0xb3] sm:$0xff]
      %v3361 = vlaneseq
      %v3362 = vshrl.u32 %v3361, 7
      %v3363 = vsub.s32 7, %v3362
      %v3364 = vrot.slane %v1375, %v3363
      %v3365 = vmul.f32 %v3345, %v3364
      %v3366 = vmul.f32 %v3346, %v3364
      %v3367 = vmul.f32 %v3347, %v3364
      %v3368 = vmul.f32 %v3348, %v3364
      %v3369 = vmul.f32 %v3349, %v3364
      %v3370 = vmul.f32 %v3350, %v3364
      %v3371 = vmul.f32 %v3351, %v3364
      %v3372 = vmul.f32 %v3352, %v3364
      %v3373 = vmul.f32 %v3353, %v3364
      %v3374 = vmul.f32 %v3354, %v3364
      %v3375 = vmul.f32 %v3355, %v3364
      %v3376 = vmul.f32 %v3356, %v3364
      %v3377 = vmul.f32 %v3357, %v3364
      %v3378 = vmul.f32 %v3358, %v3364
      %v3379 = vmul.f32 %v3359, %v3364
      %v3380 = vmul.f32 %v3360, %v3364
      %v3381 = vadd.f32 %v3329, %v3365
      %v3382 = vadd.f32 %v3330, %v3366
      %v3383 = vadd.f32 %v3331, %v3367
      %v3384 = vadd.f32 %v3332, %v3368
      %v3385 = vadd.f32 %v3333, %v3369
      %v3386 = vadd.f32 %v3334, %v3370
      %v3387 = vadd.f32 %v3335, %v3371
      %v3388 = vadd.f32 %v3336, %v3372
      %v3389 = vadd.f32 %v3337, %v3373
      %v3390 = vadd.f32 %v3338, %v3374
      %v3391 = vadd.f32 %v3339, %v3375
      %v3392 = vadd.f32 %v3340, %v3376
      %v3393 = vadd.f32 %v3341, %v3377
      %v3394 = vadd.f32 %v3342, %v3378
      %v3395 = vadd.f32 %v3343, %v3379
      %v3396 = vadd.f32 %v3344, %v3380
      %3397 = vst.msk [vmem:[#allocation3] sm:$0xff] %vm354, %v3381
      %3398 = vst.msk [vmem:[#allocation3 + $0x8] sm:$0xff] %vm354, %v3382
      %3399 = vst.msk [vmem:[#allocation3 + $0x10] sm:$0xff] %vm354, %v3383
      %3400 = vst.msk [vmem:[#allocation3 + $0x18] sm:$0xff] %vm354, %v3384
      %3401 = vst.msk [vmem:[#allocation3 + $0x20] sm:$0xff] %vm354, %v3385
      %3402 = vst.msk [vmem:[#allocation3 + $0x28] sm:$0xff] %vm354, %v3386
      %3403 = vst.msk [vmem:[#allocation3 + $0x30] sm:$0xff] %vm354, %v3387
      %3404 = vst.msk [vmem:[#allocation3 + $0x38] sm:$0xff] %vm354, %v3388
      %3405 = vst.msk [vmem:[#allocation3 + $0x40] sm:$0xff] %vm354, %v3389
      %3406 = vst.msk [vmem:[#allocation3 + $0x48] sm:$0xff] %vm354, %v3390
      %3407 = vst.msk [vmem:[#allocation3 + $0x50] sm:$0xff] %vm354, %v3391
      %3408 = vst.msk [vmem:[#allocation3 + $0x58] sm:$0xff] %vm354, %v3392
      %3409 = vst.msk [vmem:[#allocation3 + $0x60] sm:$0xff] %vm354, %v3393
      %3410 = vst.msk [vmem:[#allocation3 + $0x68] sm:$0xff] %vm354, %v3394
      %3411 = vst.msk [vmem:[#allocation3 + $0x70] sm:$0xff] %vm354, %v3395
      %3412 = vst.msk [vmem:[#allocation3 + $0x78] sm:$0xff] %vm354, %v3396
      %v3413 = vld [vmem:[#allocation3] sm:$0xff]
      %v3414 = vld [vmem:[#allocation3 + $0x8] sm:$0xff]
      %v3415 = vld [vmem:[#allocation3 + $0x10] sm:$0xff]
      %v3416 = vld [vmem:[#allocation3 + $0x18] sm:$0xff]
      %v3417 = vld [vmem:[#allocation3 + $0x20] sm:$0xff]
      %v3418 = vld [vmem:[#allocation3 + $0x28] sm:$0xff]
      %v3419 = vld [vmem:[#allocation3 + $0x30] sm:$0xff]
      %v3420 = vld [vmem:[#allocation3 + $0x38] sm:$0xff]
      %v3421 = vld [vmem:[#allocation3 + $0x40] sm:$0xff]
      %v3422 = vld [vmem:[#allocation3 + $0x48] sm:$0xff]
      %v3423 = vld [vmem:[#allocation3 + $0x50] sm:$0xff]
      %v3424 = vld [vmem:[#allocation3 + $0x58] sm:$0xff]
      %v3425 = vld [vmem:[#allocation3 + $0x60] sm:$0xff]
      %v3426 = vld [vmem:[#allocation3 + $0x68] sm:$0xff]
      %v3427 = vld [vmem:[#allocation3 + $0x70] sm:$0xff]
      %v3428 = vld [vmem:[#allocation3 + $0x78] sm:$0xff]
      %v3429 = vld [vmem:[%s3092 + $0x4] sm:$0xff]
      %v3430 = vld [vmem:[%s3092 + $0xc] sm:$0xff]
      %v3431 = vld [vmem:[%s3092 + $0x1c] sm:$0xff]
      %v3432 = vld [vmem:[%s3092 + $0x24] sm:$0xff]
      %v3433 = vld [vmem:[%s3092 + $0x34] sm:$0xff]
      %v3434 = vld [vmem:[%s3092 + $0x3c] sm:$0xff]
      %v3435 = vld [vmem:[%s3092 + $0x4c] sm:$0xff]
      %v3436 = vld [vmem:[%s3092 + $0x54] sm:$0xff]
      %v3437 = vld [vmem:[%s3092 + $0x64] sm:$0xff]
      %v3438 = vld [vmem:[%s3092 + $0x6c] sm:$0xff]
      %v3439 = vld [vmem:[%s3092 + $0x7c] sm:$0xff]
      %v3440 = vld [vmem:[%s3092 + $0x84] sm:$0xff]
      %v3441 = vld [vmem:[%s3092 + $0x94] sm:$0xff]
      %v3442 = vld [vmem:[%s3092 + $0x9c] sm:$0xff]
      %v3443 = vld [vmem:[%s3092 + $0xac] sm:$0xff]
      %v3444 = vld [vmem:[%s3092 + $0xb4] sm:$0xff]
      %v3445 = vlaneseq
      %v3446 = vshrl.u32 %v3445, 7
      %v3447 = vsub.s32 0, %v3446
      %v3448 = vrot.slane %v1376, %v3447
      %v3449 = vmul.f32 %v3429, %v3448
      %v3450 = vmul.f32 %v3430, %v3448
      %v3451 = vmul.f32 %v3431, %v3448
      %v3452 = vmul.f32 %v3432, %v3448
      %v3453 = vmul.f32 %v3433, %v3448
      %v3454 = vmul.f32 %v3434, %v3448
      %v3455 = vmul.f32 %v3435, %v3448
      %v3456 = vmul.f32 %v3436, %v3448
      %v3457 = vmul.f32 %v3437, %v3448
      %v3458 = vmul.f32 %v3438, %v3448
      %v3459 = vmul.f32 %v3439, %v3448
      %v3460 = vmul.f32 %v3440, %v3448
      %v3461 = vmul.f32 %v3441, %v3448
      %v3462 = vmul.f32 %v3442, %v3448
      %v3463 = vmul.f32 %v3443, %v3448
      %v3464 = vmul.f32 %v3444, %v3448
      %v3465 = vadd.f32 %v3413, %v3449
      %v3466 = vadd.f32 %v3414, %v3450
      %v3467 = vadd.f32 %v3415, %v3451
      %v3468 = vadd.f32 %v3416, %v3452
      %v3469 = vadd.f32 %v3417, %v3453
      %v3470 = vadd.f32 %v3418, %v3454
      %v3471 = vadd.f32 %v3419, %v3455
      %v3472 = vadd.f32 %v3420, %v3456
      %v3473 = vadd.f32 %v3421, %v3457
      %v3474 = vadd.f32 %v3422, %v3458
      %v3475 = vadd.f32 %v3423, %v3459
      %v3476 = vadd.f32 %v3424, %v3460
      %v3477 = vadd.f32 %v3425, %v3461
      %v3478 = vadd.f32 %v3426, %v3462
      %v3479 = vadd.f32 %v3427, %v3463
      %v3480 = vadd.f32 %v3428, %v3464
      %3481 = vst.msk [vmem:[#allocation3] sm:$0xff] %vm354, %v3465
      %3482 = vst.msk [vmem:[#allocation3 + $0x8] sm:$0xff] %vm354, %v3466
      %3483 = vst.msk [vmem:[#allocation3 + $0x10] sm:$0xff] %vm354, %v3467
      %3484 = vst.msk [vmem:[#allocation3 + $0x18] sm:$0xff] %vm354, %v3468
      %3485 = vst.msk [vmem:[#allocation3 + $0x20] sm:$0xff] %vm354, %v3469
      %3486 = vst.msk [vmem:[#allocation3 + $0x28] sm:$0xff] %vm354, %v3470
      %3487 = vst.msk [vmem:[#allocation3 + $0x30] sm:$0xff] %vm354, %v3471
      %3488 = vst.msk [vmem:[#allocation3 + $0x38] sm:$0xff] %vm354, %v3472
      %3489 = vst.msk [vmem:[#allocation3 + $0x40] sm:$0xff] %vm354, %v3473
      %3490 = vst.msk [vmem:[#allocation3 + $0x48] sm:$0xff] %vm354, %v3474
      %3491 = vst.msk [vmem:[#allocation3 + $0x50] sm:$0xff] %vm354, %v3475
      %3492 = vst.msk [vmem:[#allocation3 + $0x58] sm:$0xff] %vm354, %v3476
      %3493 = vst.msk [vmem:[#allocation3 + $0x60] sm:$0xff] %vm354, %v3477
      %3494 = vst.msk [vmem:[#allocation3 + $0x68] sm:$0xff] %vm354, %v3478
      %3495 = vst.msk [vmem:[#allocation3 + $0x70] sm:$0xff] %vm354, %v3479
      %3496 = vst.msk [vmem:[#allocation3 + $0x78] sm:$0xff] %vm354, %v3480
      %v3497 = vld [vmem:[#allocation3] sm:$0xff]
      %v3498 = vld [vmem:[#allocation3 + $0x8] sm:$0xff]
      %v3499 = vld [vmem:[#allocation3 + $0x10] sm:$0xff]
      %v3500 = vld [vmem:[#allocation3 + $0x18] sm:$0xff]
      %v3501 = vld [vmem:[#allocation3 + $0x20] sm:$0xff]
      %v3502 = vld [vmem:[#allocation3 + $0x28] sm:$0xff]
      %v3503 = vld [vmem:[#allocation3 + $0x30] sm:$0xff]
      %v3504 = vld [vmem:[#allocation3 + $0x38] sm:$0xff]
      %v3505 = vld [vmem:[#allocation3 + $0x40] sm:$0xff]
      %v3506 = vld [vmem:[#allocation3 + $0x48] sm:$0xff]
      %v3507 = vld [vmem:[#allocation3 + $0x50] sm:$0xff]
      %v3508 = vld [vmem:[#allocation3 + $0x58] sm:$0xff]
      %v3509 = vld [vmem:[#allocation3 + $0x60] sm:$0xff]
      %v3510 = vld [vmem:[#allocation3 + $0x68] sm:$0xff]
      %v3511 = vld [vmem:[#allocation3 + $0x70] sm:$0xff]
      %v3512 = vld [vmem:[#allocation3 + $0x78] sm:$0xff]
      %v3513 = vlaneseq
      %v3514 = vshrl.u32 %v3513, 7
      %v3515 = vsub.s32 4, %v3514
      %v3516 = vrot.slane %v223, %v3515
      %v3517 = vmul.f32 %v3497, %v3516
      %v3518 = vmul.f32 %v3498, %v3516
      %v3519 = vmul.f32 %v3499, %v3516
      %v3520 = vmul.f32 %v3500, %v3516
      %v3521 = vmul.f32 %v3501, %v3516
      %v3522 = vmul.f32 %v3502, %v3516
      %v3523 = vmul.f32 %v3503, %v3516
      %v3524 = vmul.f32 %v3504, %v3516
      %v3525 = vmul.f32 %v3505, %v3516
      %v3526 = vmul.f32 %v3506, %v3516
      %v3527 = vmul.f32 %v3507, %v3516
      %v3528 = vmul.f32 %v3508, %v3516
      %v3529 = vmul.f32 %v3509, %v3516
      %v3530 = vmul.f32 %v3510, %v3516
      %v3531 = vmul.f32 %v3511, %v3516
      %v3532 = vmul.f32 %v3512, %v3516
      %v3533 = vlaneseq
      %v3534 = vshrl.u32 %v3533, 7
      %v3535 = vsub.s32 5, %v3534
      %v3536 = vrot.slane %v223, %v3535
      %v3537 = vadd.f32 %v3517, %v3536
      %v3538 = vadd.f32 %v3518, %v3536
      %v3539 = vadd.f32 %v3519, %v3536
      %v3540 = vadd.f32 %v3520, %v3536
      %v3541 = vadd.f32 %v3521, %v3536
      %v3542 = vadd.f32 %v3522, %v3536
      %v3543 = vadd.f32 %v3523, %v3536
      %v3544 = vadd.f32 %v3524, %v3536
      %v3545 = vadd.f32 %v3525, %v3536
      %v3546 = vadd.f32 %v3526, %v3536
      %v3547 = vadd.f32 %v3527, %v3536
      %v3548 = vadd.f32 %v3528, %v3536
      %v3549 = vadd.f32 %v3529, %v3536
      %v3550 = vadd.f32 %v3530, %v3536
      %v3551 = vadd.f32 %v3531, %v3536
      %v3552 = vadd.f32 %v3532, %v3536
      %v3553 = vxor.u32 %v3537, 2147483648
      %v3554 = vxor.u32 %v3538, 2147483648
      %v3555 = vxor.u32 %v3539, 2147483648
      %v3556 = vxor.u32 %v3540, 2147483648
      %v3557 = vxor.u32 %v3541, 2147483648
      %v3558 = vxor.u32 %v3542, 2147483648
      %v3559 = vxor.u32 %v3543, 2147483648
      %v3560 = vxor.u32 %v3544, 2147483648
      %v3561 = vxor.u32 %v3545, 2147483648
      %v3562 = vxor.u32 %v3546, 2147483648
      %v3563 = vxor.u32 %v3547, 2147483648
      %v3564 = vxor.u32 %v3548, 2147483648
      %v3565 = vxor.u32 %v3549, 2147483648
      %v3566 = vxor.u32 %v3550, 2147483648
      %v3567 = vxor.u32 %v3551, 2147483648
      %v3568 = vxor.u32 %v3552, 2147483648
      %v3569 = vmul.f32 %v3553, 1.442695
      %v3570 = vpow.pop %v3569
      %v3571 = vmul.f32 %v3554, 1.442695
      %v3572 = vpow.pop %v3571
      %v3573 = vmul.f32 %v3555, 1.442695
      %v3574 = vpow.pop %v3573
      %v3575 = vmul.f32 %v3556, 1.442695
      %v3576 = vpow.pop %v3575
      %v3577 = vmul.f32 %v3557, 1.442695
      %v3578 = vpow.pop %v3577
      %v3579 = vmul.f32 %v3558, 1.442695
      %v3580 = vpow.pop %v3579
      %v3581 = vmul.f32 %v3559, 1.442695
      %v3582 = vpow.pop %v3581
      %v3583 = vmul.f32 %v3560, 1.442695
      %v3584 = vpow.pop %v3583
      %v3585 = vmul.f32 %v3561, 1.442695
      %v3586 = vpow.pop %v3585
      %v3587 = vmul.f32 %v3562, 1.442695
      %v3588 = vpow.pop %v3587
      %v3589 = vmul.f32 %v3563, 1.442695
      %v3590 = vpow.pop %v3589
      %v3591 = vmul.f32 %v3564, 1.442695
      %v3592 = vpow.pop %v3591
      %v3593 = vmul.f32 %v3565, 1.442695
      %v3594 = vpow.pop %v3593
      %v3595 = vmul.f32 %v3566, 1.442695
      %v3596 = vpow.pop %v3595
      %v3597 = vmul.f32 %v3567, 1.442695
      %v3598 = vpow.pop %v3597
      %v3599 = vmul.f32 %v3568, 1.442695
      %v3600 = vpow.pop %v3599
      %v3601 = vadd.f32 %v3570, 1.0
      %v3602 = vadd.f32 %v3572, 1.0
      %v3603 = vadd.f32 %v3574, 1.0
      %v3604 = vadd.f32 %v3576, 1.0
      %v3605 = vadd.f32 %v3578, 1.0
      %v3606 = vadd.f32 %v3580, 1.0
      %v3607 = vadd.f32 %v3582, 1.0
      %v3608 = vadd.f32 %v3584, 1.0
      %v3609 = vadd.f32 %v3586, 1.0
      %v3610 = vadd.f32 %v3588, 1.0
      %v3611 = vadd.f32 %v3590, 1.0
      %v3612 = vadd.f32 %v3592, 1.0
      %v3613 = vadd.f32 %v3594, 1.0
      %v3614 = vadd.f32 %v3596, 1.0
      %v3615 = vadd.f32 %v3598, 1.0
      %v3616 = vadd.f32 %v3600, 1.0
      %v3617 = vrcp.pop %v3601
      %v3618 = vmul.f32 1.0, %v3617
      %v3619 = vrcp.pop %v3602
      %v3620 = vmul.f32 1.0, %v3619
      %v3621 = vrcp.pop %v3603
      %v3622 = vmul.f32 1.0, %v3621
      %v3623 = vrcp.pop %v3604
      %v3624 = vmul.f32 1.0, %v3623
      %v3625 = vrcp.pop %v3605
      %v3626 = vmul.f32 1.0, %v3625
      %v3627 = vrcp.pop %v3606
      %v3628 = vmul.f32 1.0, %v3627
      %v3629 = vrcp.pop %v3607
      %v3630 = vmul.f32 1.0, %v3629
      %v3631 = vrcp.pop %v3608
      %v3632 = vmul.f32 1.0, %v3631
      %v3633 = vrcp.pop %v3609
      %v3634 = vmul.f32 1.0, %v3633
      %v3635 = vrcp.pop %v3610
      %v3636 = vmul.f32 1.0, %v3635
      %v3637 = vrcp.pop %v3611
      %v3638 = vmul.f32 1.0, %v3637
      %v3639 = vrcp.pop %v3612
      %v3640 = vmul.f32 1.0, %v3639
      %v3641 = vrcp.pop %v3613
      %v3642 = vmul.f32 1.0, %v3641
      %v3643 = vrcp.pop %v3614
      %v3644 = vmul.f32 1.0, %v3643
      %v3645 = vrcp.pop %v3615
      %v3646 = vmul.f32 1.0, %v3645
      %v3647 = vrcp.pop %v3616
      %v3648 = vmul.f32 1.0, %v3647
      %v3649 = vmul.f32 %v3537, %v3618
      %v3650 = vmul.f32 %v3538, %v3620
      %v3651 = vmul.f32 %v3539, %v3622
      %v3652 = vmul.f32 %v3540, %v3624
      %v3653 = vmul.f32 %v3541, %v3626
      %v3654 = vmul.f32 %v3542, %v3628
      %v3655 = vmul.f32 %v3543, %v3630
      %v3656 = vmul.f32 %v3544, %v3632
      %v3657 = vmul.f32 %v3545, %v3634
      %v3658 = vmul.f32 %v3546, %v3636
      %v3659 = vmul.f32 %v3547, %v3638
      %v3660 = vmul.f32 %v3548, %v3640
      %v3661 = vmul.f32 %v3549, %v3642
      %v3662 = vmul.f32 %v3550, %v3644
      %v3663 = vmul.f32 %v3551, %v3646
      %v3664 = vmul.f32 %v3552, %v3648
      %v3665 = vld [vmem:[%s2250 + $0x2] sm:$0xff]
      %v3666 = vld [vmem:[%s2250 + $0xa] sm:$0xff]
      %v3667 = vld [vmem:[%s2250 + $0x1a] sm:$0xff]
      %v3668 = vld [vmem:[%s2250 + $0x22] sm:$0xff]
      %v3669 = vld [vmem:[%s2250 + $0x32] sm:$0xff]
      %v3670 = vld [vmem:[%s2250 + $0x3a] sm:$0xff]
      %v3671 = vld [vmem:[%s2250 + $0x4a] sm:$0xff]
      %v3672 = vld [vmem:[%s2250 + $0x52] sm:$0xff]
      %v3673 = vld [vmem:[%s2250 + $0x62] sm:$0xff]
      %v3674 = vld [vmem:[%s2250 + $0x6a] sm:$0xff]
      %v3675 = vld [vmem:[%s2250 + $0x7a] sm:$0xff]
      %v3676 = vld [vmem:[%s2250 + $0x82] sm:$0xff]
      %v3677 = vld [vmem:[%s2250 + $0x92] sm:$0xff]
      %v3678 = vld [vmem:[%s2250 + $0x9a] sm:$0xff]
      %v3679 = vld [vmem:[%s2250 + $0xaa] sm:$0xff]
      %v3680 = vld [vmem:[%s2250 + $0xb2] sm:$0xff]
      %3697 = vrot.lane.b32.xlu0 %v3649, 4
      %v3698 = vpop.permute.xlu0 %3697
      %3699 = vrot.lane.b32.xlu0 %v3650, 4
      %v3700 = vpop.permute.xlu0 %3699
      %3701 = vrot.lane.b32.xlu0 %v3651, 4
      %v3702 = vpop.permute.xlu0 %3701
      %3703 = vrot.lane.b32.xlu0 %v3652, 4
      %v3704 = vpop.permute.xlu0 %3703
      %3705 = vrot.lane.b32.xlu0 %v3653, 4
      %v3706 = vpop.permute.xlu0 %3705
      %3707 = vrot.lane.b32.xlu0 %v3654, 4
      %v3708 = vpop.permute.xlu0 %3707
      %3709 = vrot.lane.b32.xlu0 %v3655, 4
      %v3710 = vpop.permute.xlu0 %3709
      %3711 = vrot.lane.b32.xlu0 %v3656, 4
      %v3712 = vpop.permute.xlu0 %3711
      %3713 = vrot.lane.b32.xlu0 %v3657, 4
      %v3714 = vpop.permute.xlu0 %3713
      %3715 = vrot.lane.b32.xlu0 %v3658, 4
      %v3716 = vpop.permute.xlu0 %3715
      %3717 = vrot.lane.b32.xlu0 %v3659, 4
      %v3718 = vpop.permute.xlu0 %3717
      %3719 = vrot.lane.b32.xlu0 %v3660, 4
      %v3720 = vpop.permute.xlu0 %3719
      %3721 = vrot.lane.b32.xlu0 %v3661, 4
      %v3722 = vpop.permute.xlu0 %3721
      %3723 = vrot.lane.b32.xlu0 %v3662, 4
      %v3724 = vpop.permute.xlu0 %3723
      %3725 = vrot.lane.b32.xlu0 %v3663, 4
      %v3726 = vpop.permute.xlu0 %3725
      %3727 = vrot.lane.b32.xlu0 %v3664, 4
      %v3728 = vpop.permute.xlu0 %3727
      %v3745 = vsel %vm354, %v3665, %v3698
      %v3746 = vsel %vm354, %v3666, %v3700
      %v3747 = vsel %vm354, %v3667, %v3702
      %v3748 = vsel %vm354, %v3668, %v3704
      %v3749 = vsel %vm354, %v3669, %v3706
      %v3750 = vsel %vm354, %v3670, %v3708
      %v3751 = vsel %vm354, %v3671, %v3710
      %v3752 = vsel %vm354, %v3672, %v3712
      %v3753 = vsel %vm354, %v3673, %v3714
      %v3754 = vsel %vm354, %v3674, %v3716
      %v3755 = vsel %vm354, %v3675, %v3718
      %v3756 = vsel %vm354, %v3676, %v3720
      %v3757 = vsel %vm354, %v3677, %v3722
      %v3758 = vsel %vm354, %v3678, %v3724
      %v3759 = vsel %vm354, %v3679, %v3726
      %v3760 = vsel %vm354, %v3680, %v3728
      %vm3761 = vcmask 64512
      %3762 = vst.msk [vmem:[%s221] sm:$0xff] %vm3761, %v3745
      %3763 = vst.msk [vmem:[%s221 + $0x8] sm:$0xff] %vm3761, %v3746
      %3764 = vst.msk [vmem:[%s221 + $0x10] sm:$0xff] %vm3761, %v3747
      %3765 = vst.msk [vmem:[%s221 + $0x18] sm:$0xff] %vm3761, %v3748
      %3766 = vst.msk [vmem:[%s221 + $0x20] sm:$0xff] %vm3761, %v3749
      %3767 = vst.msk [vmem:[%s221 + $0x28] sm:$0xff] %vm3761, %v3750
      %3768 = vst.msk [vmem:[%s221 + $0x30] sm:$0xff] %vm3761, %v3751
      %3769 = vst.msk [vmem:[%s221 + $0x38] sm:$0xff] %vm3761, %v3752
      %3770 = vst.msk [vmem:[%s221 + $0x40] sm:$0xff] %vm3761, %v3753
      %3771 = vst.msk [vmem:[%s221 + $0x48] sm:$0xff] %vm3761, %v3754
      %3772 = vst.msk [vmem:[%s221 + $0x50] sm:$0xff] %vm3761, %v3755
      %3773 = vst.msk [vmem:[%s221 + $0x58] sm:$0xff] %vm3761, %v3756
      %3774 = vst.msk [vmem:[%s221 + $0x60] sm:$0xff] %vm3761, %v3757
      %3775 = vst.msk [vmem:[%s221 + $0x68] sm:$0xff] %vm3761, %v3758
      %3776 = vst.msk [vmem:[%s221 + $0x70] sm:$0xff] %vm3761, %v3759
      %3777 = vst.msk [vmem:[%s221 + $0x78] sm:$0xff] %vm3761, %v3760
      %s3778 = smul.u32 8, %s20
      %p3779 = scmp.lt.s32.totalorder %s19, 1
      %s3780 = scalar_select %p3779, %s19, 1
      %p3781 = scmp.lt.s32.totalorder %s3778, 15
      %s3782 = scalar_select %p3781, %s3778, 15
      %s3783 = smul.addr %s3782, 2
      %s3784 = smul.addr %s3780, 32
      %s3785 = sadd.s32 %s3783, %s3784
      %s3786 = smul.addr %s3785, 8
      %s3787 = scalar_lea.vmem %s4, %s3786
      // Predicated region
      $region37: #{tpu_custom_call.1} parent=35 // pred_check
        %p3788 = pneg %p136
      $region38: #{tpu_custom_call.1} parent=35 // pred_check_branch
        %3790 = sbr.rel (%p3788) target = $region40
      $region39: #{tpu_custom_call.1} parent=35 // pred_region
        %s3791 = smul.u32 8, %s20
      $region40: #{tpu_custom_call.1} parent=35 // pred_fallthru
        _
    $region36: #{tpu_custom_call.1} parent=5 // pred_fallthru
      _
    %p3792 = scmp.le.s32.totalorder 2, %s10
    // Predicated region
    $region41: #{tpu_custom_call.1} parent=5 // pred_check
      %p3793 = pneg %p3792
    $region42: #{tpu_custom_call.1} parent=5 // pred_check_branch
      %3795 = sbr.rel (%p3793) target = $region44
    $region43: #{tpu_custom_call.1} parent=5 // pred_region
      %s3796 = ssub.s32 %s10, 2
      // Predicated region
      $region45: #{tpu_custom_call.1} parent=43 // pred_check
        %p3797 = pneg %p142
      $region46: #{tpu_custom_call.1} parent=43 // pred_check_branch
        %3799 = sbr.rel (%p3797) target = $region48
      $region47: #{tpu_custom_call.1} parent=43 // pred_region
        %s3800 = smul.u32 8, %s22
        %p3801 = scmp.lt.s32.totalorder %s21, 1
        %s3802 = scalar_select %p3801, %s21, 1
        %p3803 = scmp.lt.s32.totalorder %s3800, 15
        %s3804 = scalar_select %p3803, %s3800, 15
        %s3805 = smul.addr %s3804, 2
        %s3806 = smul.addr %s3802, 32
        %s3807 = sadd.s32 %s3805, %s3806
        %s3808 = smul.addr %s3807, 8
        %s3809 = scalar_lea.vmem %s4, %s3808
      $region48: #{tpu_custom_call.1} parent=43 // pred_fallthru
        _
    $region44: #{tpu_custom_call.1} parent=5 // pred_fallthru
      _
  $region6: #{tpu_custom_call.1} parent=0 // loop_footer
    %s14 = sadd.s32 1, %s10
  $region7: #{tpu_custom_call.1} parent=0 // loop_footer_branch
    %9 = sbr.rel target = $region3
  $region8: #{tpu_custom_call.1} parent=0 // loop_exit
    _

</llo_original>
